<compile_context>
chip_gen: v7x
topology: tpu7x:2x2x1
jax: 0.10.0
libtpu: 0.0.40
codegen_flags: <defaults>
</compile_context>

<pallas_src>
import jax
import jax.numpy as jnp
from jax.experimental import pallas as pl
from jax.experimental.pallas import tpu as pltpu

EMBED_DIM = 256
NUM_HEADS = 4
HEAD_DIM = EMBED_DIM // NUM_HEADS
SCALE = HEAD_DIM ** (-0.5)


def mhsa_kernel(x_ref, wqkv_ref, bqkv_ref, wproj_ref, bproj_ref, o_ref):
    # x_ref: (Bt, S, D) block of batch elements.
    Bt, S, D = x_ref.shape
    R = Bt * S

    # Flatten the batch block for the projections (fills the MXU M dim).
    x2 = x_ref[...].reshape(R, D).astype(jnp.bfloat16)

    acc = jnp.zeros((R, D), jnp.float32)

    for h in range(NUM_HEADS):
        # Per-head projections from per-head weight slabs (no activation
        # slicing / relayouts).  Scale is pre-folded into the Q weights.
        q = (jnp.dot(x2, wqkv_ref[0, h], preferred_element_type=jnp.float32)
             + bqkv_ref[0, h])                                    # (R, hd)
        k = (jnp.dot(x2, wqkv_ref[1, h], preferred_element_type=jnp.float32)
             + bqkv_ref[1, h])
        v = (jnp.dot(x2, wqkv_ref[2, h], preferred_element_type=jnp.float32)
             + bqkv_ref[2, h])

        # Attention is per sequence: split the flattened rows back to (Bt, S).
        q3 = q.reshape(Bt, S, HEAD_DIM).astype(jnp.bfloat16)
        k3 = k.reshape(Bt, S, HEAD_DIM).astype(jnp.bfloat16)
        v3 = v.reshape(Bt, S, HEAD_DIM).astype(jnp.bfloat16)

        # Scores: contract last dims (no explicit .T / relayout).
        s = jnp.einsum("bqd,bkd->bqk", q3, k3,
                       preferred_element_type=jnp.float32)        # (Bt, S, S)
        s = s - jnp.max(s, axis=-1, keepdims=True)                # stable softmax
        p = jnp.exp(s)
        p = p * pl.reciprocal(jnp.sum(p, axis=-1, keepdims=True), approx=True)
        # TODO(synk): attn_dropout(p=0.1) is identity here (eval-mode semantics).

        z = jnp.einsum("bqk,bkd->bqd", p.astype(jnp.bfloat16), v3,
                       preferred_element_type=jnp.float32)        # (Bt, S, hd)

        # Per-head output projection accumulated in f32 (replaces concat).
        acc = acc + jnp.dot(z.reshape(R, HEAD_DIM).astype(jnp.bfloat16),
                            wproj_ref[h],
                            preferred_element_type=jnp.float32)

    # proj_dropout has p=0 (identity).
    o_ref[...] = (acc + bproj_ref[...]).reshape(Bt, S, D)


def _prep_params(w_qkv, b_qkv, w_proj, b_proj, mxu_dtype=jnp.bfloat16):
    """One-time re-pack of the Linear weights into per-head, MXU-friendly form."""
    D, H, hd = EMBED_DIM, NUM_HEADS, HEAD_DIM
    # qkv columns are ordered [component, head, d] (PyTorch reshape(B,S,3,H,hd)).
    w3 = w_qkv.reshape(D, 3, H, hd).transpose(1, 2, 0, 3)          # (3, H, D, hd)
    b3 = b_qkv.reshape(3, H, 1, hd)                                # (3, H, 1, hd)
    # Fold the softmax scale into the Q projection (exact: q_norm is Identity).
    scale_vec = jnp.array([SCALE, 1.0, 1.0], jnp.float32).reshape(3, 1, 1, 1)
    w3 = w3 * scale_vec
    b3 = b3 * scale_vec
    wp = w_proj.reshape(H, hd, D)                                  # (H, hd, D)
    bp = b_proj.reshape(1, D)
    return (w3.astype(mxu_dtype), b3.astype(jnp.float32),
            wp.astype(mxu_dtype), bp.astype(jnp.float32))


def _pick_block_batch(B, S, target_rows=256):
    """Batch elements per grid step: fill ~target_rows MXU rows, keep grid>=2."""
    bt = max(1, min(B, target_rows // max(S, 1)))
    if B >= 2:
        bt = min(bt, max(1, B // 2))   # keep >=2 grid steps (v7x has 2 TCs)
    while B % bt != 0:
        bt -= 1
    return bt


def multi_head_self_attention(x, w_qkv, b_qkv, w_proj, b_proj):
    """x: (B, S, D) float32; weights pre-transposed to (in, out)."""
    B, S, D = x.shape
    assert D == EMBED_DIM
    H, hd = NUM_HEADS, HEAD_DIM

    w3, b3, wp, bp = _prep_params(w_qkv, b_qkv, w_proj, b_proj)
    Bt = _pick_block_batch(B, S)

    return pl.pallas_call(
        mhsa_kernel,
        out_shape=jax.ShapeDtypeStruct((B, S, D), jnp.float32),
        grid_spec=pltpu.PrefetchScalarGridSpec(
            num_scalar_prefetch=0,
            grid=(B // Bt,),
            in_specs=[
                pl.BlockSpec((Bt, S, D), lambda i: (i, 0, 0)),         # x
                pl.BlockSpec((3, H, D, hd), lambda i: (0, 0, 0, 0)),   # W_qkv (per head)
                pl.BlockSpec((3, H, 1, hd), lambda i: (0, 0, 0, 0)),   # b_qkv (per head)
                pl.BlockSpec((H, hd, D), lambda i: (0, 0, 0)),         # W_proj (per head)
                pl.BlockSpec((1, D), lambda i: (0, 0)),                # b_proj
            ],
            out_specs=pl.BlockSpec((Bt, S, D), lambda i: (i, 0, 0)),
        ),
        compiler_params=pltpu.CompilerParams(
            dimension_semantics=("parallel",),
            vmem_limit_bytes=32 * 1024 * 1024,
        ),
    )(x, w3, b3, wp, bp)


def reference(x, w_qkv, b_qkv, w_proj, b_proj):
    B, S, D = x.shape
    qkv = x @ w_qkv + b_qkv                                            # (B, S, 3D)
    qkv = qkv.reshape(B, S, 3, NUM_HEADS, HEAD_DIM).transpose(2, 0, 3, 1, 4)
    q, k, v = qkv[0], qkv[1], qkv[2]                                   # (B, H, S, hd)
    q = q * SCALE
    attn = jnp.einsum("bhqd,bhkd->bhqk", q, k)
    attn = jax.nn.softmax(attn, axis=-1)
    z = jnp.einsum("bhqk,bhkd->bhqd", attn, v)
    z = z.transpose(0, 2, 1, 3).reshape(B, S, D)
    return z @ w_proj + b_proj


if __name__ == "__main__":
    B, S, D = 2, 8, EMBED_DIM

    key = jax.random.PRNGKey(0)
    kx, kw1, kb1, kw2, kb2 = jax.random.split(key, 5)

    x = jax.random.normal(kx, (B, S, D), dtype=jnp.float32)
    # PyTorch shapes: qkv weight (3D, D), proj weight (D, D); stored transposed
    # as (in, out) for the kernel wrapper.
    w_qkv = jax.random.normal(kw1, (D, 3 * D), dtype=jnp.float32) * 0.02
    b_qkv = jax.random.normal(kb1, (3 * D,), dtype=jnp.float32) * 0.02
    w_proj = jax.random.normal(kw2, (D, D), dtype=jnp.float32) * 0.02
    b_proj = jax.random.normal(kb2, (D,), dtype=jnp.float32) * 0.02

    out = multi_head_self_attention(x, w_qkv, b_qkv, w_proj, b_proj)
    out = jax.block_until_ready(out)

    ref = reference(x, w_qkv, b_qkv, w_proj, b_proj)
    assert out.shape == (B, S, D)
    # Tolerance loosened slightly for bf16 MXU operands (f32 accumulation).
    assert jnp.allclose(out, ref, atol=1e-2, rtol=1e-2), (
        f"max abs err {jnp.max(jnp.abs(out - ref))}")

    print("KERNEL_OK")
</pallas_src>

<mosaic_0001>
module attributes {stable_mosaic.version = 11 : i64} {
  func.func @mhsa_kernel(%arg0: i32, %arg1: memref<1x8x256xf32, #tpu.memory_space<vmem>>, %arg2: memref<3x4x256x64xbf16, #tpu.memory_space<vmem>>, %arg3: memref<3x4x1x64xf32, #tpu.memory_space<vmem>>, %arg4: memref<4x64x256xbf16, #tpu.memory_space<vmem>>, %arg5: memref<1x256xf32, #tpu.memory_space<vmem>>, %arg6: memref<1x8x256xf32, #tpu.memory_space<vmem>>) attributes {dimension_semantics = [#tpu.dimension_semantics<parallel>], iteration_bounds = array<i64: 2>, scalar_prefetch = 0 : i64, scratch_operands = 0 : i64, tpu.core_type = #tpu.core_type<tc>, window_params = [{transform_indices = @transform_0, window_bounds = array<i64: 1, 8, 256>}, {pipeline_mode = #tpu.pipeline_mode<synchronous>, transform_indices = @transform_1, window_bounds = array<i64: 3, 4, 256, 64>}, {pipeline_mode = #tpu.pipeline_mode<synchronous>, transform_indices = @transform_2, window_bounds = array<i64: 3, 4, 1, 64>}, {pipeline_mode = #tpu.pipeline_mode<synchronous>, transform_indices = @transform_3, window_bounds = array<i64: 4, 64, 256>}, {pipeline_mode = #tpu.pipeline_mode<synchronous>, transform_indices = @transform_4, window_bounds = array<i64: 1, 256>}, {transform_indices = @transform_5, window_bounds = array<i64: 1, 8, 256>}]} {
    %c0 = arith.constant 0 : index
    %c0_0 = arith.constant 0 : index
    %c0_1 = arith.constant 0 : index
    %0 = vector.load %arg1[%c0, %c0_0, %c0_1] : memref<1x8x256xf32, #tpu.memory_space<vmem>>, vector<1x8x256xf32>
    %1 = vector.shape_cast %0 : vector<1x8x256xf32> to vector<8x256xf32>
    %2 = arith.truncf %1 : vector<8x256xf32> to vector<8x256xbf16>
    %cst = arith.constant 0.000000e+00 : f32
    %3 = vector.broadcast %cst : f32 to vector<8x256xf32>
    %c0_2 = arith.constant 0 : index
    %c0_3 = arith.constant 0 : index
    %c0_4 = arith.constant 0 : index
    %c0_5 = arith.constant 0 : index
    %4 = vector.load %arg2[%c0_2, %c0_3, %c0_4, %c0_5] : memref<3x4x256x64xbf16, #tpu.memory_space<vmem>>, vector<1x1x256x64xbf16>
    %5 = vector.shape_cast %4 : vector<1x1x256x64xbf16> to vector<256x64xbf16>
    %cst_6 = arith.constant dense<0.000000e+00> : vector<8x64xf32>
    %6 = tpu.matmul %2, %5, %cst_6 {dimension_numbers = #tpu.dot_dimension_numbers<[1], [0], [0], [1], [0, 0, 1, 1], [], []>} : vector<8x256xbf16>, vector<256x64xbf16>, vector<8x64xf32> -> vector<8x64xf32>
    %c0_7 = arith.constant 0 : index
    %c0_8 = arith.constant 0 : index
    %c0_9 = arith.constant 0 : index
    %c0_10 = arith.constant 0 : index
    %7 = vector.load %arg3[%c0_7, %c0_8, %c0_9, %c0_10] : memref<3x4x1x64xf32, #tpu.memory_space<vmem>>, vector<1x1x1x64xf32>
    %8 = vector.shape_cast %7 : vector<1x1x1x64xf32> to vector<1x64xf32>
    %9 = vector.broadcast %8 : vector<1x64xf32> to vector<8x64xf32>
    %10 = arith.addf %6, %9 : vector<8x64xf32>
    %c1 = arith.constant 1 : index
    %c0_11 = arith.constant 0 : index
    %c0_12 = arith.constant 0 : index
    %c0_13 = arith.constant 0 : index
    %11 = vector.load %arg2[%c1, %c0_11, %c0_12, %c0_13] : memref<3x4x256x64xbf16, #tpu.memory_space<vmem>>, vector<1x1x256x64xbf16>
    %12 = vector.shape_cast %11 : vector<1x1x256x64xbf16> to vector<256x64xbf16>
    %cst_14 = arith.constant dense<0.000000e+00> : vector<8x64xf32>
    %13 = tpu.matmul %2, %12, %cst_14 {dimension_numbers = #tpu.dot_dimension_numbers<[1], [0], [0], [1], [0, 0, 1, 1], [], []>} : vector<8x256xbf16>, vector<256x64xbf16>, vector<8x64xf32> -> vector<8x64xf32>
    %c1_15 = arith.constant 1 : index
    %c0_16 = arith.constant 0 : index
    %c0_17 = arith.constant 0 : index
    %c0_18 = arith.constant 0 : index
    %14 = vector.load %arg3[%c1_15, %c0_16, %c0_17, %c0_18] : memref<3x4x1x64xf32, #tpu.memory_space<vmem>>, vector<1x1x1x64xf32>
    %15 = vector.shape_cast %14 : vector<1x1x1x64xf32> to vector<1x64xf32>
    %16 = vector.broadcast %15 : vector<1x64xf32> to vector<8x64xf32>
    %17 = arith.addf %13, %16 : vector<8x64xf32>
    %c2 = arith.constant 2 : index
    %c0_19 = arith.constant 0 : index
    %c0_20 = arith.constant 0 : index
    %c0_21 = arith.constant 0 : index
    %18 = vector.load %arg2[%c2, %c0_19, %c0_20, %c0_21] : memref<3x4x256x64xbf16, #tpu.memory_space<vmem>>, vector<1x1x256x64xbf16>
    %19 = vector.shape_cast %18 : vector<1x1x256x64xbf16> to vector<256x64xbf16>
    %cst_22 = arith.constant dense<0.000000e+00> : vector<8x64xf32>
    %20 = tpu.matmul %2, %19, %cst_22 {dimension_numbers = #tpu.dot_dimension_numbers<[1], [0], [0], [1], [0, 0, 1, 1], [], []>} : vector<8x256xbf16>, vector<256x64xbf16>, vector<8x64xf32> -> vector<8x64xf32>
    %c2_23 = arith.constant 2 : index
    %c0_24 = arith.constant 0 : index
    %c0_25 = arith.constant 0 : index
    %c0_26 = arith.constant 0 : index
    %21 = vector.load %arg3[%c2_23, %c0_24, %c0_25, %c0_26] : memref<3x4x1x64xf32, #tpu.memory_space<vmem>>, vector<1x1x1x64xf32>
    %22 = vector.shape_cast %21 : vector<1x1x1x64xf32> to vector<1x64xf32>
    %23 = vector.broadcast %22 : vector<1x64xf32> to vector<8x64xf32>
    %24 = arith.addf %20, %23 : vector<8x64xf32>
    %25 = vector.shape_cast %10 : vector<8x64xf32> to vector<1x8x64xf32>
    %26 = arith.truncf %25 : vector<1x8x64xf32> to vector<1x8x64xbf16>
    %27 = vector.shape_cast %17 : vector<8x64xf32> to vector<1x8x64xf32>
    %28 = arith.truncf %27 : vector<1x8x64xf32> to vector<1x8x64xbf16>
    %29 = vector.shape_cast %24 : vector<8x64xf32> to vector<1x8x64xf32>
    %30 = arith.truncf %29 : vector<1x8x64xf32> to vector<1x8x64xbf16>
    "tpu.trace_start"() <{level = 10 : i32, message = "bqd,bkd->bqk"}> : () -> ()
    %cst_27 = arith.constant dense<0.000000e+00> : vector<1x8x8xf32>
    %31 = tpu.matmul %26, %28, %cst_27 {dimension_numbers = #tpu.dot_dimension_numbers<[2], [2], [1], [1], [0, 0, 0, 1, 1, 1], [0], [0]>} : vector<1x8x64xbf16>, vector<1x8x64xbf16>, vector<1x8x8xf32> -> vector<1x8x8xf32>
    "tpu.trace_stop"() : () -> ()
    %cst_28 = arith.constant dense<0xFF800000> : vector<1x8xf32>
    %32 = vector.multi_reduction <maximumf>, %31, %cst_28 [2] : vector<1x8x8xf32> to vector<1x8xf32>
    %33 = vector.shape_cast %32 : vector<1x8xf32> to vector<1x8x1xf32>
    %34 = vector.broadcast %33 : vector<1x8x1xf32> to vector<1x8x8xf32>
    %35 = arith.subf %31, %34 : vector<1x8x8xf32>
    %36 = math.exp %35 : vector<1x8x8xf32>
    %cst_29 = arith.constant dense<0.000000e+00> : vector<1x8xf32>
    %37 = vector.multi_reduction <add>, %36, %cst_29 [2] : vector<1x8x8xf32> to vector<1x8xf32>
    %38 = vector.shape_cast %37 : vector<1x8xf32> to vector<1x8x1xf32>
    %39 = tpu.reciprocal %38 {approx = true} : vector<1x8x1xf32> -> vector<1x8x1xf32>
    %40 = vector.broadcast %39 : vector<1x8x1xf32> to vector<1x8x8xf32>
    %41 = arith.mulf %36, %40 : vector<1x8x8xf32>
    %42 = arith.truncf %41 : vector<1x8x8xf32> to vector<1x8x8xbf16>
    "tpu.trace_start"() <{level = 10 : i32, message = "bqk,bkd->bqd"}> : () -> ()
    %cst_30 = arith.constant dense<0.000000e+00> : vector<1x8x64xf32>
    %43 = tpu.matmul %42, %30, %cst_30 {dimension_numbers = #tpu.dot_dimension_numbers<[2], [1], [1], [2], [0, 0, 0, 1, 1, 2], [0], [0]>} : vector<1x8x8xbf16>, vector<1x8x64xbf16>, vector<1x8x64xf32> -> vector<1x8x64xf32>
    "tpu.trace_stop"() : () -> ()
    %44 = vector.shape_cast %43 : vector<1x8x64xf32> to vector<8x64xf32>
    %45 = arith.truncf %44 : vector<8x64xf32> to vector<8x64xbf16>
    %c0_31 = arith.constant 0 : index
    %c0_32 = arith.constant 0 : index
    %c0_33 = arith.constant 0 : index
    %46 = vector.load %arg4[%c0_31, %c0_32, %c0_33] : memref<4x64x256xbf16, #tpu.memory_space<vmem>>, vector<1x64x256xbf16>
    %47 = vector.shape_cast %46 : vector<1x64x256xbf16> to vector<64x256xbf16>
    %cst_34 = arith.constant dense<0.000000e+00> : vector<8x256xf32>
    %48 = tpu.matmul %45, %47, %cst_34 {dimension_numbers = #tpu.dot_dimension_numbers<[1], [0], [0], [1], [0, 0, 1, 1], [], []>} : vector<8x64xbf16>, vector<64x256xbf16>, vector<8x256xf32> -> vector<8x256xf32>
    %49 = arith.addf %3, %48 : vector<8x256xf32>
    %c0_35 = arith.constant 0 : index
    %c1_36 = arith.constant 1 : index
    %c0_37 = arith.constant 0 : index
    %c0_38 = arith.constant 0 : index
    %50 = vector.load %arg2[%c0_35, %c1_36, %c0_37, %c0_38] : memref<3x4x256x64xbf16, #tpu.memory_space<vmem>>, vector<1x1x256x64xbf16>
    %51 = vector.shape_cast %50 : vector<1x1x256x64xbf16> to vector<256x64xbf16>
    %cst_39 = arith.constant dense<0.000000e+00> : vector<8x64xf32>
    %52 = tpu.matmul %2, %51, %cst_39 {dimension_numbers = #tpu.dot_dimension_numbers<[1], [0], [0], [1], [0, 0, 1, 1], [], []>} : vector<8x256xbf16>, vector<256x64xbf16>, vector<8x64xf32> -> vector<8x64xf32>
    %c0_40 = arith.constant 0 : index
    %c1_41 = arith.constant 1 : index
    %c0_42 = arith.constant 0 : index
    %c0_43 = arith.constant 0 : index
    %53 = vector.load %arg3[%c0_40, %c1_41, %c0_42, %c0_43] : memref<3x4x1x64xf32, #tpu.memory_space<vmem>>, vector<1x1x1x64xf32>
    %54 = vector.shape_cast %53 : vector<1x1x1x64xf32> to vector<1x64xf32>
    %55 = vector.broadcast %54 : vector<1x64xf32> to vector<8x64xf32>
    %56 = arith.addf %52, %55 : vector<8x64xf32>
    %c1_44 = arith.constant 1 : index
    %c1_45 = arith.constant 1 : index
    %c0_46 = arith.constant 0 : index
    %c0_47 = arith.constant 0 : index
    %57 = vector.load %arg2[%c1_44, %c1_45, %c0_46, %c0_47] : memref<3x4x256x64xbf16, #tpu.memory_space<vmem>>, vector<1x1x256x64xbf16>
    %58 = vector.shape_cast %57 : vector<1x1x256x64xbf16> to vector<256x64xbf16>
    %cst_48 = arith.constant dense<0.000000e+00> : vector<8x64xf32>
    %59 = tpu.matmul %2, %58, %cst_48 {dimension_numbers = #tpu.dot_dimension_numbers<[1], [0], [0], [1], [0, 0, 1, 1], [], []>} : vector<8x256xbf16>, vector<256x64xbf16>, vector<8x64xf32> -> vector<8x64xf32>
    %c1_49 = arith.constant 1 : index
    %c1_50 = arith.constant 1 : index
    %c0_51 = arith.constant 0 : index
    %c0_52 = arith.constant 0 : index
    %60 = vector.load %arg3[%c1_49, %c1_50, %c0_51, %c0_52] : memref<3x4x1x64xf32, #tpu.memory_space<vmem>>, vector<1x1x1x64xf32>
    %61 = vector.shape_cast %60 : vector<1x1x1x64xf32> to vector<1x64xf32>
    %62 = vector.broadcast %61 : vector<1x64xf32> to vector<8x64xf32>
    %63 = arith.addf %59, %62 : vector<8x64xf32>
    %c2_53 = arith.constant 2 : index
    %c1_54 = arith.constant 1 : index
    %c0_55 = arith.constant 0 : index
    %c0_56 = arith.constant 0 : index
    %64 = vector.load %arg2[%c2_53, %c1_54, %c0_55, %c0_56] : memref<3x4x256x64xbf16, #tpu.memory_space<vmem>>, vector<1x1x256x64xbf16>
    %65 = vector.shape_cast %64 : vector<1x1x256x64xbf16> to vector<256x64xbf16>
    %cst_57 = arith.constant dense<0.000000e+00> : vector<8x64xf32>
    %66 = tpu.matmul %2, %65, %cst_57 {dimension_numbers = #tpu.dot_dimension_numbers<[1], [0], [0], [1], [0, 0, 1, 1], [], []>} : vector<8x256xbf16>, vector<256x64xbf16>, vector<8x64xf32> -> vector<8x64xf32>
    %c2_58 = arith.constant 2 : index
    %c1_59 = arith.constant 1 : index
    %c0_60 = arith.constant 0 : index
    %c0_61 = arith.constant 0 : index
    %67 = vector.load %arg3[%c2_58, %c1_59, %c0_60, %c0_61] : memref<3x4x1x64xf32, #tpu.memory_space<vmem>>, vector<1x1x1x64xf32>
    %68 = vector.shape_cast %67 : vector<1x1x1x64xf32> to vector<1x64xf32>
    %69 = vector.broadcast %68 : vector<1x64xf32> to vector<8x64xf32>
    %70 = arith.addf %66, %69 : vector<8x64xf32>
    %71 = vector.shape_cast %56 : vector<8x64xf32> to vector<1x8x64xf32>
    %72 = arith.truncf %71 : vector<1x8x64xf32> to vector<1x8x64xbf16>
    %73 = vector.shape_cast %63 : vector<8x64xf32> to vector<1x8x64xf32>
    %74 = arith.truncf %73 : vector<1x8x64xf32> to vector<1x8x64xbf16>
    %75 = vector.shape_cast %70 : vector<8x64xf32> to vector<1x8x64xf32>
    %76 = arith.truncf %75 : vector<1x8x64xf32> to vector<1x8x64xbf16>
    "tpu.trace_start"() <{level = 10 : i32, message = "bqd,bkd->bqk"}> : () -> ()
    %cst_62 = arith.constant dense<0.000000e+00> : vector<1x8x8xf32>
    %77 = tpu.matmul %72, %74, %cst_62 {dimension_numbers = #tpu.dot_dimension_numbers<[2], [2], [1], [1], [0, 0, 0, 1, 1, 1], [0], [0]>} : vector<1x8x64xbf16>, vector<1x8x64xbf16>, vector<1x8x8xf32> -> vector<1x8x8xf32>
    "tpu.trace_stop"() : () -> ()
    %cst_63 = arith.constant dense<0xFF800000> : vector<1x8xf32>
    %78 = vector.multi_reduction <maximumf>, %77, %cst_63 [2] : vector<1x8x8xf32> to vector<1x8xf32>
    %79 = vector.shape_cast %78 : vector<1x8xf32> to vector<1x8x1xf32>
    %80 = vector.broadcast %79 : vector<1x8x1xf32> to vector<1x8x8xf32>
    %81 = arith.subf %77, %80 : vector<1x8x8xf32>
    %82 = math.exp %81 : vector<1x8x8xf32>
    %cst_64 = arith.constant dense<0.000000e+00> : vector<1x8xf32>
    %83 = vector.multi_reduction <add>, %82, %cst_64 [2] : vector<1x8x8xf32> to vector<1x8xf32>
    %84 = vector.shape_cast %83 : vector<1x8xf32> to vector<1x8x1xf32>
    %85 = tpu.reciprocal %84 {approx = true} : vector<1x8x1xf32> -> vector<1x8x1xf32>
    %86 = vector.broadcast %85 : vector<1x8x1xf32> to vector<1x8x8xf32>
    %87 = arith.mulf %82, %86 : vector<1x8x8xf32>
    %88 = arith.truncf %87 : vector<1x8x8xf32> to vector<1x8x8xbf16>
    "tpu.trace_start"() <{level = 10 : i32, message = "bqk,bkd->bqd"}> : () -> ()
    %cst_65 = arith.constant dense<0.000000e+00> : vector<1x8x64xf32>
    %89 = tpu.matmul %88, %76, %cst_65 {dimension_numbers = #tpu.dot_dimension_numbers<[2], [1], [1], [2], [0, 0, 0, 1, 1, 2], [0], [0]>} : vector<1x8x8xbf16>, vector<1x8x64xbf16>, vector<1x8x64xf32> -> vector<1x8x64xf32>
    "tpu.trace_stop"() : () -> ()
    %90 = vector.shape_cast %89 : vector<1x8x64xf32> to vector<8x64xf32>
    %91 = arith.truncf %90 : vector<8x64xf32> to vector<8x64xbf16>
    %c1_66 = arith.constant 1 : index
    %c0_67 = arith.constant 0 : index
    %c0_68 = arith.constant 0 : index
    %92 = vector.load %arg4[%c1_66, %c0_67, %c0_68] : memref<4x64x256xbf16, #tpu.memory_space<vmem>>, vector<1x64x256xbf16>
    %93 = vector.shape_cast %92 : vector<1x64x256xbf16> to vector<64x256xbf16>
    %cst_69 = arith.constant dense<0.000000e+00> : vector<8x256xf32>
    %94 = tpu.matmul %91, %93, %cst_69 {dimension_numbers = #tpu.dot_dimension_numbers<[1], [0], [0], [1], [0, 0, 1, 1], [], []>} : vector<8x64xbf16>, vector<64x256xbf16>, vector<8x256xf32> -> vector<8x256xf32>
    %95 = arith.addf %49, %94 : vector<8x256xf32>
    %c0_70 = arith.constant 0 : index
    %c2_71 = arith.constant 2 : index
    %c0_72 = arith.constant 0 : index
    %c0_73 = arith.constant 0 : index
    %96 = vector.load %arg2[%c0_70, %c2_71, %c0_72, %c0_73] : memref<3x4x256x64xbf16, #tpu.memory_space<vmem>>, vector<1x1x256x64xbf16>
    %97 = vector.shape_cast %96 : vector<1x1x256x64xbf16> to vector<256x64xbf16>
    %cst_74 = arith.constant dense<0.000000e+00> : vector<8x64xf32>
    %98 = tpu.matmul %2, %97, %cst_74 {dimension_numbers = #tpu.dot_dimension_numbers<[1], [0], [0], [1], [0, 0, 1, 1], [], []>} : vector<8x256xbf16>, vector<256x64xbf16>, vector<8x64xf32> -> vector<8x64xf32>
    %c0_75 = arith.constant 0 : index
    %c2_76 = arith.constant 2 : index
    %c0_77 = arith.constant 0 : index
    %c0_78 = arith.constant 0 : index
    %99 = vector.load %arg3[%c0_75, %c2_76, %c0_77, %c0_78] : memref<3x4x1x64xf32, #tpu.memory_space<vmem>>, vector<1x1x1x64xf32>
    %100 = vector.shape_cast %99 : vector<1x1x1x64xf32> to vector<1x64xf32>
    %101 = vector.broadcast %100 : vector<1x64xf32> to vector<8x64xf32>
    %102 = arith.addf %98, %101 : vector<8x64xf32>
    %c1_79 = arith.constant 1 : index
    %c2_80 = arith.constant 2 : index
    %c0_81 = arith.constant 0 : index
    %c0_82 = arith.constant 0 : index
    %103 = vector.load %arg2[%c1_79, %c2_80, %c0_81, %c0_82] : memref<3x4x256x64xbf16, #tpu.memory_space<vmem>>, vector<1x1x256x64xbf16>
    %104 = vector.shape_cast %103 : vector<1x1x256x64xbf16> to vector<256x64xbf16>
    %cst_83 = arith.constant dense<0.000000e+00> : vector<8x64xf32>
    %105 = tpu.matmul %2, %104, %cst_83 {dimension_numbers = #tpu.dot_dimension_numbers<[1], [0], [0], [1], [0, 0, 1, 1], [], []>} : vector<8x256xbf16>, vector<256x64xbf16>, vector<8x64xf32> -> vector<8x64xf32>
    %c1_84 = arith.constant 1 : index
    %c2_85 = arith.constant 2 : index
    %c0_86 = arith.constant 0 : index
    %c0_87 = arith.constant 0 : index
    %106 = vector.load %arg3[%c1_84, %c2_85, %c0_86, %c0_87] : memref<3x4x1x64xf32, #tpu.memory_space<vmem>>, vector<1x1x1x64xf32>
    %107 = vector.shape_cast %106 : vector<1x1x1x64xf32> to vector<1x64xf32>
    %108 = vector.broadcast %107 : vector<1x64xf32> to vector<8x64xf32>
    %109 = arith.addf %105, %108 : vector<8x64xf32>
    %c2_88 = arith.constant 2 : index
    %c2_89 = arith.constant 2 : index
    %c0_90 = arith.constant 0 : index
    %c0_91 = arith.constant 0 : index
    %110 = vector.load %arg2[%c2_88, %c2_89, %c0_90, %c0_91] : memref<3x4x256x64xbf16, #tpu.memory_space<vmem>>, vector<1x1x256x64xbf16>
    %111 = vector.shape_cast %110 : vector<1x1x256x64xbf16> to vector<256x64xbf16>
    %cst_92 = arith.constant dense<0.000000e+00> : vector<8x64xf32>
    %112 = tpu.matmul %2, %111, %cst_92 {dimension_numbers = #tpu.dot_dimension_numbers<[1], [0], [0], [1], [0, 0, 1, 1], [], []>} : vector<8x256xbf16>, vector<256x64xbf16>, vector<8x64xf32> -> vector<8x64xf32>
    %c2_93 = arith.constant 2 : index
    %c2_94 = arith.constant 2 : index
    %c0_95 = arith.constant 0 : index
    %c0_96 = arith.constant 0 : index
    %113 = vector.load %arg3[%c2_93, %c2_94, %c0_95, %c0_96] : memref<3x4x1x64xf32, #tpu.memory_space<vmem>>, vector<1x1x1x64xf32>
    %114 = vector.shape_cast %113 : vector<1x1x1x64xf32> to vector<1x64xf32>
    %115 = vector.broadcast %114 : vector<1x64xf32> to vector<8x64xf32>
    %116 = arith.addf %112, %115 : vector<8x64xf32>
    %117 = vector.shape_cast %102 : vector<8x64xf32> to vector<1x8x64xf32>
    %118 = arith.truncf %117 : vector<1x8x64xf32> to vector<1x8x64xbf16>
    %119 = vector.shape_cast %109 : vector<8x64xf32> to vector<1x8x64xf32>
    %120 = arith.truncf %119 : vector<1x8x64xf32> to vector<1x8x64xbf16>
    %121 = vector.shape_cast %116 : vector<8x64xf32> to vector<1x8x64xf32>
    %122 = arith.truncf %121 : vector<1x8x64xf32> to vector<1x8x64xbf16>
    "tpu.trace_start"() <{level = 10 : i32, message = "bqd,bkd->bqk"}> : () -> ()
    %cst_97 = arith.constant dense<0.000000e+00> : vector<1x8x8xf32>
    %123 = tpu.matmul %118, %120, %cst_97 {dimension_numbers = #tpu.dot_dimension_numbers<[2], [2], [1], [1], [0, 0, 0, 1, 1, 1], [0], [0]>} : vector<1x8x64xbf16>, vector<1x8x64xbf16>, vector<1x8x8xf32> -> vector<1x8x8xf32>
    "tpu.trace_stop"() : () -> ()
    %cst_98 = arith.constant dense<0xFF800000> : vector<1x8xf32>
    %124 = vector.multi_reduction <maximumf>, %123, %cst_98 [2] : vector<1x8x8xf32> to vector<1x8xf32>
    %125 = vector.shape_cast %124 : vector<1x8xf32> to vector<1x8x1xf32>
    %126 = vector.broadcast %125 : vector<1x8x1xf32> to vector<1x8x8xf32>
    %127 = arith.subf %123, %126 : vector<1x8x8xf32>
    %128 = math.exp %127 : vector<1x8x8xf32>
    %cst_99 = arith.constant dense<0.000000e+00> : vector<1x8xf32>
    %129 = vector.multi_reduction <add>, %128, %cst_99 [2] : vector<1x8x8xf32> to vector<1x8xf32>
    %130 = vector.shape_cast %129 : vector<1x8xf32> to vector<1x8x1xf32>
    %131 = tpu.reciprocal %130 {approx = true} : vector<1x8x1xf32> -> vector<1x8x1xf32>
    %132 = vector.broadcast %131 : vector<1x8x1xf32> to vector<1x8x8xf32>
    %133 = arith.mulf %128, %132 : vector<1x8x8xf32>
    %134 = arith.truncf %133 : vector<1x8x8xf32> to vector<1x8x8xbf16>
    "tpu.trace_start"() <{level = 10 : i32, message = "bqk,bkd->bqd"}> : () -> ()
    %cst_100 = arith.constant dense<0.000000e+00> : vector<1x8x64xf32>
    %135 = tpu.matmul %134, %122, %cst_100 {dimension_numbers = #tpu.dot_dimension_numbers<[2], [1], [1], [2], [0, 0, 0, 1, 1, 2], [0], [0]>} : vector<1x8x8xbf16>, vector<1x8x64xbf16>, vector<1x8x64xf32> -> vector<1x8x64xf32>
    "tpu.trace_stop"() : () -> ()
    %136 = vector.shape_cast %135 : vector<1x8x64xf32> to vector<8x64xf32>
    %137 = arith.truncf %136 : vector<8x64xf32> to vector<8x64xbf16>
    %c2_101 = arith.constant 2 : index
    %c0_102 = arith.constant 0 : index
    %c0_103 = arith.constant 0 : index
    %138 = vector.load %arg4[%c2_101, %c0_102, %c0_103] : memref<4x64x256xbf16, #tpu.memory_space<vmem>>, vector<1x64x256xbf16>
    %139 = vector.shape_cast %138 : vector<1x64x256xbf16> to vector<64x256xbf16>
    %cst_104 = arith.constant dense<0.000000e+00> : vector<8x256xf32>
    %140 = tpu.matmul %137, %139, %cst_104 {dimension_numbers = #tpu.dot_dimension_numbers<[1], [0], [0], [1], [0, 0, 1, 1], [], []>} : vector<8x64xbf16>, vector<64x256xbf16>, vector<8x256xf32> -> vector<8x256xf32>
    %141 = arith.addf %95, %140 : vector<8x256xf32>
    %c0_105 = arith.constant 0 : index
    %c3 = arith.constant 3 : index
    %c0_106 = arith.constant 0 : index
    %c0_107 = arith.constant 0 : index
    %142 = vector.load %arg2[%c0_105, %c3, %c0_106, %c0_107] : memref<3x4x256x64xbf16, #tpu.memory_space<vmem>>, vector<1x1x256x64xbf16>
    %143 = vector.shape_cast %142 : vector<1x1x256x64xbf16> to vector<256x64xbf16>
    %cst_108 = arith.constant dense<0.000000e+00> : vector<8x64xf32>
    %144 = tpu.matmul %2, %143, %cst_108 {dimension_numbers = #tpu.dot_dimension_numbers<[1], [0], [0], [1], [0, 0, 1, 1], [], []>} : vector<8x256xbf16>, vector<256x64xbf16>, vector<8x64xf32> -> vector<8x64xf32>
    %c0_109 = arith.constant 0 : index
    %c3_110 = arith.constant 3 : index
    %c0_111 = arith.constant 0 : index
    %c0_112 = arith.constant 0 : index
    %145 = vector.load %arg3[%c0_109, %c3_110, %c0_111, %c0_112] : memref<3x4x1x64xf32, #tpu.memory_space<vmem>>, vector<1x1x1x64xf32>
    %146 = vector.shape_cast %145 : vector<1x1x1x64xf32> to vector<1x64xf32>
    %147 = vector.broadcast %146 : vector<1x64xf32> to vector<8x64xf32>
    %148 = arith.addf %144, %147 : vector<8x64xf32>
    %c1_113 = arith.constant 1 : index
    %c3_114 = arith.constant 3 : index
    %c0_115 = arith.constant 0 : index
    %c0_116 = arith.constant 0 : index
    %149 = vector.load %arg2[%c1_113, %c3_114, %c0_115, %c0_116] : memref<3x4x256x64xbf16, #tpu.memory_space<vmem>>, vector<1x1x256x64xbf16>
    %150 = vector.shape_cast %149 : vector<1x1x256x64xbf16> to vector<256x64xbf16>
    %cst_117 = arith.constant dense<0.000000e+00> : vector<8x64xf32>
    %151 = tpu.matmul %2, %150, %cst_117 {dimension_numbers = #tpu.dot_dimension_numbers<[1], [0], [0], [1], [0, 0, 1, 1], [], []>} : vector<8x256xbf16>, vector<256x64xbf16>, vector<8x64xf32> -> vector<8x64xf32>
    %c1_118 = arith.constant 1 : index
    %c3_119 = arith.constant 3 : index
    %c0_120 = arith.constant 0 : index
    %c0_121 = arith.constant 0 : index
    %152 = vector.load %arg3[%c1_118, %c3_119, %c0_120, %c0_121] : memref<3x4x1x64xf32, #tpu.memory_space<vmem>>, vector<1x1x1x64xf32>
    %153 = vector.shape_cast %152 : vector<1x1x1x64xf32> to vector<1x64xf32>
    %154 = vector.broadcast %153 : vector<1x64xf32> to vector<8x64xf32>
    %155 = arith.addf %151, %154 : vector<8x64xf32>
    %c2_122 = arith.constant 2 : index
    %c3_123 = arith.constant 3 : index
    %c0_124 = arith.constant 0 : index
    %c0_125 = arith.constant 0 : index
    %156 = vector.load %arg2[%c2_122, %c3_123, %c0_124, %c0_125] : memref<3x4x256x64xbf16, #tpu.memory_space<vmem>>, vector<1x1x256x64xbf16>
    %157 = vector.shape_cast %156 : vector<1x1x256x64xbf16> to vector<256x64xbf16>
    %cst_126 = arith.constant dense<0.000000e+00> : vector<8x64xf32>
    %158 = tpu.matmul %2, %157, %cst_126 {dimension_numbers = #tpu.dot_dimension_numbers<[1], [0], [0], [1], [0, 0, 1, 1], [], []>} : vector<8x256xbf16>, vector<256x64xbf16>, vector<8x64xf32> -> vector<8x64xf32>
    %c2_127 = arith.constant 2 : index
    %c3_128 = arith.constant 3 : index
    %c0_129 = arith.constant 0 : index
    %c0_130 = arith.constant 0 : index
    %159 = vector.load %arg3[%c2_127, %c3_128, %c0_129, %c0_130] : memref<3x4x1x64xf32, #tpu.memory_space<vmem>>, vector<1x1x1x64xf32>
    %160 = vector.shape_cast %159 : vector<1x1x1x64xf32> to vector<1x64xf32>
    %161 = vector.broadcast %160 : vector<1x64xf32> to vector<8x64xf32>
    %162 = arith.addf %158, %161 : vector<8x64xf32>
    %163 = vector.shape_cast %148 : vector<8x64xf32> to vector<1x8x64xf32>
    %164 = arith.truncf %163 : vector<1x8x64xf32> to vector<1x8x64xbf16>
    %165 = vector.shape_cast %155 : vector<8x64xf32> to vector<1x8x64xf32>
    %166 = arith.truncf %165 : vector<1x8x64xf32> to vector<1x8x64xbf16>
    %167 = vector.shape_cast %162 : vector<8x64xf32> to vector<1x8x64xf32>
    %168 = arith.truncf %167 : vector<1x8x64xf32> to vector<1x8x64xbf16>
    "tpu.trace_start"() <{level = 10 : i32, message = "bqd,bkd->bqk"}> : () -> ()
    %cst_131 = arith.constant dense<0.000000e+00> : vector<1x8x8xf32>
    %169 = tpu.matmul %164, %166, %cst_131 {dimension_numbers = #tpu.dot_dimension_numbers<[2], [2], [1], [1], [0, 0, 0, 1, 1, 1], [0], [0]>} : vector<1x8x64xbf16>, vector<1x8x64xbf16>, vector<1x8x8xf32> -> vector<1x8x8xf32>
    "tpu.trace_stop"() : () -> ()
    %cst_132 = arith.constant dense<0xFF800000> : vector<1x8xf32>
    %170 = vector.multi_reduction <maximumf>, %169, %cst_132 [2] : vector<1x8x8xf32> to vector<1x8xf32>
    %171 = vector.shape_cast %170 : vector<1x8xf32> to vector<1x8x1xf32>
    %172 = vector.broadcast %171 : vector<1x8x1xf32> to vector<1x8x8xf32>
    %173 = arith.subf %169, %172 : vector<1x8x8xf32>
    %174 = math.exp %173 : vector<1x8x8xf32>
    %cst_133 = arith.constant dense<0.000000e+00> : vector<1x8xf32>
    %175 = vector.multi_reduction <add>, %174, %cst_133 [2] : vector<1x8x8xf32> to vector<1x8xf32>
    %176 = vector.shape_cast %175 : vector<1x8xf32> to vector<1x8x1xf32>
    %177 = tpu.reciprocal %176 {approx = true} : vector<1x8x1xf32> -> vector<1x8x1xf32>
    %178 = vector.broadcast %177 : vector<1x8x1xf32> to vector<1x8x8xf32>
    %179 = arith.mulf %174, %178 : vector<1x8x8xf32>
    %180 = arith.truncf %179 : vector<1x8x8xf32> to vector<1x8x8xbf16>
    "tpu.trace_start"() <{level = 10 : i32, message = "bqk,bkd->bqd"}> : () -> ()
    %cst_134 = arith.constant dense<0.000000e+00> : vector<1x8x64xf32>
    %181 = tpu.matmul %180, %168, %cst_134 {dimension_numbers = #tpu.dot_dimension_numbers<[2], [1], [1], [2], [0, 0, 0, 1, 1, 2], [0], [0]>} : vector<1x8x8xbf16>, vector<1x8x64xbf16>, vector<1x8x64xf32> -> vector<1x8x64xf32>
    "tpu.trace_stop"() : () -> ()
    %182 = vector.shape_cast %181 : vector<1x8x64xf32> to vector<8x64xf32>
    %183 = arith.truncf %182 : vector<8x64xf32> to vector<8x64xbf16>
    %c3_135 = arith.constant 3 : index
    %c0_136 = arith.constant 0 : index
    %c0_137 = arith.constant 0 : index
    %184 = vector.load %arg4[%c3_135, %c0_136, %c0_137] : memref<4x64x256xbf16, #tpu.memory_space<vmem>>, vector<1x64x256xbf16>
    %185 = vector.shape_cast %184 : vector<1x64x256xbf16> to vector<64x256xbf16>
    %cst_138 = arith.constant dense<0.000000e+00> : vector<8x256xf32>
    %186 = tpu.matmul %183, %185, %cst_138 {dimension_numbers = #tpu.dot_dimension_numbers<[1], [0], [0], [1], [0, 0, 1, 1], [], []>} : vector<8x64xbf16>, vector<64x256xbf16>, vector<8x256xf32> -> vector<8x256xf32>
    %187 = arith.addf %141, %186 : vector<8x256xf32>
    %c0_139 = arith.constant 0 : index
    %c0_140 = arith.constant 0 : index
    %188 = vector.load %arg5[%c0_139, %c0_140] : memref<1x256xf32, #tpu.memory_space<vmem>>, vector<1x256xf32>
    %189 = vector.broadcast %188 : vector<1x256xf32> to vector<8x256xf32>
    %190 = arith.addf %187, %189 : vector<8x256xf32>
    %191 = vector.shape_cast %190 : vector<8x256xf32> to vector<1x8x256xf32>
    %c0_141 = arith.constant 0 : index
    %c0_142 = arith.constant 0 : index
    %c0_143 = arith.constant 0 : index
    %192 = vector.load %arg6[%c0_141, %c0_142, %c0_143] : memref<1x8x256xf32, #tpu.memory_space<vmem>>, vector<1x8x256xf32>
    tpu.vector_store %arg6[%c0_141, %c0_142, %c0_143], %191 {strides = array<i32>} : memref<1x8x256xf32, #tpu.memory_space<vmem>>, vector<1x8x256xf32>,
    return
  }
  func.func @transform_0(%arg0: i32) -> (i32, i32, i32) {
    %c0_i32 = arith.constant 0 : i32
    %c0_i32_0 = arith.constant 0 : i32
    %c0_i32_1 = arith.constant 0 : i32
    return %arg0, %c0_i32, %c0_i32_0 : i32, i32, i32
  }
  func.func @transform_1(%arg0: i32) -> (i32, i32, i32, i32) {
    %c0_i32 = arith.constant 0 : i32
    %c0_i32_0 = arith.constant 0 : i32
    %c0_i32_1 = arith.constant 0 : i32
    %c0_i32_2 = arith.constant 0 : i32
    %c0_i32_3 = arith.constant 0 : i32
    return %c0_i32, %c0_i32_0, %c0_i32_1, %c0_i32_2 : i32, i32, i32, i32
  }
  func.func @transform_2(%arg0: i32) -> (i32, i32, i32, i32) {
    %c0_i32 = arith.constant 0 : i32
    %c0_i32_0 = arith.constant 0 : i32
    %c0_i32_1 = arith.constant 0 : i32
    %c0_i32_2 = arith.constant 0 : i32
    %c0_i32_3 = arith.constant 0 : i32
    return %c0_i32, %c0_i32_0, %c0_i32_1, %c0_i32_2 : i32, i32, i32, i32
  }
  func.func @transform_3(%arg0: i32) -> (i32, i32, i32) {
    %c0_i32 = arith.constant 0 : i32
    %c0_i32_0 = arith.constant 0 : i32
    %c0_i32_1 = arith.constant 0 : i32
    %c0_i32_2 = arith.constant 0 : i32
    return %c0_i32, %c0_i32_0, %c0_i32_1 : i32, i32, i32
  }
  func.func @transform_4(%arg0: i32) -> (i32, i32) {
    %c0_i32 = arith.constant 0 : i32
    %c0_i32_0 = arith.constant 0 : i32
    %c0_i32_1 = arith.constant 0 : i32
    return %c0_i32, %c0_i32_0 : i32, i32
  }
  func.func @transform_5(%arg0: i32) -> (i32, i32, i32) {
    %c0_i32 = arith.constant 0 : i32
    %c0_i32_0 = arith.constant 0 : i32
    %c0_i32_1 = arith.constant 0 : i32
    return %arg0, %c0_i32, %c0_i32_0 : i32, i32, i32
  }
}

</mosaic_0001>

<llo_original>
// kernel: tpu_custom_call.1
$region0: #{tpu_custom_call.1}
  #allocation0 [shape = 'u32[]', space=smem, size = 0x4, offset = 0x4, fixed_abs, tag = 'smem constant byte address 0x4 - core index']
  #allocation1 [shape = 'u32[144,128]{1,0:T(1,128)}', space=vmem, size = 0x12000, scoped, tag = 'internal scratch']
  %s0 = inlined_call_operand.vmem [shape: f32[2,8,256], index: 0, kind: input, shape index: {}]
  %s1 = inlined_call_operand.vmem [shape: bf16[3,4,256,64], index: 1, kind: input, shape index: {}]
  %s2 = inlined_call_operand.vmem [shape: f32[3,4,1,64], index: 2, kind: input, shape index: {}]
  %s3 = inlined_call_operand.vmem [shape: bf16[4,64,256], index: 3, kind: input, shape index: {}]
  %s4 = inlined_call_operand.vmem [shape: f32[1,256], index: 4, kind: input, shape index: {}]
  %s5 = inlined_call_operand.hbm [shape: f32[2,8,256], index: 5, kind: output, shape index: {}]
  %s6 = sld [smem:[#allocation0]]
  $region53: #{tpu_custom_call.1} parent=0
    _
  %s8 = ssub.s32 1, %s6
  %s9 = scalar_select 0, %s8, %s6
  $region1: #{tpu_custom_call.1} parent=0
    #allocation2 [shape = 'u8[16384]{0}', space=vmem, size = 0x4000, scoped, tag = 'output window, operand 0']
    #allocation3 [shape = 's32[2]{0}', space=sflag, size = 0x8, scoped, tag = 'scoped memory for tpu_custom_call.1']
    %10 = vsyncpa [#allocation3], 0
    %s11 = scalar_lea.sflag [#allocation3], 1
    %12 = vsyncpa %s11, 0
    loop: start=0, step=1, limit=4
    $region2: #{tpu_custom_call.1} parent=1 // loop_pre_header
      _
    $region3: #{tpu_custom_call.1} parent=1 // loop_header
      %s14 = sphi 0, %s18
      %p15 = scmp.ge.s32.totalorder %s14, 4
      %s24 = sphi 0, %s26
      %s27 = sphi 0, %s24
      %s28 = sphi 0, %s27
      %s44 = sphi 0, %s28
      %s48 = sphi 0, %s48
      %s50 = sphi 0, %s48
      %s51 = sphi 0, %s50
      %s65 = sphi 0, %s51
      %s69 = sphi 0, %s69
      %s71 = sphi 0, %s69
      %s72 = sphi 0, %s71
      %s86 = sphi 0, %s72
      %s90 = sphi 0, %s90
      %s92 = sphi 0, %s90
      %s93 = sphi 0, %s92
      %s107 = sphi 0, %s93
      %s111 = sphi 0, %s111
      %s113 = sphi 0, %s111
      %s114 = sphi 0, %s113
      %s128 = sphi 0, %s114
      %s134 = sphi 0, %s136
      %s137 = sphi 0, %s134
      %s138 = sphi 0, %s137
      %s154 = sphi 0, %s138
    $region4: #{tpu_custom_call.1} parent=1 // loop_header_branch
      %17 = sbr.rel (%p15) target = $region8
    $region5: #{tpu_custom_call.1} parent=1 // loop_body
      %s19 = ssub.s32 %s14, 1
      %s20 = ssub.s32 %s14, 2
      %s21 = sadd.s32 %s14, 1
      %s22 = ssub.s32 %s14, %s21
      %p23 = scmp.eq.s32.totalorder %s22, 0
      %s25 = sadd.s32 %s24, 1
      %s26 = scalar_select %p23, %s24, %s25
      %p29 = pneg %p23
      %p30 = scmp.eq.s32.totalorder %s14, 1
      %p31 = por %p29, %p30
      %p32 = scmp.ne.s32.totalorder %s24, %s27
      %p33 = scmp.eq.s32.totalorder %s14, 0
      %p34 = por %p32, %p33
      %p35 = scmp.ne.s32.totalorder %s24, %s27
      %p36 = scmp.eq.s32.totalorder %s19, 1
      %p37 = por %p35, %p36
      %p38 = scmp.ne.s32.totalorder %s27, %s28
      %p39 = scmp.eq.s32.totalorder %s19, 0
      %p40 = por %p38, %p39
      %p41 = scmp.ne.s32.totalorder %s27, %s28
      %p42 = scmp.eq.s32.totalorder %s20, 1
      %p43 = por %p41, %p42
      %p45 = scmp.ne.s32.totalorder %s28, %s44
      %p46 = scmp.eq.s32.totalorder %s20, 0
      %p47 = por %p45, %p46
      %s49 = sadd.s32 %s48, 1
      %p52 = scmp.eq.s32.totalorder %s14, 1
      %p53 = scmp.ne.s32.totalorder %s48, %s50
      %p54 = scmp.eq.s32.totalorder %s14, 0
      %p55 = por %p53, %p54
      %p56 = scmp.ne.s32.totalorder %s48, %s50
      %p57 = scmp.eq.s32.totalorder %s19, 1
      %p58 = por %p56, %p57
      %p59 = scmp.ne.s32.totalorder %s50, %s51
      %p60 = scmp.eq.s32.totalorder %s19, 0
      %p61 = por %p59, %p60
      %p62 = scmp.ne.s32.totalorder %s50, %s51
      %p63 = scmp.eq.s32.totalorder %s20, 1
      %p64 = por %p62, %p63
      %p66 = scmp.ne.s32.totalorder %s51, %s65
      %p67 = scmp.eq.s32.totalorder %s20, 0
      %p68 = por %p66, %p67
      %s70 = sadd.s32 %s69, 1
      %p73 = scmp.eq.s32.totalorder %s14, 1
      %p74 = scmp.ne.s32.totalorder %s69, %s71
      %p75 = scmp.eq.s32.totalorder %s14, 0
      %p76 = por %p74, %p75
      %p77 = scmp.ne.s32.totalorder %s69, %s71
      %p78 = scmp.eq.s32.totalorder %s19, 1
      %p79 = por %p77, %p78
      %p80 = scmp.ne.s32.totalorder %s71, %s72
      %p81 = scmp.eq.s32.totalorder %s19, 0
      %p82 = por %p80, %p81
      %p83 = scmp.ne.s32.totalorder %s71, %s72
      %p84 = scmp.eq.s32.totalorder %s20, 1
      %p85 = por %p83, %p84
      %p87 = scmp.ne.s32.totalorder %s72, %s86
      %p88 = scmp.eq.s32.totalorder %s20, 0
      %p89 = por %p87, %p88
      %s91 = sadd.s32 %s90, 1
      %p94 = scmp.eq.s32.totalorder %s14, 1
      %p95 = scmp.ne.s32.totalorder %s90, %s92
      %p96 = scmp.eq.s32.totalorder %s14, 0
      %p97 = por %p95, %p96
      %p98 = scmp.ne.s32.totalorder %s90, %s92
      %p99 = scmp.eq.s32.totalorder %s19, 1
      %p100 = por %p98, %p99
      %p101 = scmp.ne.s32.totalorder %s92, %s93
      %p102 = scmp.eq.s32.totalorder %s19, 0
      %p103 = por %p101, %p102
      %p104 = scmp.ne.s32.totalorder %s92, %s93
      %p105 = scmp.eq.s32.totalorder %s20, 1
      %p106 = por %p104, %p105
      %p108 = scmp.ne.s32.totalorder %s93, %s107
      %p109 = scmp.eq.s32.totalorder %s20, 0
      %p110 = por %p108, %p109
      %s112 = sadd.s32 %s111, 1
      %p115 = scmp.eq.s32.totalorder %s14, 1
      %p116 = scmp.ne.s32.totalorder %s111, %s113
      %p117 = scmp.eq.s32.totalorder %s14, 0
      %p118 = por %p116, %p117
      %p119 = scmp.ne.s32.totalorder %s111, %s113
      %p120 = scmp.eq.s32.totalorder %s19, 1
      %p121 = por %p119, %p120
      %p122 = scmp.ne.s32.totalorder %s113, %s114
      %p123 = scmp.eq.s32.totalorder %s19, 0
      %p124 = por %p122, %p123
      %p125 = scmp.ne.s32.totalorder %s113, %s114
      %p126 = scmp.eq.s32.totalorder %s20, 1
      %p127 = por %p125, %p126
      %p129 = scmp.ne.s32.totalorder %s114, %s128
      %p130 = scmp.eq.s32.totalorder %s20, 0
      %p131 = por %p129, %p130
      %s132 = ssub.s32 %s14, %s21
      %p133 = scmp.eq.s32.totalorder %s132, 0
      %s135 = sadd.s32 %s134, 1
      %s136 = scalar_select %p133, %s134, %s135
      %p139 = pneg %p133
      %p140 = scmp.eq.s32.totalorder %s14, 1
      %p141 = por %p139, %p140
      %p142 = scmp.ne.s32.totalorder %s134, %s137
      %p143 = scmp.eq.s32.totalorder %s14, 0
      %p144 = por %p142, %p143
      %p145 = scmp.ne.s32.totalorder %s134, %s137
      %p146 = scmp.eq.s32.totalorder %s19, 1
      %p147 = por %p145, %p146
      %p148 = scmp.ne.s32.totalorder %s137, %s138
      %p149 = scmp.eq.s32.totalorder %s19, 0
      %p150 = por %p148, %p149
      %p151 = scmp.ne.s32.totalorder %s137, %s138
      %p152 = scmp.eq.s32.totalorder %s20, 1
      %p153 = por %p151, %p152
      %p155 = scmp.ne.s32.totalorder %s138, %s154
      %p156 = scmp.eq.s32.totalorder %s20, 0
      %p157 = por %p155, %p156
      %p158 = scmp.le.s32.totalorder 1, %s14
      %p159 = scmp.lt.s32.totalorder %s14, 3
      %p160 = pnand %p158, %p159
      %p161 = pneg %p160
      // Predicated region
      $region9: #{tpu_custom_call.1} parent=5 // pred_check
        _
      $region10: #{tpu_custom_call.1} parent=5 // pred_check_branch
        %163 = sbr.rel (%p160) target = $region12
      $region11: #{tpu_custom_call.1} parent=5 // pred_region
        %s164 = ssub.s32 %s14, 1
        // Predicated region
        $region13: #{tpu_custom_call.1} parent=11 // pred_check
          %p165 = pneg %p61
        $region14: #{tpu_custom_call.1} parent=11 // pred_check_branch
          %167 = sbr.rel (%p165) target = $region16
        $region15: #{tpu_custom_call.1} parent=11 // pred_region
          _
        $region16: #{tpu_custom_call.1} parent=11 // pred_fallthru
          _
        // Predicated region
        $region17: #{tpu_custom_call.1} parent=11 // pred_check
          %p168 = pneg %p82
        $region18: #{tpu_custom_call.1} parent=11 // pred_check_branch
          %170 = sbr.rel (%p168) target = $region20
        $region19: #{tpu_custom_call.1} parent=11 // pred_region
          _
        $region20: #{tpu_custom_call.1} parent=11 // pred_fallthru
          _
        // Predicated region
        $region21: #{tpu_custom_call.1} parent=11 // pred_check
          %p171 = pneg %p103
        $region22: #{tpu_custom_call.1} parent=11 // pred_check_branch
          %173 = sbr.rel (%p171) target = $region24
        $region23: #{tpu_custom_call.1} parent=11 // pred_region
          _
        $region24: #{tpu_custom_call.1} parent=11 // pred_fallthru
          _
        // Predicated region
        $region25: #{tpu_custom_call.1} parent=11 // pred_check
          %p174 = pneg %p124
        $region26: #{tpu_custom_call.1} parent=11 // pred_check_branch
          %176 = sbr.rel (%p174) target = $region28
        $region27: #{tpu_custom_call.1} parent=11 // pred_region
          _
        $region28: #{tpu_custom_call.1} parent=11 // pred_fallthru
          _
      $region12: #{tpu_custom_call.1} parent=5 // pred_fallthru
        _
      %p177 = scmp.lt.s32.totalorder %s14, 2
      // Predicated region
      $region29: #{tpu_custom_call.1} parent=5 // pred_check
        %p178 = pneg %p177
      $region30: #{tpu_custom_call.1} parent=5 // pred_check_branch
        %180 = sbr.rel (%p178) target = $region32
      $region31: #{tpu_custom_call.1} parent=5 // pred_region
        // Predicated region
        $region33: #{tpu_custom_call.1} parent=31 // pred_check
          %p181 = pneg %p34
        $region34: #{tpu_custom_call.1} parent=31 // pred_check_branch
          %183 = sbr.rel (%p181) target = $region36
        $region35: #{tpu_custom_call.1} parent=31 // pred_region
          %p184 = scmp.lt.s32.totalorder %s14, 1
          %s185 = scalar_select %p184, %s14, 1
          %s186 = smul.addr %s185, 2
          %s187 = smul.addr %s186, 8
          %s188 = scalar_lea.vmem %s0, %s187
        $region36: #{tpu_custom_call.1} parent=31 // pred_fallthru
          _
      $region32: #{tpu_custom_call.1} parent=5 // pred_fallthru
        _
      %p189 = scmp.le.s32.totalorder 1, %s14
      %p190 = scmp.lt.s32.totalorder %s14, 3
      %p191 = pnand %p189, %p190
      %p192 = pneg %p191
      // Predicated region
      $region37: #{tpu_custom_call.1} parent=5 // pred_check
        _
      $region38: #{tpu_custom_call.1} parent=5 // pred_check_branch
        %194 = sbr.rel (%p191) target = $region40
      $region39: #{tpu_custom_call.1} parent=5 // pred_region
        %s195 = ssub.s32 %s14, 1
        %p196 = scmp.lt.s32.totalorder %s19, 1
        %s197 = scalar_select %p196, %s19, 1
        %s198 = smul.addr %s197, 2
        %s199 = smul.addr %s198, 8
        %s200 = scalar_lea.vmem %s0, %s199
        %p201 = pneg %p40
        %p202 = pneg %p37
        %p203 = pneg %p61
        %p204 = pneg %p58
        %p205 = pneg %p82
        %p206 = pneg %p79
        %p207 = pneg %p103
        %p208 = pneg %p100
        %p209 = pneg %p124
        %p210 = pneg %p121
        %p211 = pneg %p150
        %p212 = pneg %p147
        %s213 = sand.u32 %s137, 1
        %s214 = scalar_lea.sflag [#allocation3], %s213
        %s215 = sand.u32 %s137, 1
        %s216 = smul.addr %s215, 16
        %s217 = scalar_lea.vmem [#allocation2], %s216
        %p218 = scmp.lt.s32.totalorder %s19, 1
        %s219 = scalar_select %p218, %s19, 1
        %s220 = smul.addr %s219, 2
        %s221 = smul.addr %s220, 8
        %s222 = scalar_lea.vmem %s0, %s221
        %v224 = vld [vmem:[%s222] sm:$0xff]
        %v225 = vld [vmem:[%s222 + $0x8] sm:$0xff]
        %v226 = vpack.c.bf16 %v224, %v224
        %v227 = vpack.c.bf16 %v225, %v225
        %v228 = vld [vmem:[%s1] sm:$0xf]
        %v229 = vld [vmem:[%s1 + $0x4] sm:$0xf]
        %v230 = vld [vmem:[%s1 + $0x8] sm:$0xf]
        %v231 = vld [vmem:[%s1 + $0xc] sm:$0xf]
        %v232 = vld [vmem:[%s1 + $0x10] sm:$0xf]
        %v233 = vld [vmem:[%s1 + $0x14] sm:$0xf]
        %v234 = vld [vmem:[%s1 + $0x18] sm:$0xf]
        %v235 = vld [vmem:[%s1 + $0x1c] sm:$0xf]
        %v236 = vld [vmem:[%s1 + $0x20] sm:$0xf]
        %v237 = vld [vmem:[%s1 + $0x24] sm:$0xf]
        %v238 = vld [vmem:[%s1 + $0x28] sm:$0xf]
        %v239 = vld [vmem:[%s1 + $0x2c] sm:$0xf]
        %v240 = vld [vmem:[%s1 + $0x30] sm:$0xf]
        %v241 = vld [vmem:[%s1 + $0x34] sm:$0xf]
        %v242 = vld [vmem:[%s1 + $0x38] sm:$0xf]
        %v243 = vld [vmem:[%s1 + $0x3c] sm:$0xf]
        %v244 = vld [vmem:[%s1 + $0x40] sm:$0xf]
        %v245 = vld [vmem:[%s1 + $0x44] sm:$0xf]
        %v246 = vld [vmem:[%s1 + $0x48] sm:$0xf]
        %v247 = vld [vmem:[%s1 + $0x4c] sm:$0xf]
        %v248 = vld [vmem:[%s1 + $0x50] sm:$0xf]
        %v249 = vld [vmem:[%s1 + $0x54] sm:$0xf]
        %v250 = vld [vmem:[%s1 + $0x58] sm:$0xf]
        %v251 = vld [vmem:[%s1 + $0x5c] sm:$0xf]
        %v252 = vld [vmem:[%s1 + $0x60] sm:$0xf]
        %v253 = vld [vmem:[%s1 + $0x64] sm:$0xf]
        %v254 = vld [vmem:[%s1 + $0x68] sm:$0xf]
        %v255 = vld [vmem:[%s1 + $0x6c] sm:$0xf]
        %v256 = vld [vmem:[%s1 + $0x70] sm:$0xf]
        %v257 = vld [vmem:[%s1 + $0x74] sm:$0xf]
        %v258 = vld [vmem:[%s1 + $0x78] sm:$0xf]
        %v259 = vld [vmem:[%s1 + $0x7c] sm:$0xf]
        %v260 = vld [vmem:[%s2] sm:$0x1]
        %v262 = vlaneseq
        %v263 = vshrl.u32 %v262, 7
        %v264 = vsub.s32 0, %v263
        %v265 = vrot.slane %v260, %v264
        %v299 = vunpack.c.l.b16 %v228
        %v300 = vunpack.c.l.b16 %v229
        %v301 = vunpack.c.l.b16 %v230
        %v302 = vunpack.c.l.b16 %v231
        %v303 = vunpack.c.l.b16 %v232
        %v304 = vunpack.c.l.b16 %v233
        %v305 = vunpack.c.l.b16 %v234
        %v306 = vunpack.c.l.b16 %v235
        %v307 = vunpack.c.l.b16 %v236
        %v308 = vunpack.c.l.b16 %v237
        %v309 = vunpack.c.l.b16 %v238
        %v310 = vunpack.c.l.b16 %v239
        %v311 = vunpack.c.l.b16 %v240
        %v312 = vunpack.c.l.b16 %v241
        %v313 = vunpack.c.l.b16 %v242
        %v314 = vunpack.c.l.b16 %v243
        %v315 = vunpack.c.l.b16 %v244
        %v316 = vunpack.c.l.b16 %v245
        %v317 = vunpack.c.l.b16 %v246
        %v318 = vunpack.c.l.b16 %v247
        %v319 = vunpack.c.l.b16 %v248
        %v320 = vunpack.c.l.b16 %v249
        %v321 = vunpack.c.l.b16 %v250
        %v322 = vunpack.c.l.b16 %v251
        %v323 = vunpack.c.l.b16 %v252
        %v324 = vunpack.c.l.b16 %v253
        %v325 = vunpack.c.l.b16 %v254
        %v326 = vunpack.c.l.b16 %v255
        %v327 = vunpack.c.l.b16 %v256
        %v328 = vunpack.c.l.b16 %v257
        %v329 = vunpack.c.l.b16 %v258
        %v330 = vunpack.c.l.b16 %v259
        %v331 = vpack.c.b16 %v300, %v299
        %v332 = vpack.c.b16 %v302, %v301
        %v333 = vpack.c.b16 %v304, %v303
        %v334 = vpack.c.b16 %v306, %v305
        %v335 = vpack.c.b16 %v308, %v307
        %v336 = vpack.c.b16 %v310, %v309
        %v337 = vpack.c.b16 %v312, %v311
        %v338 = vpack.c.b16 %v314, %v313
        %v339 = vpack.c.b16 %v316, %v315
        %v340 = vpack.c.b16 %v318, %v317
        %v341 = vpack.c.b16 %v320, %v319
        %v342 = vpack.c.b16 %v322, %v321
        %v343 = vpack.c.b16 %v324, %v323
        %v344 = vpack.c.b16 %v326, %v325
        %v345 = vpack.c.b16 %v328, %v327
        %v346 = vpack.c.b16 %v330, %v329
        %363 = vmatprep.subr.bf16.mxu0 0
        %364 = vmatpush1.bf16.msra.mxu0 %v331
        %365 = vmatprep.subr.bf16.mxu0 0
        %366 = vmatpush1.bf16.msra.mxu0 %v332
        %367 = vmatprep.subr.bf16.mxu0 0
        %368 = vmatpush1.bf16.msra.mxu0 %v333
        %369 = vmatprep.subr.bf16.mxu0 0
        %370 = vmatpush1.bf16.msra.mxu0 %v334
        %371 = vmatprep.subr.bf16.mxu0 0
        %372 = vmatpush1.bf16.msra.mxu0 %v335
        %373 = vmatprep.subr.bf16.mxu0 0
        %374 = vmatpush1.bf16.msra.mxu0 %v336
        %375 = vmatprep.subr.bf16.mxu0 0
        %376 = vmatpush1.bf16.msra.mxu0 %v337
        %377 = vmatprep.subr.bf16.mxu0 0
        %378 = vmatpush1.bf16.msra.mxu0 %v338
        %379 = vmatprep.subr.bf16.mxu0 0
        %380 = vmatpush1.bf16.msra.mxu0 %v339
        %381 = vmatprep.subr.bf16.mxu0 0
        %382 = vmatpush1.bf16.msra.mxu0 %v340
        %383 = vmatprep.subr.bf16.mxu0 0
        %384 = vmatpush1.bf16.msra.mxu0 %v341
        %385 = vmatprep.subr.bf16.mxu0 0
        %386 = vmatpush1.bf16.msra.mxu0 %v342
        %387 = vmatprep.subr.bf16.mxu0 0
        %388 = vmatpush1.bf16.msra.mxu0 %v343
        %389 = vmatprep.subr.bf16.mxu0 0
        %390 = vmatpush1.bf16.msra.mxu0 %v344
        %391 = vmatprep.subr.bf16.mxu0 0
        %392 = vmatpush1.bf16.msra.mxu0 %v345
        %393 = vmatprep.subr.bf16.mxu0 0
        %394 = vmatpush1.bf16.msra.mxu0 %v346
        %395 = vmatprep.mubr.bf16.mxu0 %v227
        %396 = vmatmul.mubr.bf16.gmra.mrb[0].mxu0 %v226
        %v397 = vpop.f32.mrb[0].mxu0
        %v398 = vadd.f32 %v265, %v397
        %v399 = vpop.f32.mrb[0].mxu0
        %v400 = vpop.f32.mrb[0].mxu0
        %v401 = vpop.f32.mrb[0].mxu0
        %402 = vdwg.mxu0
        %s403 = scalar_lea.vmem %s1, 512
        %v404 = vld [vmem:[%s403] sm:$0xf]
        %v405 = vld [vmem:[%s403 + $0x4] sm:$0xf]
        %v406 = vld [vmem:[%s403 + $0x8] sm:$0xf]
        %v407 = vld [vmem:[%s403 + $0xc] sm:$0xf]
        %v408 = vld [vmem:[%s403 + $0x10] sm:$0xf]
        %v409 = vld [vmem:[%s403 + $0x14] sm:$0xf]
        %v410 = vld [vmem:[%s403 + $0x18] sm:$0xf]
        %v411 = vld [vmem:[%s403 + $0x1c] sm:$0xf]
        %v412 = vld [vmem:[%s403 + $0x20] sm:$0xf]
        %v413 = vld [vmem:[%s403 + $0x24] sm:$0xf]
        %v414 = vld [vmem:[%s403 + $0x28] sm:$0xf]
        %v415 = vld [vmem:[%s403 + $0x2c] sm:$0xf]
        %v416 = vld [vmem:[%s403 + $0x30] sm:$0xf]
        %v417 = vld [vmem:[%s403 + $0x34] sm:$0xf]
        %v418 = vld [vmem:[%s403 + $0x38] sm:$0xf]
        %v419 = vld [vmem:[%s403 + $0x3c] sm:$0xf]
        %v420 = vld [vmem:[%s403 + $0x40] sm:$0xf]
        %v421 = vld [vmem:[%s403 + $0x44] sm:$0xf]
        %v422 = vld [vmem:[%s403 + $0x48] sm:$0xf]
        %v423 = vld [vmem:[%s403 + $0x4c] sm:$0xf]
        %v424 = vld [vmem:[%s403 + $0x50] sm:$0xf]
        %v425 = vld [vmem:[%s403 + $0x54] sm:$0xf]
        %v426 = vld [vmem:[%s403 + $0x58] sm:$0xf]
        %v427 = vld [vmem:[%s403 + $0x5c] sm:$0xf]
        %v428 = vld [vmem:[%s403 + $0x60] sm:$0xf]
        %v429 = vld [vmem:[%s403 + $0x64] sm:$0xf]
        %v430 = vld [vmem:[%s403 + $0x68] sm:$0xf]
        %v431 = vld [vmem:[%s403 + $0x6c] sm:$0xf]
        %v432 = vld [vmem:[%s403 + $0x70] sm:$0xf]
        %v433 = vld [vmem:[%s403 + $0x74] sm:$0xf]
        %v434 = vld [vmem:[%s403 + $0x78] sm:$0xf]
        %v435 = vld [vmem:[%s403 + $0x7c] sm:$0xf]
        %s436 = scalar_lea.vmem %s2, 4
        %v437 = vld [vmem:[%s436] sm:$0x1]
        %v439 = vlaneseq
        %v440 = vshrl.u32 %v439, 7
        %v441 = vsub.s32 0, %v440
        %v442 = vrot.slane %v437, %v441
        %v476 = vunpack.c.l.b16 %v404
        %v477 = vunpack.c.l.b16 %v405
        %v478 = vunpack.c.l.b16 %v406
        %v479 = vunpack.c.l.b16 %v407
        %v480 = vunpack.c.l.b16 %v408
        %v481 = vunpack.c.l.b16 %v409
        %v482 = vunpack.c.l.b16 %v410
        %v483 = vunpack.c.l.b16 %v411
        %v484 = vunpack.c.l.b16 %v412
        %v485 = vunpack.c.l.b16 %v413
        %v486 = vunpack.c.l.b16 %v414
        %v487 = vunpack.c.l.b16 %v415
        %v488 = vunpack.c.l.b16 %v416
        %v489 = vunpack.c.l.b16 %v417
        %v490 = vunpack.c.l.b16 %v418
        %v491 = vunpack.c.l.b16 %v419
        %v492 = vunpack.c.l.b16 %v420
        %v493 = vunpack.c.l.b16 %v421
        %v494 = vunpack.c.l.b16 %v422
        %v495 = vunpack.c.l.b16 %v423
        %v496 = vunpack.c.l.b16 %v424
        %v497 = vunpack.c.l.b16 %v425
        %v498 = vunpack.c.l.b16 %v426
        %v499 = vunpack.c.l.b16 %v427
        %v500 = vunpack.c.l.b16 %v428
        %v501 = vunpack.c.l.b16 %v429
        %v502 = vunpack.c.l.b16 %v430
        %v503 = vunpack.c.l.b16 %v431
        %v504 = vunpack.c.l.b16 %v432
        %v505 = vunpack.c.l.b16 %v433
        %v506 = vunpack.c.l.b16 %v434
        %v507 = vunpack.c.l.b16 %v435
        %v508 = vpack.c.b16 %v477, %v476
        %v509 = vpack.c.b16 %v479, %v478
        %v510 = vpack.c.b16 %v481, %v480
        %v511 = vpack.c.b16 %v483, %v482
        %v512 = vpack.c.b16 %v485, %v484
        %v513 = vpack.c.b16 %v487, %v486
        %v514 = vpack.c.b16 %v489, %v488
        %v515 = vpack.c.b16 %v491, %v490
        %v516 = vpack.c.b16 %v493, %v492
        %v517 = vpack.c.b16 %v495, %v494
        %v518 = vpack.c.b16 %v497, %v496
        %v519 = vpack.c.b16 %v499, %v498
        %v520 = vpack.c.b16 %v501, %v500
        %v521 = vpack.c.b16 %v503, %v502
        %v522 = vpack.c.b16 %v505, %v504
        %v523 = vpack.c.b16 %v507, %v506
        %540 = vmatprep.subr.bf16.mxu0 0
        %541 = vmatpush1.bf16.msra.mxu0 %v508
        %542 = vmatprep.subr.bf16.mxu0 0
        %543 = vmatpush1.bf16.msra.mxu0 %v509
        %544 = vmatprep.subr.bf16.mxu0 0
        %545 = vmatpush1.bf16.msra.mxu0 %v510
        %546 = vmatprep.subr.bf16.mxu0 0
        %547 = vmatpush1.bf16.msra.mxu0 %v511
        %548 = vmatprep.subr.bf16.mxu0 0
        %549 = vmatpush1.bf16.msra.mxu0 %v512
        %550 = vmatprep.subr.bf16.mxu0 0
        %551 = vmatpush1.bf16.msra.mxu0 %v513
        %552 = vmatprep.subr.bf16.mxu0 0
        %553 = vmatpush1.bf16.msra.mxu0 %v514
        %554 = vmatprep.subr.bf16.mxu0 0
        %555 = vmatpush1.bf16.msra.mxu0 %v515
        %556 = vmatprep.subr.bf16.mxu0 0
        %557 = vmatpush1.bf16.msra.mxu0 %v516
        %558 = vmatprep.subr.bf16.mxu0 0
        %559 = vmatpush1.bf16.msra.mxu0 %v517
        %560 = vmatprep.subr.bf16.mxu0 0
        %561 = vmatpush1.bf16.msra.mxu0 %v518
        %562 = vmatprep.subr.bf16.mxu0 0
        %563 = vmatpush1.bf16.msra.mxu0 %v519
        %564 = vmatprep.subr.bf16.mxu0 0
        %565 = vmatpush1.bf16.msra.mxu0 %v520
        %566 = vmatprep.subr.bf16.mxu0 0
        %567 = vmatpush1.bf16.msra.mxu0 %v521
        %568 = vmatprep.subr.bf16.mxu0 0
        %569 = vmatpush1.bf16.msra.mxu0 %v522
        %570 = vmatprep.subr.bf16.mxu0 0
        %571 = vmatpush1.bf16.msra.mxu0 %v523
        %572 = vmatprep.mubr.bf16.mxu0 %v227
        %573 = vmatmul.mubr.bf16.gmra.mrb[0].mxu0 %v226
        %v574 = vpop.f32.mrb[0].mxu0
        %v575 = vadd.f32 %v442, %v574
        %v576 = vpop.f32.mrb[0].mxu0
        %v577 = vpop.f32.mrb[0].mxu0
        %v578 = vpop.f32.mrb[0].mxu0
        %579 = vdwg.mxu0
        %s580 = scalar_lea.vmem %s1, 1024
        %v581 = vld [vmem:[%s580] sm:$0xf]
        %v582 = vld [vmem:[%s580 + $0x4] sm:$0xf]
        %v583 = vld [vmem:[%s580 + $0x8] sm:$0xf]
        %v584 = vld [vmem:[%s580 + $0xc] sm:$0xf]
        %v585 = vld [vmem:[%s580 + $0x10] sm:$0xf]
        %v586 = vld [vmem:[%s580 + $0x14] sm:$0xf]
        %v587 = vld [vmem:[%s580 + $0x18] sm:$0xf]
        %v588 = vld [vmem:[%s580 + $0x1c] sm:$0xf]
        %v589 = vld [vmem:[%s580 + $0x20] sm:$0xf]
        %v590 = vld [vmem:[%s580 + $0x24] sm:$0xf]
        %v591 = vld [vmem:[%s580 + $0x28] sm:$0xf]
        %v592 = vld [vmem:[%s580 + $0x2c] sm:$0xf]
        %v593 = vld [vmem:[%s580 + $0x30] sm:$0xf]
        %v594 = vld [vmem:[%s580 + $0x34] sm:$0xf]
        %v595 = vld [vmem:[%s580 + $0x38] sm:$0xf]
        %v596 = vld [vmem:[%s580 + $0x3c] sm:$0xf]
        %v597 = vld [vmem:[%s580 + $0x40] sm:$0xf]
        %v598 = vld [vmem:[%s580 + $0x44] sm:$0xf]
        %v599 = vld [vmem:[%s580 + $0x48] sm:$0xf]
        %v600 = vld [vmem:[%s580 + $0x4c] sm:$0xf]
        %v601 = vld [vmem:[%s580 + $0x50] sm:$0xf]
        %v602 = vld [vmem:[%s580 + $0x54] sm:$0xf]
        %v603 = vld [vmem:[%s580 + $0x58] sm:$0xf]
        %v604 = vld [vmem:[%s580 + $0x5c] sm:$0xf]
        %v605 = vld [vmem:[%s580 + $0x60] sm:$0xf]
        %v606 = vld [vmem:[%s580 + $0x64] sm:$0xf]
        %v607 = vld [vmem:[%s580 + $0x68] sm:$0xf]
        %v608 = vld [vmem:[%s580 + $0x6c] sm:$0xf]
        %v609 = vld [vmem:[%s580 + $0x70] sm:$0xf]
        %v610 = vld [vmem:[%s580 + $0x74] sm:$0xf]
        %v611 = vld [vmem:[%s580 + $0x78] sm:$0xf]
        %v612 = vld [vmem:[%s580 + $0x7c] sm:$0xf]
        %s613 = scalar_lea.vmem %s2, 8
        %v614 = vld [vmem:[%s613] sm:$0x1]
        %v616 = vlaneseq
        %v617 = vshrl.u32 %v616, 7
        %v618 = vsub.s32 0, %v617
        %v619 = vrot.slane %v614, %v618
        %v653 = vunpack.c.l.b16 %v581
        %v654 = vunpack.c.l.b16 %v582
        %v655 = vunpack.c.l.b16 %v583
        %v656 = vunpack.c.l.b16 %v584
        %v657 = vunpack.c.l.b16 %v585
        %v658 = vunpack.c.l.b16 %v586
        %v659 = vunpack.c.l.b16 %v587
        %v660 = vunpack.c.l.b16 %v588
        %v661 = vunpack.c.l.b16 %v589
        %v662 = vunpack.c.l.b16 %v590
        %v663 = vunpack.c.l.b16 %v591
        %v664 = vunpack.c.l.b16 %v592
        %v665 = vunpack.c.l.b16 %v593
        %v666 = vunpack.c.l.b16 %v594
        %v667 = vunpack.c.l.b16 %v595
        %v668 = vunpack.c.l.b16 %v596
        %v669 = vunpack.c.l.b16 %v597
        %v670 = vunpack.c.l.b16 %v598
        %v671 = vunpack.c.l.b16 %v599
        %v672 = vunpack.c.l.b16 %v600
        %v673 = vunpack.c.l.b16 %v601
        %v674 = vunpack.c.l.b16 %v602
        %v675 = vunpack.c.l.b16 %v603
        %v676 = vunpack.c.l.b16 %v604
        %v677 = vunpack.c.l.b16 %v605
        %v678 = vunpack.c.l.b16 %v606
        %v679 = vunpack.c.l.b16 %v607
        %v680 = vunpack.c.l.b16 %v608
        %v681 = vunpack.c.l.b16 %v609
        %v682 = vunpack.c.l.b16 %v610
        %v683 = vunpack.c.l.b16 %v611
        %v684 = vunpack.c.l.b16 %v612
        %v685 = vpack.c.b16 %v654, %v653
        %v686 = vpack.c.b16 %v656, %v655
        %v687 = vpack.c.b16 %v658, %v657
        %v688 = vpack.c.b16 %v660, %v659
        %v689 = vpack.c.b16 %v662, %v661
        %v690 = vpack.c.b16 %v664, %v663
        %v691 = vpack.c.b16 %v666, %v665
        %v692 = vpack.c.b16 %v668, %v667
        %v693 = vpack.c.b16 %v670, %v669
        %v694 = vpack.c.b16 %v672, %v671
        %v695 = vpack.c.b16 %v674, %v673
        %v696 = vpack.c.b16 %v676, %v675
        %v697 = vpack.c.b16 %v678, %v677
        %v698 = vpack.c.b16 %v680, %v679
        %v699 = vpack.c.b16 %v682, %v681
        %v700 = vpack.c.b16 %v684, %v683
        %717 = vmatprep.subr.bf16.mxu0 0
        %718 = vmatpush1.bf16.msra.mxu0 %v685
        %719 = vmatprep.subr.bf16.mxu0 0
        %720 = vmatpush1.bf16.msra.mxu0 %v686
        %721 = vmatprep.subr.bf16.mxu0 0
        %722 = vmatpush1.bf16.msra.mxu0 %v687
        %723 = vmatprep.subr.bf16.mxu0 0
        %724 = vmatpush1.bf16.msra.mxu0 %v688
        %725 = vmatprep.subr.bf16.mxu0 0
        %726 = vmatpush1.bf16.msra.mxu0 %v689
        %727 = vmatprep.subr.bf16.mxu0 0
        %728 = vmatpush1.bf16.msra.mxu0 %v690
        %729 = vmatprep.subr.bf16.mxu0 0
        %730 = vmatpush1.bf16.msra.mxu0 %v691
        %731 = vmatprep.subr.bf16.mxu0 0
        %732 = vmatpush1.bf16.msra.mxu0 %v692
        %733 = vmatprep.subr.bf16.mxu0 0
        %734 = vmatpush1.bf16.msra.mxu0 %v693
        %735 = vmatprep.subr.bf16.mxu0 0
        %736 = vmatpush1.bf16.msra.mxu0 %v694
        %737 = vmatprep.subr.bf16.mxu0 0
        %738 = vmatpush1.bf16.msra.mxu0 %v695
        %739 = vmatprep.subr.bf16.mxu0 0
        %740 = vmatpush1.bf16.msra.mxu0 %v696
        %741 = vmatprep.subr.bf16.mxu0 0
        %742 = vmatpush1.bf16.msra.mxu0 %v697
        %743 = vmatprep.subr.bf16.mxu0 0
        %744 = vmatpush1.bf16.msra.mxu0 %v698
        %745 = vmatprep.subr.bf16.mxu0 0
        %746 = vmatpush1.bf16.msra.mxu0 %v699
        %747 = vmatprep.subr.bf16.mxu0 0
        %748 = vmatpush1.bf16.msra.mxu0 %v700
        %749 = vmatprep.mubr.bf16.mxu0 %v227
        %750 = vmatmul.mubr.bf16.gmra.mrb[0].mxu0 %v226
        %v751 = vpop.f32.mrb[0].mxu0
        %v752 = vadd.f32 %v619, %v751
        %v753 = vpop.f32.mrb[0].mxu0
        %v754 = vpop.f32.mrb[0].mxu0
        %v755 = vpop.f32.mrb[0].mxu0
        %756 = vdwg.mxu0
        %v757 = vpack.c.bf16 %v398, %v398
        %v758 = vpack.c.bf16 %v575, %v575
        %v759 = vpack.c.bf16 %v752, %v752
        %vm760 = vcmask 523264
        %v762 = vsel %vm760, %v757, 0
        %v765 = vsel %vm760, %v758, 0
        %767 = vmatprep.subr.bf16.mxu0 0
        %768 = vmatpush1.bf16.xpose.msra.mxu0 %v765
        %769 = vmatprep.subr.bf16.mxu0 0
        %770 = vmatpush1.bf16.xpose.msra.mxu0 0
        %771 = vmatprep.subr.bf16.mxu0 0
        %772 = vmatpush1.bf16.xpose.msra.mxu0 0
        %773 = vmatprep.subr.bf16.mxu0 0
        %774 = vmatpush1.bf16.xpose.msra.mxu0 0
        %775 = vmatprep.subr.bf16.mxu0 0
        %776 = vmatpush1.bf16.xpose.msra.mxu0 0
        %777 = vmatprep.subr.bf16.mxu0 0
        %778 = vmatpush1.bf16.xpose.msra.mxu0 0
        %779 = vmatprep.subr.bf16.mxu0 0
        %780 = vmatpush1.bf16.xpose.msra.mxu0 0
        %781 = vmatprep.subr.bf16.mxu0 0
        %782 = vmatpush1.bf16.xpose.msra.mxu0 0
        %783 = vmatprep.subr.bf16.mxu0 0
        %784 = vmatpush1.bf16.xpose.msra.mxu0 0
        %785 = vmatprep.subr.bf16.mxu0 0
        %786 = vmatpush1.bf16.xpose.msra.mxu0 0
        %787 = vmatprep.subr.bf16.mxu0 0
        %788 = vmatpush1.bf16.xpose.msra.mxu0 0
        %789 = vmatprep.subr.bf16.mxu0 0
        %790 = vmatpush1.bf16.xpose.msra.mxu0 0
        %791 = vmatprep.subr.bf16.mxu0 0
        %792 = vmatpush1.bf16.xpose.msra.mxu0 0
        %793 = vmatprep.subr.bf16.mxu0 0
        %794 = vmatpush1.bf16.xpose.msra.mxu0 0
        %795 = vmatprep.subr.bf16.mxu0 0
        %796 = vmatpush1.bf16.xpose.msra.mxu0 0
        %797 = vmatprep.subr.bf16.mxu0 0
        %798 = vmatpush1.bf16.xpose.msra.mxu0 0
        %799 = vmatprep.mubr.bf16.mxu0 0
        %800 = vmatmul.mubr.bf16.gmra.mrb[0].mxu0 %v762
        %v801 = vpop.f32.mrb[0].mxu0
        %v802 = vadd.f32 0.0, %v801
        %v803 = vpop.f32.mrb[0].mxu0
        %v804 = vpop.f32.mrb[0].mxu0
        %v805 = vpop.f32.mrb[0].mxu0
        %806 = vdwg.mxu0
        %vm807 = vcmask 64512
        %v808 = vsel %vm807, %v802, -inf
        %809 = vmax.xlane.f32.xlu0 %v808
        %v810 = vpop.xlane.xlu0 %809
        %v811 = vsub.f32 %v802, %v810
        %v812 = vmul.f32 %v811, 1.442695
        %v813 = vpow.pop %v812
        %v814 = vsel %vm807, %v813, 0.0
        %815 = vadd.xlane.f32.xlu0 %v814
        %v816 = vpop.xlane.xlu0 %815
        %v817 = vrcp.pop %v816
        %v818 = vmul.f32 %v813, %v817
        %v819 = vpack.c.bf16 %v818, %v818
        %v821 = vsel %vm807, %v819, 0
        %vm823 = vcmask 1043456
        %v825 = vsel %vm823, %v759, 0
        %827 = vmatprep.subr.bf16.mxu0 0
        %828 = vmatpush1.bf16.msra.mxu0 %v825
        %829 = vmatprep.subr.bf16.mxu0 0
        %830 = vmatpush1.bf16.msra.mxu0 0
        %831 = vmatprep.subr.bf16.mxu0 0
        %832 = vmatpush1.bf16.msra.mxu0 0
        %833 = vmatprep.subr.bf16.mxu0 0
        %834 = vmatpush1.bf16.msra.mxu0 0
        %835 = vmatprep.subr.bf16.mxu0 0
        %836 = vmatpush1.bf16.msra.mxu0 0
        %837 = vmatprep.subr.bf16.mxu0 0
        %838 = vmatpush1.bf16.msra.mxu0 0
        %839 = vmatprep.subr.bf16.mxu0 0
        %840 = vmatpush1.bf16.msra.mxu0 0
        %841 = vmatprep.subr.bf16.mxu0 0
        %842 = vmatpush1.bf16.msra.mxu0 0
        %843 = vmatprep.subr.bf16.mxu0 0
        %844 = vmatpush1.bf16.msra.mxu0 0
        %845 = vmatprep.subr.bf16.mxu0 0
        %846 = vmatpush1.bf16.msra.mxu0 0
        %847 = vmatprep.subr.bf16.mxu0 0
        %848 = vmatpush1.bf16.msra.mxu0 0
        %849 = vmatprep.subr.bf16.mxu0 0
        %850 = vmatpush1.bf16.msra.mxu0 0
        %851 = vmatprep.subr.bf16.mxu0 0
        %852 = vmatpush1.bf16.msra.mxu0 0
        %853 = vmatprep.subr.bf16.mxu0 0
        %854 = vmatpush1.bf16.msra.mxu0 0
        %855 = vmatprep.subr.bf16.mxu0 0
        %856 = vmatpush1.bf16.msra.mxu0 0
        %857 = vmatprep.subr.bf16.mxu0 0
        %858 = vmatpush1.bf16.msra.mxu0 0
        %859 = vmatprep.mubr.bf16.mxu0 0
        %860 = vmatmul.mubr.bf16.gmra.mrb[0].mxu0 %v821
        %v861 = vpop.f32.mrb[0].mxu0
        %v862 = vadd.f32 0.0, %v861
        %v863 = vpop.f32.mrb[0].mxu0
        %v864 = vpop.f32.mrb[0].mxu0
        %v865 = vpop.f32.mrb[0].mxu0
        %866 = vdwg.mxu0
        %v867 = vpack.c.bf16 %v862, %v862
        %v868 = vld [vmem:[%s3] sm:$0xff]
        %v869 = vld [vmem:[%s3 + $0x8] sm:$0xff]
        %v870 = vld [vmem:[%s3 + $0x10] sm:$0xff]
        %v871 = vld [vmem:[%s3 + $0x18] sm:$0xff]
        %v872 = vld [vmem:[%s3 + $0x20] sm:$0xff]
        %v873 = vld [vmem:[%s3 + $0x28] sm:$0xff]
        %v874 = vld [vmem:[%s3 + $0x30] sm:$0xff]
        %v875 = vld [vmem:[%s3 + $0x38] sm:$0xff]
        %s876 = scalar_lea.vmem %s1, 128
        %v877 = vld [vmem:[%s876] sm:$0xf]
        %v878 = vld [vmem:[%s876 + $0x4] sm:$0xf]
        %v879 = vld [vmem:[%s876 + $0x8] sm:$0xf]
        %v880 = vld [vmem:[%s876 + $0xc] sm:$0xf]
        %v881 = vld [vmem:[%s876 + $0x10] sm:$0xf]
        %v882 = vld [vmem:[%s876 + $0x14] sm:$0xf]
        %v883 = vld [vmem:[%s876 + $0x18] sm:$0xf]
        %v884 = vld [vmem:[%s876 + $0x1c] sm:$0xf]
        %v885 = vld [vmem:[%s876 + $0x20] sm:$0xf]
        %v886 = vld [vmem:[%s876 + $0x24] sm:$0xf]
        %v887 = vld [vmem:[%s876 + $0x28] sm:$0xf]
        %v888 = vld [vmem:[%s876 + $0x2c] sm:$0xf]
        %v889 = vld [vmem:[%s876 + $0x30] sm:$0xf]
        %v890 = vld [vmem:[%s876 + $0x34] sm:$0xf]
        %v891 = vld [vmem:[%s876 + $0x38] sm:$0xf]
        %v892 = vld [vmem:[%s876 + $0x3c] sm:$0xf]
        %v893 = vld [vmem:[%s876 + $0x40] sm:$0xf]
        %v894 = vld [vmem:[%s876 + $0x44] sm:$0xf]
        %v895 = vld [vmem:[%s876 + $0x48] sm:$0xf]
        %v896 = vld [vmem:[%s876 + $0x4c] sm:$0xf]
        %v897 = vld [vmem:[%s876 + $0x50] sm:$0xf]
        %v898 = vld [vmem:[%s876 + $0x54] sm:$0xf]
        %v899 = vld [vmem:[%s876 + $0x58] sm:$0xf]
        %v900 = vld [vmem:[%s876 + $0x5c] sm:$0xf]
        %v901 = vld [vmem:[%s876 + $0x60] sm:$0xf]
        %v902 = vld [vmem:[%s876 + $0x64] sm:$0xf]
        %v903 = vld [vmem:[%s876 + $0x68] sm:$0xf]
        %v904 = vld [vmem:[%s876 + $0x6c] sm:$0xf]
        %v905 = vld [vmem:[%s876 + $0x70] sm:$0xf]
        %v906 = vld [vmem:[%s876 + $0x74] sm:$0xf]
        %v907 = vld [vmem:[%s876 + $0x78] sm:$0xf]
        %v908 = vld [vmem:[%s876 + $0x7c] sm:$0xf]
        %s909 = scalar_lea.vmem %s2, 1
        %v910 = vld [vmem:[%s909] sm:$0x1]
        %v912 = vlaneseq
        %v913 = vshrl.u32 %v912, 7
        %v914 = vsub.s32 0, %v913
        %v915 = vrot.slane %v910, %v914
        %v949 = vunpack.c.l.b16 %v877
        %v950 = vunpack.c.l.b16 %v878
        %v951 = vunpack.c.l.b16 %v879
        %v952 = vunpack.c.l.b16 %v880
        %v953 = vunpack.c.l.b16 %v881
        %v954 = vunpack.c.l.b16 %v882
        %v955 = vunpack.c.l.b16 %v883
        %v956 = vunpack.c.l.b16 %v884
        %v957 = vunpack.c.l.b16 %v885
        %v958 = vunpack.c.l.b16 %v886
        %v959 = vunpack.c.l.b16 %v887
        %v960 = vunpack.c.l.b16 %v888
        %v961 = vunpack.c.l.b16 %v889
        %v962 = vunpack.c.l.b16 %v890
        %v963 = vunpack.c.l.b16 %v891
        %v964 = vunpack.c.l.b16 %v892
        %v965 = vunpack.c.l.b16 %v893
        %v966 = vunpack.c.l.b16 %v894
        %v967 = vunpack.c.l.b16 %v895
        %v968 = vunpack.c.l.b16 %v896
        %v969 = vunpack.c.l.b16 %v897
        %v970 = vunpack.c.l.b16 %v898
        %v971 = vunpack.c.l.b16 %v899
        %v972 = vunpack.c.l.b16 %v900
        %v973 = vunpack.c.l.b16 %v901
        %v974 = vunpack.c.l.b16 %v902
        %v975 = vunpack.c.l.b16 %v903
        %v976 = vunpack.c.l.b16 %v904
        %v977 = vunpack.c.l.b16 %v905
        %v978 = vunpack.c.l.b16 %v906
        %v979 = vunpack.c.l.b16 %v907
        %v980 = vunpack.c.l.b16 %v908
        %v981 = vpack.c.b16 %v950, %v949
        %v982 = vpack.c.b16 %v952, %v951
        %v983 = vpack.c.b16 %v954, %v953
        %v984 = vpack.c.b16 %v956, %v955
        %v985 = vpack.c.b16 %v958, %v957
        %v986 = vpack.c.b16 %v960, %v959
        %v987 = vpack.c.b16 %v962, %v961
        %v988 = vpack.c.b16 %v964, %v963
        %v989 = vpack.c.b16 %v966, %v965
        %v990 = vpack.c.b16 %v968, %v967
        %v991 = vpack.c.b16 %v970, %v969
        %v992 = vpack.c.b16 %v972, %v971
        %v993 = vpack.c.b16 %v974, %v973
        %v994 = vpack.c.b16 %v976, %v975
        %v995 = vpack.c.b16 %v978, %v977
        %v996 = vpack.c.b16 %v980, %v979
        %1013 = vmatprep.subr.bf16.mxu0 0
        %1014 = vmatpush1.bf16.msra.mxu0 %v981
        %1015 = vmatprep.subr.bf16.mxu0 0
        %1016 = vmatpush1.bf16.msra.mxu0 %v982
        %1017 = vmatprep.subr.bf16.mxu0 0
        %1018 = vmatpush1.bf16.msra.mxu0 %v983
        %1019 = vmatprep.subr.bf16.mxu0 0
        %1020 = vmatpush1.bf16.msra.mxu0 %v984
        %1021 = vmatprep.subr.bf16.mxu0 0
        %1022 = vmatpush1.bf16.msra.mxu0 %v985
        %1023 = vmatprep.subr.bf16.mxu0 0
        %1024 = vmatpush1.bf16.msra.mxu0 %v986
        %1025 = vmatprep.subr.bf16.mxu0 0
        %1026 = vmatpush1.bf16.msra.mxu0 %v987
        %1027 = vmatprep.subr.bf16.mxu0 0
        %1028 = vmatpush1.bf16.msra.mxu0 %v988
        %1029 = vmatprep.subr.bf16.mxu0 0
        %1030 = vmatpush1.bf16.msra.mxu0 %v989
        %1031 = vmatprep.subr.bf16.mxu0 0
        %1032 = vmatpush1.bf16.msra.mxu0 %v990
        %1033 = vmatprep.subr.bf16.mxu0 0
        %1034 = vmatpush1.bf16.msra.mxu0 %v991
        %1035 = vmatprep.subr.bf16.mxu0 0
        %1036 = vmatpush1.bf16.msra.mxu0 %v992
        %1037 = vmatprep.subr.bf16.mxu0 0
        %1038 = vmatpush1.bf16.msra.mxu0 %v993
        %1039 = vmatprep.subr.bf16.mxu0 0
        %1040 = vmatpush1.bf16.msra.mxu0 %v994
        %1041 = vmatprep.subr.bf16.mxu0 0
        %1042 = vmatpush1.bf16.msra.mxu0 %v995
        %1043 = vmatprep.subr.bf16.mxu0 0
        %1044 = vmatpush1.bf16.msra.mxu0 %v996
        %1045 = vmatprep.mubr.bf16.mxu0 %v227
        %1046 = vmatmul.mubr.bf16.gmra.mrb[0].mxu0 %v226
        %v1047 = vpop.f32.mrb[0].mxu0
        %v1048 = vadd.f32 %v915, %v1047
        %v1049 = vpop.f32.mrb[0].mxu0
        %v1050 = vpop.f32.mrb[0].mxu0
        %v1051 = vpop.f32.mrb[0].mxu0
        %1052 = vdwg.mxu0
        %s1053 = scalar_lea.vmem %s1, 640
        %v1054 = vld [vmem:[%s1053] sm:$0xf]
        %v1055 = vld [vmem:[%s1053 + $0x4] sm:$0xf]
        %v1056 = vld [vmem:[%s1053 + $0x8] sm:$0xf]
        %v1057 = vld [vmem:[%s1053 + $0xc] sm:$0xf]
        %v1058 = vld [vmem:[%s1053 + $0x10] sm:$0xf]
        %v1059 = vld [vmem:[%s1053 + $0x14] sm:$0xf]
        %v1060 = vld [vmem:[%s1053 + $0x18] sm:$0xf]
        %v1061 = vld [vmem:[%s1053 + $0x1c] sm:$0xf]
        %v1062 = vld [vmem:[%s1053 + $0x20] sm:$0xf]
        %v1063 = vld [vmem:[%s1053 + $0x24] sm:$0xf]
        %v1064 = vld [vmem:[%s1053 + $0x28] sm:$0xf]
        %v1065 = vld [vmem:[%s1053 + $0x2c] sm:$0xf]
        %v1066 = vld [vmem:[%s1053 + $0x30] sm:$0xf]
        %v1067 = vld [vmem:[%s1053 + $0x34] sm:$0xf]
        %v1068 = vld [vmem:[%s1053 + $0x38] sm:$0xf]
        %v1069 = vld [vmem:[%s1053 + $0x3c] sm:$0xf]
        %v1070 = vld [vmem:[%s1053 + $0x40] sm:$0xf]
        %v1071 = vld [vmem:[%s1053 + $0x44] sm:$0xf]
        %v1072 = vld [vmem:[%s1053 + $0x48] sm:$0xf]
        %v1073 = vld [vmem:[%s1053 + $0x4c] sm:$0xf]
        %v1074 = vld [vmem:[%s1053 + $0x50] sm:$0xf]
        %v1075 = vld [vmem:[%s1053 + $0x54] sm:$0xf]
        %v1076 = vld [vmem:[%s1053 + $0x58] sm:$0xf]
        %v1077 = vld [vmem:[%s1053 + $0x5c] sm:$0xf]
        %v1078 = vld [vmem:[%s1053 + $0x60] sm:$0xf]
        %v1079 = vld [vmem:[%s1053 + $0x64] sm:$0xf]
        %v1080 = vld [vmem:[%s1053 + $0x68] sm:$0xf]
        %v1081 = vld [vmem:[%s1053 + $0x6c] sm:$0xf]
        %v1082 = vld [vmem:[%s1053 + $0x70] sm:$0xf]
        %v1083 = vld [vmem:[%s1053 + $0x74] sm:$0xf]
        %v1084 = vld [vmem:[%s1053 + $0x78] sm:$0xf]
        %v1085 = vld [vmem:[%s1053 + $0x7c] sm:$0xf]
        %s1086 = scalar_lea.vmem %s2, 5
        %v1087 = vld [vmem:[%s1086] sm:$0x1]
        %v1089 = vlaneseq
        %v1090 = vshrl.u32 %v1089, 7
        %v1091 = vsub.s32 0, %v1090
        %v1092 = vrot.slane %v1087, %v1091
        %v1126 = vunpack.c.l.b16 %v1054
        %v1127 = vunpack.c.l.b16 %v1055
        %v1128 = vunpack.c.l.b16 %v1056
        %v1129 = vunpack.c.l.b16 %v1057
        %v1130 = vunpack.c.l.b16 %v1058
        %v1131 = vunpack.c.l.b16 %v1059
        %v1132 = vunpack.c.l.b16 %v1060
        %v1133 = vunpack.c.l.b16 %v1061
        %v1134 = vunpack.c.l.b16 %v1062
        %v1135 = vunpack.c.l.b16 %v1063
        %v1136 = vunpack.c.l.b16 %v1064
        %v1137 = vunpack.c.l.b16 %v1065
        %v1138 = vunpack.c.l.b16 %v1066
        %v1139 = vunpack.c.l.b16 %v1067
        %v1140 = vunpack.c.l.b16 %v1068
        %v1141 = vunpack.c.l.b16 %v1069
        %v1142 = vunpack.c.l.b16 %v1070
        %v1143 = vunpack.c.l.b16 %v1071
        %v1144 = vunpack.c.l.b16 %v1072
        %v1145 = vunpack.c.l.b16 %v1073
        %v1146 = vunpack.c.l.b16 %v1074
        %v1147 = vunpack.c.l.b16 %v1075
        %v1148 = vunpack.c.l.b16 %v1076
        %v1149 = vunpack.c.l.b16 %v1077
        %v1150 = vunpack.c.l.b16 %v1078
        %v1151 = vunpack.c.l.b16 %v1079
        %v1152 = vunpack.c.l.b16 %v1080
        %v1153 = vunpack.c.l.b16 %v1081
        %v1154 = vunpack.c.l.b16 %v1082
        %v1155 = vunpack.c.l.b16 %v1083
        %v1156 = vunpack.c.l.b16 %v1084
        %v1157 = vunpack.c.l.b16 %v1085
        %v1158 = vpack.c.b16 %v1127, %v1126
        %v1159 = vpack.c.b16 %v1129, %v1128
        %v1160 = vpack.c.b16 %v1131, %v1130
        %v1161 = vpack.c.b16 %v1133, %v1132
        %v1162 = vpack.c.b16 %v1135, %v1134
        %v1163 = vpack.c.b16 %v1137, %v1136
        %v1164 = vpack.c.b16 %v1139, %v1138
        %v1165 = vpack.c.b16 %v1141, %v1140
        %v1166 = vpack.c.b16 %v1143, %v1142
        %v1167 = vpack.c.b16 %v1145, %v1144
        %v1168 = vpack.c.b16 %v1147, %v1146
        %v1169 = vpack.c.b16 %v1149, %v1148
        %v1170 = vpack.c.b16 %v1151, %v1150
        %v1171 = vpack.c.b16 %v1153, %v1152
        %v1172 = vpack.c.b16 %v1155, %v1154
        %v1173 = vpack.c.b16 %v1157, %v1156
        %1190 = vmatprep.subr.bf16.mxu0 0
        %1191 = vmatpush1.bf16.msra.mxu0 %v1158
        %1192 = vmatprep.subr.bf16.mxu0 0
        %1193 = vmatpush1.bf16.msra.mxu0 %v1159
        %1194 = vmatprep.subr.bf16.mxu0 0
        %1195 = vmatpush1.bf16.msra.mxu0 %v1160
        %1196 = vmatprep.subr.bf16.mxu0 0
        %1197 = vmatpush1.bf16.msra.mxu0 %v1161
        %1198 = vmatprep.subr.bf16.mxu0 0
        %1199 = vmatpush1.bf16.msra.mxu0 %v1162
        %1200 = vmatprep.subr.bf16.mxu0 0
        %1201 = vmatpush1.bf16.msra.mxu0 %v1163
        %1202 = vmatprep.subr.bf16.mxu0 0
        %1203 = vmatpush1.bf16.msra.mxu0 %v1164
        %1204 = vmatprep.subr.bf16.mxu0 0
        %1205 = vmatpush1.bf16.msra.mxu0 %v1165
        %1206 = vmatprep.subr.bf16.mxu0 0
        %1207 = vmatpush1.bf16.msra.mxu0 %v1166
        %1208 = vmatprep.subr.bf16.mxu0 0
        %1209 = vmatpush1.bf16.msra.mxu0 %v1167
        %1210 = vmatprep.subr.bf16.mxu0 0
        %1211 = vmatpush1.bf16.msra.mxu0 %v1168
        %1212 = vmatprep.subr.bf16.mxu0 0
        %1213 = vmatpush1.bf16.msra.mxu0 %v1169
        %1214 = vmatprep.subr.bf16.mxu0 0
        %1215 = vmatpush1.bf16.msra.mxu0 %v1170
        %1216 = vmatprep.subr.bf16.mxu0 0
        %1217 = vmatpush1.bf16.msra.mxu0 %v1171
        %1218 = vmatprep.subr.bf16.mxu0 0
        %1219 = vmatpush1.bf16.msra.mxu0 %v1172
        %1220 = vmatprep.subr.bf16.mxu0 0
        %1221 = vmatpush1.bf16.msra.mxu0 %v1173
        %1222 = vmatprep.mubr.bf16.mxu0 %v227
        %1223 = vmatmul.mubr.bf16.gmra.mrb[0].mxu0 %v226
        %v1224 = vpop.f32.mrb[0].mxu0
        %v1225 = vadd.f32 %v1092, %v1224
        %v1226 = vpop.f32.mrb[0].mxu0
        %v1227 = vpop.f32.mrb[0].mxu0
        %v1228 = vpop.f32.mrb[0].mxu0
        %1229 = vdwg.mxu0
        %s1230 = scalar_lea.vmem %s1, 1152
        %v1231 = vld [vmem:[%s1230] sm:$0xf]
        %v1232 = vld [vmem:[%s1230 + $0x4] sm:$0xf]
        %v1233 = vld [vmem:[%s1230 + $0x8] sm:$0xf]
        %v1234 = vld [vmem:[%s1230 + $0xc] sm:$0xf]
        %v1235 = vld [vmem:[%s1230 + $0x10] sm:$0xf]
        %v1236 = vld [vmem:[%s1230 + $0x14] sm:$0xf]
        %v1237 = vld [vmem:[%s1230 + $0x18] sm:$0xf]
        %v1238 = vld [vmem:[%s1230 + $0x1c] sm:$0xf]
        %v1239 = vld [vmem:[%s1230 + $0x20] sm:$0xf]
        %v1240 = vld [vmem:[%s1230 + $0x24] sm:$0xf]
        %v1241 = vld [vmem:[%s1230 + $0x28] sm:$0xf]
        %v1242 = vld [vmem:[%s1230 + $0x2c] sm:$0xf]
        %v1243 = vld [vmem:[%s1230 + $0x30] sm:$0xf]
        %v1244 = vld [vmem:[%s1230 + $0x34] sm:$0xf]
        %v1245 = vld [vmem:[%s1230 + $0x38] sm:$0xf]
        %v1246 = vld [vmem:[%s1230 + $0x3c] sm:$0xf]
        %v1247 = vld [vmem:[%s1230 + $0x40] sm:$0xf]
        %v1248 = vld [vmem:[%s1230 + $0x44] sm:$0xf]
        %v1249 = vld [vmem:[%s1230 + $0x48] sm:$0xf]
        %v1250 = vld [vmem:[%s1230 + $0x4c] sm:$0xf]
        %v1251 = vld [vmem:[%s1230 + $0x50] sm:$0xf]
        %v1252 = vld [vmem:[%s1230 + $0x54] sm:$0xf]
        %v1253 = vld [vmem:[%s1230 + $0x58] sm:$0xf]
        %v1254 = vld [vmem:[%s1230 + $0x5c] sm:$0xf]
        %v1255 = vld [vmem:[%s1230 + $0x60] sm:$0xf]
        %v1256 = vld [vmem:[%s1230 + $0x64] sm:$0xf]
        %v1257 = vld [vmem:[%s1230 + $0x68] sm:$0xf]
        %v1258 = vld [vmem:[%s1230 + $0x6c] sm:$0xf]
        %v1259 = vld [vmem:[%s1230 + $0x70] sm:$0xf]
        %v1260 = vld [vmem:[%s1230 + $0x74] sm:$0xf]
        %v1261 = vld [vmem:[%s1230 + $0x78] sm:$0xf]
        %v1262 = vld [vmem:[%s1230 + $0x7c] sm:$0xf]
        %s1263 = scalar_lea.vmem %s2, 9
        %v1264 = vld [vmem:[%s1263] sm:$0x1]
        %v1266 = vlaneseq
        %v1267 = vshrl.u32 %v1266, 7
        %v1268 = vsub.s32 0, %v1267
        %v1269 = vrot.slane %v1264, %v1268
        %v1303 = vunpack.c.l.b16 %v1231
        %v1304 = vunpack.c.l.b16 %v1232
        %v1305 = vunpack.c.l.b16 %v1233
        %v1306 = vunpack.c.l.b16 %v1234
        %v1307 = vunpack.c.l.b16 %v1235
        %v1308 = vunpack.c.l.b16 %v1236
        %v1309 = vunpack.c.l.b16 %v1237
        %v1310 = vunpack.c.l.b16 %v1238
        %v1311 = vunpack.c.l.b16 %v1239
        %v1312 = vunpack.c.l.b16 %v1240
        %v1313 = vunpack.c.l.b16 %v1241
        %v1314 = vunpack.c.l.b16 %v1242
        %v1315 = vunpack.c.l.b16 %v1243
        %v1316 = vunpack.c.l.b16 %v1244
        %v1317 = vunpack.c.l.b16 %v1245
        %v1318 = vunpack.c.l.b16 %v1246
        %v1319 = vunpack.c.l.b16 %v1247
        %v1320 = vunpack.c.l.b16 %v1248
        %v1321 = vunpack.c.l.b16 %v1249
        %v1322 = vunpack.c.l.b16 %v1250
        %v1323 = vunpack.c.l.b16 %v1251
        %v1324 = vunpack.c.l.b16 %v1252
        %v1325 = vunpack.c.l.b16 %v1253
        %v1326 = vunpack.c.l.b16 %v1254
        %v1327 = vunpack.c.l.b16 %v1255
        %v1328 = vunpack.c.l.b16 %v1256
        %v1329 = vunpack.c.l.b16 %v1257
        %v1330 = vunpack.c.l.b16 %v1258
        %v1331 = vunpack.c.l.b16 %v1259
        %v1332 = vunpack.c.l.b16 %v1260
        %v1333 = vunpack.c.l.b16 %v1261
        %v1334 = vunpack.c.l.b16 %v1262
        %v1335 = vpack.c.b16 %v1304, %v1303
        %v1336 = vpack.c.b16 %v1306, %v1305
        %v1337 = vpack.c.b16 %v1308, %v1307
        %v1338 = vpack.c.b16 %v1310, %v1309
        %v1339 = vpack.c.b16 %v1312, %v1311
        %v1340 = vpack.c.b16 %v1314, %v1313
        %v1341 = vpack.c.b16 %v1316, %v1315
        %v1342 = vpack.c.b16 %v1318, %v1317
        %v1343 = vpack.c.b16 %v1320, %v1319
        %v1344 = vpack.c.b16 %v1322, %v1321
        %v1345 = vpack.c.b16 %v1324, %v1323
        %v1346 = vpack.c.b16 %v1326, %v1325
        %v1347 = vpack.c.b16 %v1328, %v1327
        %v1348 = vpack.c.b16 %v1330, %v1329
        %v1349 = vpack.c.b16 %v1332, %v1331
        %v1350 = vpack.c.b16 %v1334, %v1333
        %1367 = vmatprep.subr.bf16.mxu0 0
        %1368 = vmatpush1.bf16.msra.mxu0 %v1335
        %1369 = vmatprep.subr.bf16.mxu0 0
        %1370 = vmatpush1.bf16.msra.mxu0 %v1336
        %1371 = vmatprep.subr.bf16.mxu0 0
        %1372 = vmatpush1.bf16.msra.mxu0 %v1337
        %1373 = vmatprep.subr.bf16.mxu0 0
        %1374 = vmatpush1.bf16.msra.mxu0 %v1338
        %1375 = vmatprep.subr.bf16.mxu0 0
        %1376 = vmatpush1.bf16.msra.mxu0 %v1339
        %1377 = vmatprep.subr.bf16.mxu0 0
        %1378 = vmatpush1.bf16.msra.mxu0 %v1340
        %1379 = vmatprep.subr.bf16.mxu0 0
        %1380 = vmatpush1.bf16.msra.mxu0 %v1341
        %1381 = vmatprep.subr.bf16.mxu0 0
        %1382 = vmatpush1.bf16.msra.mxu0 %v1342
        %1383 = vmatprep.subr.bf16.mxu0 0
        %1384 = vmatpush1.bf16.msra.mxu0 %v1343
        %1385 = vmatprep.subr.bf16.mxu0 0
        %1386 = vmatpush1.bf16.msra.mxu0 %v1344
        %1387 = vmatprep.subr.bf16.mxu0 0
        %1388 = vmatpush1.bf16.msra.mxu0 %v1345
        %1389 = vmatprep.subr.bf16.mxu0 0
        %1390 = vmatpush1.bf16.msra.mxu0 %v1346
        %1391 = vmatprep.subr.bf16.mxu0 0
        %1392 = vmatpush1.bf16.msra.mxu0 %v1347
        %1393 = vmatprep.subr.bf16.mxu0 0
        %1394 = vmatpush1.bf16.msra.mxu0 %v1348
        %1395 = vmatprep.subr.bf16.mxu0 0
        %1396 = vmatpush1.bf16.msra.mxu0 %v1349
        %1397 = vmatprep.subr.bf16.mxu0 0
        %1398 = vmatpush1.bf16.msra.mxu0 %v1350
        %1399 = vmatprep.mubr.bf16.mxu0 %v227
        %1400 = vmatmul.mubr.bf16.gmra.mrb[0].mxu0 %v226
        %v1401 = vpop.f32.mrb[0].mxu0
        %v1402 = vadd.f32 %v1269, %v1401
        %v1403 = vpop.f32.mrb[0].mxu0
        %v1404 = vpop.f32.mrb[0].mxu0
        %v1405 = vpop.f32.mrb[0].mxu0
        %1406 = vdwg.mxu0
        %v1407 = vpack.c.bf16 %v1048, %v1048
        %v1408 = vpack.c.bf16 %v1225, %v1225
        %v1409 = vpack.c.bf16 %v1402, %v1402
        %v1411 = vsel %vm760, %v1407, 0
        %v1414 = vsel %vm760, %v1408, 0
        %1416 = vmatprep.subr.bf16.mxu0 0
        %1417 = vmatpush1.bf16.xpose.msra.mxu0 %v1414
        %1418 = vmatprep.subr.bf16.mxu0 0
        %1419 = vmatpush1.bf16.xpose.msra.mxu0 0
        %1420 = vmatprep.subr.bf16.mxu0 0
        %1421 = vmatpush1.bf16.xpose.msra.mxu0 0
        %1422 = vmatprep.subr.bf16.mxu0 0
        %1423 = vmatpush1.bf16.xpose.msra.mxu0 0
        %1424 = vmatprep.subr.bf16.mxu0 0
        %1425 = vmatpush1.bf16.xpose.msra.mxu0 0
        %1426 = vmatprep.subr.bf16.mxu0 0
        %1427 = vmatpush1.bf16.xpose.msra.mxu0 0
        %1428 = vmatprep.subr.bf16.mxu0 0
        %1429 = vmatpush1.bf16.xpose.msra.mxu0 0
        %1430 = vmatprep.subr.bf16.mxu0 0
        %1431 = vmatpush1.bf16.xpose.msra.mxu0 0
        %1432 = vmatprep.subr.bf16.mxu0 0
        %1433 = vmatpush1.bf16.xpose.msra.mxu0 0
        %1434 = vmatprep.subr.bf16.mxu0 0
        %1435 = vmatpush1.bf16.xpose.msra.mxu0 0
        %1436 = vmatprep.subr.bf16.mxu0 0
        %1437 = vmatpush1.bf16.xpose.msra.mxu0 0
        %1438 = vmatprep.subr.bf16.mxu0 0
        %1439 = vmatpush1.bf16.xpose.msra.mxu0 0
        %1440 = vmatprep.subr.bf16.mxu0 0
        %1441 = vmatpush1.bf16.xpose.msra.mxu0 0
        %1442 = vmatprep.subr.bf16.mxu0 0
        %1443 = vmatpush1.bf16.xpose.msra.mxu0 0
        %1444 = vmatprep.subr.bf16.mxu0 0
        %1445 = vmatpush1.bf16.xpose.msra.mxu0 0
        %1446 = vmatprep.subr.bf16.mxu0 0
        %1447 = vmatpush1.bf16.xpose.msra.mxu0 0
        %1448 = vmatprep.mubr.bf16.mxu0 0
        %1449 = vmatmul.mubr.bf16.gmra.mrb[0].mxu0 %v1411
        %v1450 = vpop.f32.mrb[0].mxu0
        %v1451 = vadd.f32 0.0, %v1450
        %v1452 = vpop.f32.mrb[0].mxu0
        %v1453 = vpop.f32.mrb[0].mxu0
        %v1454 = vpop.f32.mrb[0].mxu0
        %1455 = vdwg.mxu0
        %v1456 = vsel %vm807, %v1451, -inf
        %1457 = vmax.xlane.f32.xlu0 %v1456
        %v1458 = vpop.xlane.xlu0 %1457
        %v1459 = vsub.f32 %v1451, %v1458
        %v1460 = vmul.f32 %v1459, 1.442695
        %v1461 = vpow.pop %v1460
        %v1462 = vsel %vm807, %v1461, 0.0
        %1463 = vadd.xlane.f32.xlu0 %v1462
        %v1464 = vpop.xlane.xlu0 %1463
        %v1465 = vrcp.pop %v1464
        %v1466 = vmul.f32 %v1461, %v1465
        %v1467 = vpack.c.bf16 %v1466, %v1466
        %v1469 = vsel %vm807, %v1467, 0
        %v1472 = vsel %vm823, %v1409, 0
        %1474 = vmatprep.subr.bf16.mxu0 0
        %1475 = vmatpush1.bf16.msra.mxu0 %v1472
        %1476 = vmatprep.subr.bf16.mxu0 0
        %1477 = vmatpush1.bf16.msra.mxu0 0
        %1478 = vmatprep.subr.bf16.mxu0 0
        %1479 = vmatpush1.bf16.msra.mxu0 0
        %1480 = vmatprep.subr.bf16.mxu0 0
        %1481 = vmatpush1.bf16.msra.mxu0 0
        %1482 = vmatprep.subr.bf16.mxu0 0
        %1483 = vmatpush1.bf16.msra.mxu0 0
        %1484 = vmatprep.subr.bf16.mxu0 0
        %1485 = vmatpush1.bf16.msra.mxu0 0
        %1486 = vmatprep.subr.bf16.mxu0 0
        %1487 = vmatpush1.bf16.msra.mxu0 0
        %1488 = vmatprep.subr.bf16.mxu0 0
        %1489 = vmatpush1.bf16.msra.mxu0 0
        %1490 = vmatprep.subr.bf16.mxu0 0
        %1491 = vmatpush1.bf16.msra.mxu0 0
        %1492 = vmatprep.subr.bf16.mxu0 0
        %1493 = vmatpush1.bf16.msra.mxu0 0
        %1494 = vmatprep.subr.bf16.mxu0 0
        %1495 = vmatpush1.bf16.msra.mxu0 0
        %1496 = vmatprep.subr.bf16.mxu0 0
        %1497 = vmatpush1.bf16.msra.mxu0 0
        %1498 = vmatprep.subr.bf16.mxu0 0
        %1499 = vmatpush1.bf16.msra.mxu0 0
        %1500 = vmatprep.subr.bf16.mxu0 0
        %1501 = vmatpush1.bf16.msra.mxu0 0
        %1502 = vmatprep.subr.bf16.mxu0 0
        %1503 = vmatpush1.bf16.msra.mxu0 0
        %1504 = vmatprep.subr.bf16.mxu0 0
        %1505 = vmatpush1.bf16.msra.mxu0 0
        %1506 = vmatprep.mubr.bf16.mxu0 0
        %1507 = vmatmul.mubr.bf16.gmra.mrb[0].mxu0 %v1469
        %v1508 = vpop.f32.mrb[0].mxu0
        %v1509 = vadd.f32 0.0, %v1508
        %v1510 = vpop.f32.mrb[0].mxu0
        %v1511 = vpop.f32.mrb[0].mxu0
        %v1512 = vpop.f32.mrb[0].mxu0
        %1513 = vdwg.mxu0
        %v1514 = vpack.c.bf16 %v1509, %v1509
        %s1515 = scalar_lea.vmem %s3, 64
        %v1516 = vld [vmem:[%s1515] sm:$0xff]
        %v1517 = vld [vmem:[%s1515 + $0x8] sm:$0xff]
        %v1518 = vld [vmem:[%s1515 + $0x10] sm:$0xff]
        %v1519 = vld [vmem:[%s1515 + $0x18] sm:$0xff]
        %v1520 = vld [vmem:[%s1515 + $0x20] sm:$0xff]
        %v1521 = vld [vmem:[%s1515 + $0x28] sm:$0xff]
        %v1522 = vld [vmem:[%s1515 + $0x30] sm:$0xff]
        %v1523 = vld [vmem:[%s1515 + $0x38] sm:$0xff]
        %v1532 = vunpack.c.l.b16 %v1516
        %v1533 = vunpack.c.h.b16 %v1516
        %v1534 = vunpack.c.l.b16 %v1517
        %v1535 = vunpack.c.h.b16 %v1517
        %v1536 = vunpack.c.l.b16 %v1518
        %v1537 = vunpack.c.h.b16 %v1518
        %v1538 = vunpack.c.l.b16 %v1519
        %v1539 = vunpack.c.h.b16 %v1519
        %v1540 = vunpack.c.l.b16 %v1520
        %v1541 = vunpack.c.h.b16 %v1520
        %v1542 = vunpack.c.l.b16 %v1521
        %v1543 = vunpack.c.h.b16 %v1521
        %v1544 = vunpack.c.l.b16 %v1522
        %v1545 = vunpack.c.h.b16 %v1522
        %v1546 = vunpack.c.l.b16 %v1523
        %v1547 = vunpack.c.h.b16 %v1523
        %v1548 = vpack.c.b16 %v1534, %v1532
        %v1549 = vpack.c.b16 %v1535, %v1533
        %v1550 = vpack.c.b16 %v1538, %v1536
        %v1551 = vpack.c.b16 %v1539, %v1537
        %v1552 = vpack.c.b16 %v1542, %v1540
        %v1553 = vpack.c.b16 %v1543, %v1541
        %v1554 = vpack.c.b16 %v1546, %v1544
        %v1555 = vpack.c.b16 %v1547, %v1545
        %v1565 = vsel %vm760, %v1514, 0
        %1567 = vmatprep.subr.bf16.mxu0 %v1549
        %1568 = vmatpush1.bf16.msra.mxu0 %v1548
        %1569 = vmatprep.subr.bf16.mxu0 %v1551
        %1570 = vmatpush1.bf16.msra.mxu0 %v1550
        %1571 = vmatprep.subr.bf16.mxu0 %v1553
        %1572 = vmatpush1.bf16.msra.mxu0 %v1552
        %1573 = vmatprep.subr.bf16.mxu0 %v1555
        %1574 = vmatpush1.bf16.msra.mxu0 %v1554
        %1575 = vmatprep.subr.bf16.mxu0 0
        %1576 = vmatpush1.bf16.msra.mxu0 0
        %1577 = vmatprep.subr.bf16.mxu0 0
        %1578 = vmatpush1.bf16.msra.mxu0 0
        %1579 = vmatprep.subr.bf16.mxu0 0
        %1580 = vmatpush1.bf16.msra.mxu0 0
        %1581 = vmatprep.subr.bf16.mxu0 0
        %1582 = vmatpush1.bf16.msra.mxu0 0
        %1583 = vmatprep.subr.bf16.mxu0 0
        %1584 = vmatpush1.bf16.msra.mxu0 0
        %1585 = vmatprep.subr.bf16.mxu0 0
        %1586 = vmatpush1.bf16.msra.mxu0 0
        %1587 = vmatprep.subr.bf16.mxu0 0
        %1588 = vmatpush1.bf16.msra.mxu0 0
        %1589 = vmatprep.subr.bf16.mxu0 0
        %1590 = vmatpush1.bf16.msra.mxu0 0
        %1591 = vmatprep.subr.bf16.mxu0 0
        %1592 = vmatpush1.bf16.msra.mxu0 0
        %1593 = vmatprep.subr.bf16.mxu0 0
        %1594 = vmatpush1.bf16.msra.mxu0 0
        %1595 = vmatprep.subr.bf16.mxu0 0
        %1596 = vmatpush1.bf16.msra.mxu0 0
        %1597 = vmatprep.subr.bf16.mxu0 0
        %1598 = vmatpush1.bf16.msra.mxu0 0
        %1599 = vmatprep.mubr.bf16.mxu0 0
        %1600 = vmatmul.mubr.bf16.gmra.mrb[0].mxu0 %v1565
        %v1601 = vpop.f32.mrb[0].mxu0
        %v1602 = vadd.f32 0.0, %v1601
        %v1603 = vpop.f32.mrb[0].mxu0
        %v1604 = vadd.f32 0.0, %v1603
        %v1605 = vpop.f32.mrb[0].mxu0
        %v1606 = vpop.f32.mrb[0].mxu0
        %1607 = vdwg.mxu0
        %v1616 = vunpack.c.l.b16 %v868
        %v1617 = vunpack.c.h.b16 %v868
        %v1618 = vunpack.c.l.b16 %v869
        %v1619 = vunpack.c.h.b16 %v869
        %v1620 = vunpack.c.l.b16 %v870
        %v1621 = vunpack.c.h.b16 %v870
        %v1622 = vunpack.c.l.b16 %v871
        %v1623 = vunpack.c.h.b16 %v871
        %v1624 = vunpack.c.l.b16 %v872
        %v1625 = vunpack.c.h.b16 %v872
        %v1626 = vunpack.c.l.b16 %v873
        %v1627 = vunpack.c.h.b16 %v873
        %v1628 = vunpack.c.l.b16 %v874
        %v1629 = vunpack.c.h.b16 %v874
        %v1630 = vunpack.c.l.b16 %v875
        %v1631 = vunpack.c.h.b16 %v875
        %v1632 = vpack.c.b16 %v1618, %v1616
        %v1633 = vpack.c.b16 %v1619, %v1617
        %v1634 = vpack.c.b16 %v1622, %v1620
        %v1635 = vpack.c.b16 %v1623, %v1621
        %v1636 = vpack.c.b16 %v1626, %v1624
        %v1637 = vpack.c.b16 %v1627, %v1625
        %v1638 = vpack.c.b16 %v1630, %v1628
        %v1639 = vpack.c.b16 %v1631, %v1629
        %v1649 = vsel %vm760, %v867, 0
        %1651 = vmatprep.subr.bf16.mxu0 %v1633
        %1652 = vmatpush1.bf16.msra.mxu0 %v1632
        %1653 = vmatprep.subr.bf16.mxu0 %v1635
        %1654 = vmatpush1.bf16.msra.mxu0 %v1634
        %1655 = vmatprep.subr.bf16.mxu0 %v1637
        %1656 = vmatpush1.bf16.msra.mxu0 %v1636
        %1657 = vmatprep.subr.bf16.mxu0 %v1639
        %1658 = vmatpush1.bf16.msra.mxu0 %v1638
        %1659 = vmatprep.subr.bf16.mxu0 0
        %1660 = vmatpush1.bf16.msra.mxu0 0
        %1661 = vmatprep.subr.bf16.mxu0 0
        %1662 = vmatpush1.bf16.msra.mxu0 0
        %1663 = vmatprep.subr.bf16.mxu0 0
        %1664 = vmatpush1.bf16.msra.mxu0 0
        %1665 = vmatprep.subr.bf16.mxu0 0
        %1666 = vmatpush1.bf16.msra.mxu0 0
        %1667 = vmatprep.subr.bf16.mxu0 0
        %1668 = vmatpush1.bf16.msra.mxu0 0
        %1669 = vmatprep.subr.bf16.mxu0 0
        %1670 = vmatpush1.bf16.msra.mxu0 0
        %1671 = vmatprep.subr.bf16.mxu0 0
        %1672 = vmatpush1.bf16.msra.mxu0 0
        %1673 = vmatprep.subr.bf16.mxu0 0
        %1674 = vmatpush1.bf16.msra.mxu0 0
        %1675 = vmatprep.subr.bf16.mxu0 0
        %1676 = vmatpush1.bf16.msra.mxu0 0
        %1677 = vmatprep.subr.bf16.mxu0 0
        %1678 = vmatpush1.bf16.msra.mxu0 0
        %1679 = vmatprep.subr.bf16.mxu0 0
        %1680 = vmatpush1.bf16.msra.mxu0 0
        %1681 = vmatprep.subr.bf16.mxu0 0
        %1682 = vmatpush1.bf16.msra.mxu0 0
        %1683 = vmatprep.mubr.bf16.mxu0 0
        %1684 = vmatmul.mubr.bf16.gmra.mrb[0].mxu0 %v1649
        %v1685 = vpop.f32.mrb[0].mxu0
        %v1686 = vadd.f32 %v1602, %v1685
        %v1687 = vpop.f32.mrb[0].mxu0
        %v1688 = vadd.f32 %v1604, %v1687
        %v1689 = vpop.f32.mrb[0].mxu0
        %v1690 = vpop.f32.mrb[0].mxu0
        %1691 = vdwg.mxu0
        %s1692 = scalar_lea.vmem %s1, 256
        %v1693 = vld [vmem:[%s1692] sm:$0xf]
        %v1694 = vld [vmem:[%s1692 + $0x4] sm:$0xf]
        %v1695 = vld [vmem:[%s1692 + $0x8] sm:$0xf]
        %v1696 = vld [vmem:[%s1692 + $0xc] sm:$0xf]
        %v1697 = vld [vmem:[%s1692 + $0x10] sm:$0xf]
        %v1698 = vld [vmem:[%s1692 + $0x14] sm:$0xf]
        %v1699 = vld [vmem:[%s1692 + $0x18] sm:$0xf]
        %v1700 = vld [vmem:[%s1692 + $0x1c] sm:$0xf]
        %v1701 = vld [vmem:[%s1692 + $0x20] sm:$0xf]
        %v1702 = vld [vmem:[%s1692 + $0x24] sm:$0xf]
        %v1703 = vld [vmem:[%s1692 + $0x28] sm:$0xf]
        %v1704 = vld [vmem:[%s1692 + $0x2c] sm:$0xf]
        %v1705 = vld [vmem:[%s1692 + $0x30] sm:$0xf]
        %v1706 = vld [vmem:[%s1692 + $0x34] sm:$0xf]
        %v1707 = vld [vmem:[%s1692 + $0x38] sm:$0xf]
        %v1708 = vld [vmem:[%s1692 + $0x3c] sm:$0xf]
        %v1709 = vld [vmem:[%s1692 + $0x40] sm:$0xf]
        %v1710 = vld [vmem:[%s1692 + $0x44] sm:$0xf]
        %v1711 = vld [vmem:[%s1692 + $0x48] sm:$0xf]
        %v1712 = vld [vmem:[%s1692 + $0x4c] sm:$0xf]
        %v1713 = vld [vmem:[%s1692 + $0x50] sm:$0xf]
        %v1714 = vld [vmem:[%s1692 + $0x54] sm:$0xf]
        %v1715 = vld [vmem:[%s1692 + $0x58] sm:$0xf]
        %v1716 = vld [vmem:[%s1692 + $0x5c] sm:$0xf]
        %v1717 = vld [vmem:[%s1692 + $0x60] sm:$0xf]
        %v1718 = vld [vmem:[%s1692 + $0x64] sm:$0xf]
        %v1719 = vld [vmem:[%s1692 + $0x68] sm:$0xf]
        %v1720 = vld [vmem:[%s1692 + $0x6c] sm:$0xf]
        %v1721 = vld [vmem:[%s1692 + $0x70] sm:$0xf]
        %v1722 = vld [vmem:[%s1692 + $0x74] sm:$0xf]
        %v1723 = vld [vmem:[%s1692 + $0x78] sm:$0xf]
        %v1724 = vld [vmem:[%s1692 + $0x7c] sm:$0xf]
        %s1725 = scalar_lea.vmem %s2, 2
        %v1726 = vld [vmem:[%s1725] sm:$0x1]
        %v1728 = vlaneseq
        %v1729 = vshrl.u32 %v1728, 7
        %v1730 = vsub.s32 0, %v1729
        %v1731 = vrot.slane %v1726, %v1730
        %v1765 = vunpack.c.l.b16 %v1693
        %v1766 = vunpack.c.l.b16 %v1694
        %v1767 = vunpack.c.l.b16 %v1695
        %v1768 = vunpack.c.l.b16 %v1696
        %v1769 = vunpack.c.l.b16 %v1697
        %v1770 = vunpack.c.l.b16 %v1698
        %v1771 = vunpack.c.l.b16 %v1699
        %v1772 = vunpack.c.l.b16 %v1700
        %v1773 = vunpack.c.l.b16 %v1701
        %v1774 = vunpack.c.l.b16 %v1702
        %v1775 = vunpack.c.l.b16 %v1703
        %v1776 = vunpack.c.l.b16 %v1704
        %v1777 = vunpack.c.l.b16 %v1705
        %v1778 = vunpack.c.l.b16 %v1706
        %v1779 = vunpack.c.l.b16 %v1707
        %v1780 = vunpack.c.l.b16 %v1708
        %v1781 = vunpack.c.l.b16 %v1709
        %v1782 = vunpack.c.l.b16 %v1710
        %v1783 = vunpack.c.l.b16 %v1711
        %v1784 = vunpack.c.l.b16 %v1712
        %v1785 = vunpack.c.l.b16 %v1713
        %v1786 = vunpack.c.l.b16 %v1714
        %v1787 = vunpack.c.l.b16 %v1715
        %v1788 = vunpack.c.l.b16 %v1716
        %v1789 = vunpack.c.l.b16 %v1717
        %v1790 = vunpack.c.l.b16 %v1718
        %v1791 = vunpack.c.l.b16 %v1719
        %v1792 = vunpack.c.l.b16 %v1720
        %v1793 = vunpack.c.l.b16 %v1721
        %v1794 = vunpack.c.l.b16 %v1722
        %v1795 = vunpack.c.l.b16 %v1723
        %v1796 = vunpack.c.l.b16 %v1724
        %v1797 = vpack.c.b16 %v1766, %v1765
        %v1798 = vpack.c.b16 %v1768, %v1767
        %v1799 = vpack.c.b16 %v1770, %v1769
        %v1800 = vpack.c.b16 %v1772, %v1771
        %v1801 = vpack.c.b16 %v1774, %v1773
        %v1802 = vpack.c.b16 %v1776, %v1775
        %v1803 = vpack.c.b16 %v1778, %v1777
        %v1804 = vpack.c.b16 %v1780, %v1779
        %v1805 = vpack.c.b16 %v1782, %v1781
        %v1806 = vpack.c.b16 %v1784, %v1783
        %v1807 = vpack.c.b16 %v1786, %v1785
        %v1808 = vpack.c.b16 %v1788, %v1787
        %v1809 = vpack.c.b16 %v1790, %v1789
        %v1810 = vpack.c.b16 %v1792, %v1791
        %v1811 = vpack.c.b16 %v1794, %v1793
        %v1812 = vpack.c.b16 %v1796, %v1795
        %1829 = vmatprep.subr.bf16.mxu0 0
        %1830 = vmatpush1.bf16.msra.mxu0 %v1797
        %1831 = vmatprep.subr.bf16.mxu0 0
        %1832 = vmatpush1.bf16.msra.mxu0 %v1798
        %1833 = vmatprep.subr.bf16.mxu0 0
        %1834 = vmatpush1.bf16.msra.mxu0 %v1799
        %1835 = vmatprep.subr.bf16.mxu0 0
        %1836 = vmatpush1.bf16.msra.mxu0 %v1800
        %1837 = vmatprep.subr.bf16.mxu0 0
        %1838 = vmatpush1.bf16.msra.mxu0 %v1801
        %1839 = vmatprep.subr.bf16.mxu0 0
        %1840 = vmatpush1.bf16.msra.mxu0 %v1802
        %1841 = vmatprep.subr.bf16.mxu0 0
        %1842 = vmatpush1.bf16.msra.mxu0 %v1803
        %1843 = vmatprep.subr.bf16.mxu0 0
        %1844 = vmatpush1.bf16.msra.mxu0 %v1804
        %1845 = vmatprep.subr.bf16.mxu0 0
        %1846 = vmatpush1.bf16.msra.mxu0 %v1805
        %1847 = vmatprep.subr.bf16.mxu0 0
        %1848 = vmatpush1.bf16.msra.mxu0 %v1806
        %1849 = vmatprep.subr.bf16.mxu0 0
        %1850 = vmatpush1.bf16.msra.mxu0 %v1807
        %1851 = vmatprep.subr.bf16.mxu0 0
        %1852 = vmatpush1.bf16.msra.mxu0 %v1808
        %1853 = vmatprep.subr.bf16.mxu0 0
        %1854 = vmatpush1.bf16.msra.mxu0 %v1809
        %1855 = vmatprep.subr.bf16.mxu0 0
        %1856 = vmatpush1.bf16.msra.mxu0 %v1810
        %1857 = vmatprep.subr.bf16.mxu0 0
        %1858 = vmatpush1.bf16.msra.mxu0 %v1811
        %1859 = vmatprep.subr.bf16.mxu0 0
        %1860 = vmatpush1.bf16.msra.mxu0 %v1812
        %1861 = vmatprep.mubr.bf16.mxu0 %v227
        %1862 = vmatmul.mubr.bf16.gmra.mrb[0].mxu0 %v226
        %v1863 = vpop.f32.mrb[0].mxu0
        %v1864 = vadd.f32 %v1731, %v1863
        %v1865 = vpop.f32.mrb[0].mxu0
        %v1866 = vpop.f32.mrb[0].mxu0
        %v1867 = vpop.f32.mrb[0].mxu0
        %1868 = vdwg.mxu0
        %s1869 = scalar_lea.vmem %s1, 768
        %v1870 = vld [vmem:[%s1869] sm:$0xf]
        %v1871 = vld [vmem:[%s1869 + $0x4] sm:$0xf]
        %v1872 = vld [vmem:[%s1869 + $0x8] sm:$0xf]
        %v1873 = vld [vmem:[%s1869 + $0xc] sm:$0xf]
        %v1874 = vld [vmem:[%s1869 + $0x10] sm:$0xf]
        %v1875 = vld [vmem:[%s1869 + $0x14] sm:$0xf]
        %v1876 = vld [vmem:[%s1869 + $0x18] sm:$0xf]
        %v1877 = vld [vmem:[%s1869 + $0x1c] sm:$0xf]
        %v1878 = vld [vmem:[%s1869 + $0x20] sm:$0xf]
        %v1879 = vld [vmem:[%s1869 + $0x24] sm:$0xf]
        %v1880 = vld [vmem:[%s1869 + $0x28] sm:$0xf]
        %v1881 = vld [vmem:[%s1869 + $0x2c] sm:$0xf]
        %v1882 = vld [vmem:[%s1869 + $0x30] sm:$0xf]
        %v1883 = vld [vmem:[%s1869 + $0x34] sm:$0xf]
        %v1884 = vld [vmem:[%s1869 + $0x38] sm:$0xf]
        %v1885 = vld [vmem:[%s1869 + $0x3c] sm:$0xf]
        %v1886 = vld [vmem:[%s1869 + $0x40] sm:$0xf]
        %v1887 = vld [vmem:[%s1869 + $0x44] sm:$0xf]
        %v1888 = vld [vmem:[%s1869 + $0x48] sm:$0xf]
        %v1889 = vld [vmem:[%s1869 + $0x4c] sm:$0xf]
        %v1890 = vld [vmem:[%s1869 + $0x50] sm:$0xf]
        %v1891 = vld [vmem:[%s1869 + $0x54] sm:$0xf]
        %v1892 = vld [vmem:[%s1869 + $0x58] sm:$0xf]
        %v1893 = vld [vmem:[%s1869 + $0x5c] sm:$0xf]
        %v1894 = vld [vmem:[%s1869 + $0x60] sm:$0xf]
        %v1895 = vld [vmem:[%s1869 + $0x64] sm:$0xf]
        %v1896 = vld [vmem:[%s1869 + $0x68] sm:$0xf]
        %v1897 = vld [vmem:[%s1869 + $0x6c] sm:$0xf]
        %v1898 = vld [vmem:[%s1869 + $0x70] sm:$0xf]
        %v1899 = vld [vmem:[%s1869 + $0x74] sm:$0xf]
        %v1900 = vld [vmem:[%s1869 + $0x78] sm:$0xf]
        %v1901 = vld [vmem:[%s1869 + $0x7c] sm:$0xf]
        %s1902 = scalar_lea.vmem %s2, 6
        %v1903 = vld [vmem:[%s1902] sm:$0x1]
        %v1905 = vlaneseq
        %v1906 = vshrl.u32 %v1905, 7
        %v1907 = vsub.s32 0, %v1906
        %v1908 = vrot.slane %v1903, %v1907
        %v1942 = vunpack.c.l.b16 %v1870
        %v1943 = vunpack.c.l.b16 %v1871
        %v1944 = vunpack.c.l.b16 %v1872
        %v1945 = vunpack.c.l.b16 %v1873
        %v1946 = vunpack.c.l.b16 %v1874
        %v1947 = vunpack.c.l.b16 %v1875
        %v1948 = vunpack.c.l.b16 %v1876
        %v1949 = vunpack.c.l.b16 %v1877
        %v1950 = vunpack.c.l.b16 %v1878
        %v1951 = vunpack.c.l.b16 %v1879
        %v1952 = vunpack.c.l.b16 %v1880
        %v1953 = vunpack.c.l.b16 %v1881
        %v1954 = vunpack.c.l.b16 %v1882
        %v1955 = vunpack.c.l.b16 %v1883
        %v1956 = vunpack.c.l.b16 %v1884
        %v1957 = vunpack.c.l.b16 %v1885
        %v1958 = vunpack.c.l.b16 %v1886
        %v1959 = vunpack.c.l.b16 %v1887
        %v1960 = vunpack.c.l.b16 %v1888
        %v1961 = vunpack.c.l.b16 %v1889
        %v1962 = vunpack.c.l.b16 %v1890
        %v1963 = vunpack.c.l.b16 %v1891
        %v1964 = vunpack.c.l.b16 %v1892
        %v1965 = vunpack.c.l.b16 %v1893
        %v1966 = vunpack.c.l.b16 %v1894
        %v1967 = vunpack.c.l.b16 %v1895
        %v1968 = vunpack.c.l.b16 %v1896
        %v1969 = vunpack.c.l.b16 %v1897
        %v1970 = vunpack.c.l.b16 %v1898
        %v1971 = vunpack.c.l.b16 %v1899
        %v1972 = vunpack.c.l.b16 %v1900
        %v1973 = vunpack.c.l.b16 %v1901
        %v1974 = vpack.c.b16 %v1943, %v1942
        %v1975 = vpack.c.b16 %v1945, %v1944
        %v1976 = vpack.c.b16 %v1947, %v1946
        %v1977 = vpack.c.b16 %v1949, %v1948
        %v1978 = vpack.c.b16 %v1951, %v1950
        %v1979 = vpack.c.b16 %v1953, %v1952
        %v1980 = vpack.c.b16 %v1955, %v1954
        %v1981 = vpack.c.b16 %v1957, %v1956
        %v1982 = vpack.c.b16 %v1959, %v1958
        %v1983 = vpack.c.b16 %v1961, %v1960
        %v1984 = vpack.c.b16 %v1963, %v1962
        %v1985 = vpack.c.b16 %v1965, %v1964
        %v1986 = vpack.c.b16 %v1967, %v1966
        %v1987 = vpack.c.b16 %v1969, %v1968
        %v1988 = vpack.c.b16 %v1971, %v1970
        %v1989 = vpack.c.b16 %v1973, %v1972
        %2006 = vmatprep.subr.bf16.mxu0 0
        %2007 = vmatpush1.bf16.msra.mxu0 %v1974
        %2008 = vmatprep.subr.bf16.mxu0 0
        %2009 = vmatpush1.bf16.msra.mxu0 %v1975
        %2010 = vmatprep.subr.bf16.mxu0 0
        %2011 = vmatpush1.bf16.msra.mxu0 %v1976
        %2012 = vmatprep.subr.bf16.mxu0 0
        %2013 = vmatpush1.bf16.msra.mxu0 %v1977
        %2014 = vmatprep.subr.bf16.mxu0 0
        %2015 = vmatpush1.bf16.msra.mxu0 %v1978
        %2016 = vmatprep.subr.bf16.mxu0 0
        %2017 = vmatpush1.bf16.msra.mxu0 %v1979
        %2018 = vmatprep.subr.bf16.mxu0 0
        %2019 = vmatpush1.bf16.msra.mxu0 %v1980
        %2020 = vmatprep.subr.bf16.mxu0 0
        %2021 = vmatpush1.bf16.msra.mxu0 %v1981
        %2022 = vmatprep.subr.bf16.mxu0 0
        %2023 = vmatpush1.bf16.msra.mxu0 %v1982
        %2024 = vmatprep.subr.bf16.mxu0 0
        %2025 = vmatpush1.bf16.msra.mxu0 %v1983
        %2026 = vmatprep.subr.bf16.mxu0 0
        %2027 = vmatpush1.bf16.msra.mxu0 %v1984
        %2028 = vmatprep.subr.bf16.mxu0 0
        %2029 = vmatpush1.bf16.msra.mxu0 %v1985
        %2030 = vmatprep.subr.bf16.mxu0 0
        %2031 = vmatpush1.bf16.msra.mxu0 %v1986
        %2032 = vmatprep.subr.bf16.mxu0 0
        %2033 = vmatpush1.bf16.msra.mxu0 %v1987
        %2034 = vmatprep.subr.bf16.mxu0 0
        %2035 = vmatpush1.bf16.msra.mxu0 %v1988
        %2036 = vmatprep.subr.bf16.mxu0 0
        %2037 = vmatpush1.bf16.msra.mxu0 %v1989
        %2038 = vmatprep.mubr.bf16.mxu0 %v227
        %2039 = vmatmul.mubr.bf16.gmra.mrb[0].mxu0 %v226
        %v2040 = vpop.f32.mrb[0].mxu0
        %v2041 = vadd.f32 %v1908, %v2040
        %v2042 = vpop.f32.mrb[0].mxu0
        %v2043 = vpop.f32.mrb[0].mxu0
        %v2044 = vpop.f32.mrb[0].mxu0
        %2045 = vdwg.mxu0
        %s2046 = scalar_lea.vmem %s1, 1280
        %v2047 = vld [vmem:[%s2046] sm:$0xf]
        %v2048 = vld [vmem:[%s2046 + $0x4] sm:$0xf]
        %v2049 = vld [vmem:[%s2046 + $0x8] sm:$0xf]
        %v2050 = vld [vmem:[%s2046 + $0xc] sm:$0xf]
        %v2051 = vld [vmem:[%s2046 + $0x10] sm:$0xf]
        %v2052 = vld [vmem:[%s2046 + $0x14] sm:$0xf]
        %v2053 = vld [vmem:[%s2046 + $0x18] sm:$0xf]
        %v2054 = vld [vmem:[%s2046 + $0x1c] sm:$0xf]
        %v2055 = vld [vmem:[%s2046 + $0x20] sm:$0xf]
        %v2056 = vld [vmem:[%s2046 + $0x24] sm:$0xf]
        %v2057 = vld [vmem:[%s2046 + $0x28] sm:$0xf]
        %v2058 = vld [vmem:[%s2046 + $0x2c] sm:$0xf]
        %v2059 = vld [vmem:[%s2046 + $0x30] sm:$0xf]
        %v2060 = vld [vmem:[%s2046 + $0x34] sm:$0xf]
        %v2061 = vld [vmem:[%s2046 + $0x38] sm:$0xf]
        %v2062 = vld [vmem:[%s2046 + $0x3c] sm:$0xf]
        %v2063 = vld [vmem:[%s2046 + $0x40] sm:$0xf]
        %v2064 = vld [vmem:[%s2046 + $0x44] sm:$0xf]
        %v2065 = vld [vmem:[%s2046 + $0x48] sm:$0xf]
        %v2066 = vld [vmem:[%s2046 + $0x4c] sm:$0xf]
        %v2067 = vld [vmem:[%s2046 + $0x50] sm:$0xf]
        %v2068 = vld [vmem:[%s2046 + $0x54] sm:$0xf]
        %v2069 = vld [vmem:[%s2046 + $0x58] sm:$0xf]
        %v2070 = vld [vmem:[%s2046 + $0x5c] sm:$0xf]
        %v2071 = vld [vmem:[%s2046 + $0x60] sm:$0xf]
        %v2072 = vld [vmem:[%s2046 + $0x64] sm:$0xf]
        %v2073 = vld [vmem:[%s2046 + $0x68] sm:$0xf]
        %v2074 = vld [vmem:[%s2046 + $0x6c] sm:$0xf]
        %v2075 = vld [vmem:[%s2046 + $0x70] sm:$0xf]
        %v2076 = vld [vmem:[%s2046 + $0x74] sm:$0xf]
        %v2077 = vld [vmem:[%s2046 + $0x78] sm:$0xf]
        %v2078 = vld [vmem:[%s2046 + $0x7c] sm:$0xf]
        %s2079 = scalar_lea.vmem %s2, 10
        %v2080 = vld [vmem:[%s2079] sm:$0x1]
        %v2082 = vlaneseq
        %v2083 = vshrl.u32 %v2082, 7
        %v2084 = vsub.s32 0, %v2083
        %v2085 = vrot.slane %v2080, %v2084
        %v2119 = vunpack.c.l.b16 %v2047
        %v2120 = vunpack.c.l.b16 %v2048
        %v2121 = vunpack.c.l.b16 %v2049
        %v2122 = vunpack.c.l.b16 %v2050
        %v2123 = vunpack.c.l.b16 %v2051
        %v2124 = vunpack.c.l.b16 %v2052
        %v2125 = vunpack.c.l.b16 %v2053
        %v2126 = vunpack.c.l.b16 %v2054
        %v2127 = vunpack.c.l.b16 %v2055
        %v2128 = vunpack.c.l.b16 %v2056
        %v2129 = vunpack.c.l.b16 %v2057
        %v2130 = vunpack.c.l.b16 %v2058
        %v2131 = vunpack.c.l.b16 %v2059
        %v2132 = vunpack.c.l.b16 %v2060
        %v2133 = vunpack.c.l.b16 %v2061
        %v2134 = vunpack.c.l.b16 %v2062
        %v2135 = vunpack.c.l.b16 %v2063
        %v2136 = vunpack.c.l.b16 %v2064
        %v2137 = vunpack.c.l.b16 %v2065
        %v2138 = vunpack.c.l.b16 %v2066
        %v2139 = vunpack.c.l.b16 %v2067
        %v2140 = vunpack.c.l.b16 %v2068
        %v2141 = vunpack.c.l.b16 %v2069
        %v2142 = vunpack.c.l.b16 %v2070
        %v2143 = vunpack.c.l.b16 %v2071
        %v2144 = vunpack.c.l.b16 %v2072
        %v2145 = vunpack.c.l.b16 %v2073
        %v2146 = vunpack.c.l.b16 %v2074
        %v2147 = vunpack.c.l.b16 %v2075
        %v2148 = vunpack.c.l.b16 %v2076
        %v2149 = vunpack.c.l.b16 %v2077
        %v2150 = vunpack.c.l.b16 %v2078
        %v2151 = vpack.c.b16 %v2120, %v2119
        %v2152 = vpack.c.b16 %v2122, %v2121
        %v2153 = vpack.c.b16 %v2124, %v2123
        %v2154 = vpack.c.b16 %v2126, %v2125
        %v2155 = vpack.c.b16 %v2128, %v2127
        %v2156 = vpack.c.b16 %v2130, %v2129
        %v2157 = vpack.c.b16 %v2132, %v2131
        %v2158 = vpack.c.b16 %v2134, %v2133
        %v2159 = vpack.c.b16 %v2136, %v2135
        %v2160 = vpack.c.b16 %v2138, %v2137
        %v2161 = vpack.c.b16 %v2140, %v2139
        %v2162 = vpack.c.b16 %v2142, %v2141
        %v2163 = vpack.c.b16 %v2144, %v2143
        %v2164 = vpack.c.b16 %v2146, %v2145
        %v2165 = vpack.c.b16 %v2148, %v2147
        %v2166 = vpack.c.b16 %v2150, %v2149
        %2183 = vmatprep.subr.bf16.mxu0 0
        %2184 = vmatpush1.bf16.msra.mxu0 %v2151
        %2185 = vmatprep.subr.bf16.mxu0 0
        %2186 = vmatpush1.bf16.msra.mxu0 %v2152
        %2187 = vmatprep.subr.bf16.mxu0 0
        %2188 = vmatpush1.bf16.msra.mxu0 %v2153
        %2189 = vmatprep.subr.bf16.mxu0 0
        %2190 = vmatpush1.bf16.msra.mxu0 %v2154
        %2191 = vmatprep.subr.bf16.mxu0 0
        %2192 = vmatpush1.bf16.msra.mxu0 %v2155
        %2193 = vmatprep.subr.bf16.mxu0 0
        %2194 = vmatpush1.bf16.msra.mxu0 %v2156
        %2195 = vmatprep.subr.bf16.mxu0 0
        %2196 = vmatpush1.bf16.msra.mxu0 %v2157
        %2197 = vmatprep.subr.bf16.mxu0 0
        %2198 = vmatpush1.bf16.msra.mxu0 %v2158
        %2199 = vmatprep.subr.bf16.mxu0 0
        %2200 = vmatpush1.bf16.msra.mxu0 %v2159
        %2201 = vmatprep.subr.bf16.mxu0 0
        %2202 = vmatpush1.bf16.msra.mxu0 %v2160
        %2203 = vmatprep.subr.bf16.mxu0 0
        %2204 = vmatpush1.bf16.msra.mxu0 %v2161
        %2205 = vmatprep.subr.bf16.mxu0 0
        %2206 = vmatpush1.bf16.msra.mxu0 %v2162
        %2207 = vmatprep.subr.bf16.mxu0 0
        %2208 = vmatpush1.bf16.msra.mxu0 %v2163
        %2209 = vmatprep.subr.bf16.mxu0 0
        %2210 = vmatpush1.bf16.msra.mxu0 %v2164
        %2211 = vmatprep.subr.bf16.mxu0 0
        %2212 = vmatpush1.bf16.msra.mxu0 %v2165
        %2213 = vmatprep.subr.bf16.mxu0 0
        %2214 = vmatpush1.bf16.msra.mxu0 %v2166
        %2215 = vmatprep.mubr.bf16.mxu0 %v227
        %2216 = vmatmul.mubr.bf16.gmra.mrb[0].mxu0 %v226
        %v2217 = vpop.f32.mrb[0].mxu0
        %v2218 = vadd.f32 %v2085, %v2217
        %v2219 = vpop.f32.mrb[0].mxu0
        %v2220 = vpop.f32.mrb[0].mxu0
        %v2221 = vpop.f32.mrb[0].mxu0
        %2222 = vdwg.mxu0
        %v2223 = vpack.c.bf16 %v1864, %v1864
        %v2224 = vpack.c.bf16 %v2041, %v2041
        %v2225 = vpack.c.bf16 %v2218, %v2218
        %v2227 = vsel %vm760, %v2223, 0
        %v2230 = vsel %vm760, %v2224, 0
        %2232 = vmatprep.subr.bf16.mxu0 0
        %2233 = vmatpush1.bf16.xpose.msra.mxu0 %v2230
        %2234 = vmatprep.subr.bf16.mxu0 0
        %2235 = vmatpush1.bf16.xpose.msra.mxu0 0
        %2236 = vmatprep.subr.bf16.mxu0 0
        %2237 = vmatpush1.bf16.xpose.msra.mxu0 0
        %2238 = vmatprep.subr.bf16.mxu0 0
        %2239 = vmatpush1.bf16.xpose.msra.mxu0 0
        %2240 = vmatprep.subr.bf16.mxu0 0
        %2241 = vmatpush1.bf16.xpose.msra.mxu0 0
        %2242 = vmatprep.subr.bf16.mxu0 0
        %2243 = vmatpush1.bf16.xpose.msra.mxu0 0
        %2244 = vmatprep.subr.bf16.mxu0 0
        %2245 = vmatpush1.bf16.xpose.msra.mxu0 0
        %2246 = vmatprep.subr.bf16.mxu0 0
        %2247 = vmatpush1.bf16.xpose.msra.mxu0 0
        %2248 = vmatprep.subr.bf16.mxu0 0
        %2249 = vmatpush1.bf16.xpose.msra.mxu0 0
        %2250 = vmatprep.subr.bf16.mxu0 0
        %2251 = vmatpush1.bf16.xpose.msra.mxu0 0
        %2252 = vmatprep.subr.bf16.mxu0 0
        %2253 = vmatpush1.bf16.xpose.msra.mxu0 0
        %2254 = vmatprep.subr.bf16.mxu0 0
        %2255 = vmatpush1.bf16.xpose.msra.mxu0 0
        %2256 = vmatprep.subr.bf16.mxu0 0
        %2257 = vmatpush1.bf16.xpose.msra.mxu0 0
        %2258 = vmatprep.subr.bf16.mxu0 0
        %2259 = vmatpush1.bf16.xpose.msra.mxu0 0
        %2260 = vmatprep.subr.bf16.mxu0 0
        %2261 = vmatpush1.bf16.xpose.msra.mxu0 0
        %2262 = vmatprep.subr.bf16.mxu0 0
        %2263 = vmatpush1.bf16.xpose.msra.mxu0 0
        %2264 = vmatprep.mubr.bf16.mxu0 0
        %2265 = vmatmul.mubr.bf16.gmra.mrb[0].mxu0 %v2227
        %v2266 = vpop.f32.mrb[0].mxu0
        %v2267 = vadd.f32 0.0, %v2266
        %v2268 = vpop.f32.mrb[0].mxu0
        %v2269 = vpop.f32.mrb[0].mxu0
        %v2270 = vpop.f32.mrb[0].mxu0
        %2271 = vdwg.mxu0
        %v2272 = vsel %vm807, %v2267, -inf
        %2273 = vmax.xlane.f32.xlu0 %v2272
        %v2274 = vpop.xlane.xlu0 %2273
        %v2275 = vsub.f32 %v2267, %v2274
        %v2276 = vmul.f32 %v2275, 1.442695
        %v2277 = vpow.pop %v2276
        %v2278 = vsel %vm807, %v2277, 0.0
        %2279 = vadd.xlane.f32.xlu0 %v2278
        %v2280 = vpop.xlane.xlu0 %2279
        %v2281 = vrcp.pop %v2280
        %v2282 = vmul.f32 %v2277, %v2281
        %v2283 = vpack.c.bf16 %v2282, %v2282
        %v2285 = vsel %vm807, %v2283, 0
        %v2288 = vsel %vm823, %v2225, 0
        %2290 = vmatprep.subr.bf16.mxu0 0
        %2291 = vmatpush1.bf16.msra.mxu0 %v2288
        %2292 = vmatprep.subr.bf16.mxu0 0
        %2293 = vmatpush1.bf16.msra.mxu0 0
        %2294 = vmatprep.subr.bf16.mxu0 0
        %2295 = vmatpush1.bf16.msra.mxu0 0
        %2296 = vmatprep.subr.bf16.mxu0 0
        %2297 = vmatpush1.bf16.msra.mxu0 0
        %2298 = vmatprep.subr.bf16.mxu0 0
        %2299 = vmatpush1.bf16.msra.mxu0 0
        %2300 = vmatprep.subr.bf16.mxu0 0
        %2301 = vmatpush1.bf16.msra.mxu0 0
        %2302 = vmatprep.subr.bf16.mxu0 0
        %2303 = vmatpush1.bf16.msra.mxu0 0
        %2304 = vmatprep.subr.bf16.mxu0 0
        %2305 = vmatpush1.bf16.msra.mxu0 0
        %2306 = vmatprep.subr.bf16.mxu0 0
        %2307 = vmatpush1.bf16.msra.mxu0 0
        %2308 = vmatprep.subr.bf16.mxu0 0
        %2309 = vmatpush1.bf16.msra.mxu0 0
        %2310 = vmatprep.subr.bf16.mxu0 0
        %2311 = vmatpush1.bf16.msra.mxu0 0
        %2312 = vmatprep.subr.bf16.mxu0 0
        %2313 = vmatpush1.bf16.msra.mxu0 0
        %2314 = vmatprep.subr.bf16.mxu0 0
        %2315 = vmatpush1.bf16.msra.mxu0 0
        %2316 = vmatprep.subr.bf16.mxu0 0
        %2317 = vmatpush1.bf16.msra.mxu0 0
        %2318 = vmatprep.subr.bf16.mxu0 0
        %2319 = vmatpush1.bf16.msra.mxu0 0
        %2320 = vmatprep.subr.bf16.mxu0 0
        %2321 = vmatpush1.bf16.msra.mxu0 0
        %2322 = vmatprep.mubr.bf16.mxu0 0
        %2323 = vmatmul.mubr.bf16.gmra.mrb[0].mxu0 %v2285
        %v2324 = vpop.f32.mrb[0].mxu0
        %v2325 = vadd.f32 0.0, %v2324
        %v2326 = vpop.f32.mrb[0].mxu0
        %v2327 = vpop.f32.mrb[0].mxu0
        %v2328 = vpop.f32.mrb[0].mxu0
        %2329 = vdwg.mxu0
        %v2330 = vpack.c.bf16 %v2325, %v2325
        %s2331 = scalar_lea.vmem %s3, 128
        %v2332 = vld [vmem:[%s2331] sm:$0xff]
        %v2333 = vld [vmem:[%s2331 + $0x8] sm:$0xff]
        %v2334 = vld [vmem:[%s2331 + $0x10] sm:$0xff]
        %v2335 = vld [vmem:[%s2331 + $0x18] sm:$0xff]
        %v2336 = vld [vmem:[%s2331 + $0x20] sm:$0xff]
        %v2337 = vld [vmem:[%s2331 + $0x28] sm:$0xff]
        %v2338 = vld [vmem:[%s2331 + $0x30] sm:$0xff]
        %v2339 = vld [vmem:[%s2331 + $0x38] sm:$0xff]
        %v2348 = vunpack.c.l.b16 %v2332
        %v2349 = vunpack.c.h.b16 %v2332
        %v2350 = vunpack.c.l.b16 %v2333
        %v2351 = vunpack.c.h.b16 %v2333
        %v2352 = vunpack.c.l.b16 %v2334
        %v2353 = vunpack.c.h.b16 %v2334
        %v2354 = vunpack.c.l.b16 %v2335
        %v2355 = vunpack.c.h.b16 %v2335
        %v2356 = vunpack.c.l.b16 %v2336
        %v2357 = vunpack.c.h.b16 %v2336
        %v2358 = vunpack.c.l.b16 %v2337
        %v2359 = vunpack.c.h.b16 %v2337
        %v2360 = vunpack.c.l.b16 %v2338
        %v2361 = vunpack.c.h.b16 %v2338
        %v2362 = vunpack.c.l.b16 %v2339
        %v2363 = vunpack.c.h.b16 %v2339
        %v2364 = vpack.c.b16 %v2350, %v2348
        %v2365 = vpack.c.b16 %v2351, %v2349
        %v2366 = vpack.c.b16 %v2354, %v2352
        %v2367 = vpack.c.b16 %v2355, %v2353
        %v2368 = vpack.c.b16 %v2358, %v2356
        %v2369 = vpack.c.b16 %v2359, %v2357
        %v2370 = vpack.c.b16 %v2362, %v2360
        %v2371 = vpack.c.b16 %v2363, %v2361
        %v2381 = vsel %vm760, %v2330, 0
        %2383 = vmatprep.subr.bf16.mxu0 %v2365
        %2384 = vmatpush1.bf16.msra.mxu0 %v2364
        %2385 = vmatprep.subr.bf16.mxu0 %v2367
        %2386 = vmatpush1.bf16.msra.mxu0 %v2366
        %2387 = vmatprep.subr.bf16.mxu0 %v2369
        %2388 = vmatpush1.bf16.msra.mxu0 %v2368
        %2389 = vmatprep.subr.bf16.mxu0 %v2371
        %2390 = vmatpush1.bf16.msra.mxu0 %v2370
        %2391 = vmatprep.subr.bf16.mxu0 0
        %2392 = vmatpush1.bf16.msra.mxu0 0
        %2393 = vmatprep.subr.bf16.mxu0 0
        %2394 = vmatpush1.bf16.msra.mxu0 0
        %2395 = vmatprep.subr.bf16.mxu0 0
        %2396 = vmatpush1.bf16.msra.mxu0 0
        %2397 = vmatprep.subr.bf16.mxu0 0
        %2398 = vmatpush1.bf16.msra.mxu0 0
        %2399 = vmatprep.subr.bf16.mxu0 0
        %2400 = vmatpush1.bf16.msra.mxu0 0
        %2401 = vmatprep.subr.bf16.mxu0 0
        %2402 = vmatpush1.bf16.msra.mxu0 0
        %2403 = vmatprep.subr.bf16.mxu0 0
        %2404 = vmatpush1.bf16.msra.mxu0 0
        %2405 = vmatprep.subr.bf16.mxu0 0
        %2406 = vmatpush1.bf16.msra.mxu0 0
        %2407 = vmatprep.subr.bf16.mxu0 0
        %2408 = vmatpush1.bf16.msra.mxu0 0
        %2409 = vmatprep.subr.bf16.mxu0 0
        %2410 = vmatpush1.bf16.msra.mxu0 0
        %2411 = vmatprep.subr.bf16.mxu0 0
        %2412 = vmatpush1.bf16.msra.mxu0 0
        %2413 = vmatprep.subr.bf16.mxu0 0
        %2414 = vmatpush1.bf16.msra.mxu0 0
        %2415 = vmatprep.mubr.bf16.mxu0 0
        %2416 = vmatmul.mubr.bf16.gmra.mrb[0].mxu0 %v2381
        %v2417 = vpop.f32.mrb[0].mxu0
        %v2418 = vadd.f32 0.0, %v2417
        %v2419 = vpop.f32.mrb[0].mxu0
        %v2420 = vadd.f32 0.0, %v2419
        %v2421 = vpop.f32.mrb[0].mxu0
        %v2422 = vpop.f32.mrb[0].mxu0
        %2423 = vdwg.mxu0
        %v2424 = vadd.f32 %v1686, %v2418
        %v2425 = vadd.f32 %v1688, %v2420
        %s2426 = scalar_lea.vmem %s1, 384
        %v2427 = vld [vmem:[%s2426] sm:$0xf]
        %v2428 = vld [vmem:[%s2426 + $0x4] sm:$0xf]
        %v2429 = vld [vmem:[%s2426 + $0x8] sm:$0xf]
        %v2430 = vld [vmem:[%s2426 + $0xc] sm:$0xf]
        %v2431 = vld [vmem:[%s2426 + $0x10] sm:$0xf]
        %v2432 = vld [vmem:[%s2426 + $0x14] sm:$0xf]
        %v2433 = vld [vmem:[%s2426 + $0x18] sm:$0xf]
        %v2434 = vld [vmem:[%s2426 + $0x1c] sm:$0xf]
        %v2435 = vld [vmem:[%s2426 + $0x20] sm:$0xf]
        %v2436 = vld [vmem:[%s2426 + $0x24] sm:$0xf]
        %v2437 = vld [vmem:[%s2426 + $0x28] sm:$0xf]
        %v2438 = vld [vmem:[%s2426 + $0x2c] sm:$0xf]
        %v2439 = vld [vmem:[%s2426 + $0x30] sm:$0xf]
        %v2440 = vld [vmem:[%s2426 + $0x34] sm:$0xf]
        %v2441 = vld [vmem:[%s2426 + $0x38] sm:$0xf]
        %v2442 = vld [vmem:[%s2426 + $0x3c] sm:$0xf]
        %v2443 = vld [vmem:[%s2426 + $0x40] sm:$0xf]
        %v2444 = vld [vmem:[%s2426 + $0x44] sm:$0xf]
        %v2445 = vld [vmem:[%s2426 + $0x48] sm:$0xf]
        %v2446 = vld [vmem:[%s2426 + $0x4c] sm:$0xf]
        %v2447 = vld [vmem:[%s2426 + $0x50] sm:$0xf]
        %v2448 = vld [vmem:[%s2426 + $0x54] sm:$0xf]
        %v2449 = vld [vmem:[%s2426 + $0x58] sm:$0xf]
        %v2450 = vld [vmem:[%s2426 + $0x5c] sm:$0xf]
        %v2451 = vld [vmem:[%s2426 + $0x60] sm:$0xf]
        %v2452 = vld [vmem:[%s2426 + $0x64] sm:$0xf]
        %v2453 = vld [vmem:[%s2426 + $0x68] sm:$0xf]
        %v2454 = vld [vmem:[%s2426 + $0x6c] sm:$0xf]
        %v2455 = vld [vmem:[%s2426 + $0x70] sm:$0xf]
        %v2456 = vld [vmem:[%s2426 + $0x74] sm:$0xf]
        %v2457 = vld [vmem:[%s2426 + $0x78] sm:$0xf]
        %v2458 = vld [vmem:[%s2426 + $0x7c] sm:$0xf]
        %s2459 = scalar_lea.vmem %s2, 3
        %v2460 = vld [vmem:[%s2459] sm:$0x1]
        %v2462 = vlaneseq
        %v2463 = vshrl.u32 %v2462, 7
        %v2464 = vsub.s32 0, %v2463
        %v2465 = vrot.slane %v2460, %v2464
        %v2499 = vunpack.c.l.b16 %v2427
        %v2500 = vunpack.c.l.b16 %v2428
        %v2501 = vunpack.c.l.b16 %v2429
        %v2502 = vunpack.c.l.b16 %v2430
        %v2503 = vunpack.c.l.b16 %v2431
        %v2504 = vunpack.c.l.b16 %v2432
        %v2505 = vunpack.c.l.b16 %v2433
        %v2506 = vunpack.c.l.b16 %v2434
        %v2507 = vunpack.c.l.b16 %v2435
        %v2508 = vunpack.c.l.b16 %v2436
        %v2509 = vunpack.c.l.b16 %v2437
        %v2510 = vunpack.c.l.b16 %v2438
        %v2511 = vunpack.c.l.b16 %v2439
        %v2512 = vunpack.c.l.b16 %v2440
        %v2513 = vunpack.c.l.b16 %v2441
        %v2514 = vunpack.c.l.b16 %v2442
        %v2515 = vunpack.c.l.b16 %v2443
        %v2516 = vunpack.c.l.b16 %v2444
        %v2517 = vunpack.c.l.b16 %v2445
        %v2518 = vunpack.c.l.b16 %v2446
        %v2519 = vunpack.c.l.b16 %v2447
        %v2520 = vunpack.c.l.b16 %v2448
        %v2521 = vunpack.c.l.b16 %v2449
        %v2522 = vunpack.c.l.b16 %v2450
        %v2523 = vunpack.c.l.b16 %v2451
        %v2524 = vunpack.c.l.b16 %v2452
        %v2525 = vunpack.c.l.b16 %v2453
        %v2526 = vunpack.c.l.b16 %v2454
        %v2527 = vunpack.c.l.b16 %v2455
        %v2528 = vunpack.c.l.b16 %v2456
        %v2529 = vunpack.c.l.b16 %v2457
        %v2530 = vunpack.c.l.b16 %v2458
        %v2531 = vpack.c.b16 %v2500, %v2499
        %v2532 = vpack.c.b16 %v2502, %v2501
        %v2533 = vpack.c.b16 %v2504, %v2503
        %v2534 = vpack.c.b16 %v2506, %v2505
        %v2535 = vpack.c.b16 %v2508, %v2507
        %v2536 = vpack.c.b16 %v2510, %v2509
        %v2537 = vpack.c.b16 %v2512, %v2511
        %v2538 = vpack.c.b16 %v2514, %v2513
        %v2539 = vpack.c.b16 %v2516, %v2515
        %v2540 = vpack.c.b16 %v2518, %v2517
        %v2541 = vpack.c.b16 %v2520, %v2519
        %v2542 = vpack.c.b16 %v2522, %v2521
        %v2543 = vpack.c.b16 %v2524, %v2523
        %v2544 = vpack.c.b16 %v2526, %v2525
        %v2545 = vpack.c.b16 %v2528, %v2527
        %v2546 = vpack.c.b16 %v2530, %v2529
        %2563 = vmatprep.subr.bf16.mxu0 0
        %2564 = vmatpush1.bf16.msra.mxu0 %v2531
        %2565 = vmatprep.subr.bf16.mxu0 0
        %2566 = vmatpush1.bf16.msra.mxu0 %v2532
        %2567 = vmatprep.subr.bf16.mxu0 0
        %2568 = vmatpush1.bf16.msra.mxu0 %v2533
        %2569 = vmatprep.subr.bf16.mxu0 0
        %2570 = vmatpush1.bf16.msra.mxu0 %v2534
        %2571 = vmatprep.subr.bf16.mxu0 0
        %2572 = vmatpush1.bf16.msra.mxu0 %v2535
        %2573 = vmatprep.subr.bf16.mxu0 0
        %2574 = vmatpush1.bf16.msra.mxu0 %v2536
        %2575 = vmatprep.subr.bf16.mxu0 0
        %2576 = vmatpush1.bf16.msra.mxu0 %v2537
        %2577 = vmatprep.subr.bf16.mxu0 0
        %2578 = vmatpush1.bf16.msra.mxu0 %v2538
        %2579 = vmatprep.subr.bf16.mxu0 0
        %2580 = vmatpush1.bf16.msra.mxu0 %v2539
        %2581 = vmatprep.subr.bf16.mxu0 0
        %2582 = vmatpush1.bf16.msra.mxu0 %v2540
        %2583 = vmatprep.subr.bf16.mxu0 0
        %2584 = vmatpush1.bf16.msra.mxu0 %v2541
        %2585 = vmatprep.subr.bf16.mxu0 0
        %2586 = vmatpush1.bf16.msra.mxu0 %v2542
        %2587 = vmatprep.subr.bf16.mxu0 0
        %2588 = vmatpush1.bf16.msra.mxu0 %v2543
        %2589 = vmatprep.subr.bf16.mxu0 0
        %2590 = vmatpush1.bf16.msra.mxu0 %v2544
        %2591 = vmatprep.subr.bf16.mxu0 0
        %2592 = vmatpush1.bf16.msra.mxu0 %v2545
        %2593 = vmatprep.subr.bf16.mxu0 0
        %2594 = vmatpush1.bf16.msra.mxu0 %v2546
        %2595 = vmatprep.mubr.bf16.mxu0 %v227
        %2596 = vmatmul.mubr.bf16.gmra.mrb[0].mxu0 %v226
        %v2597 = vpop.f32.mrb[0].mxu0
        %v2598 = vadd.f32 %v2465, %v2597
        %v2599 = vpop.f32.mrb[0].mxu0
        %v2600 = vpop.f32.mrb[0].mxu0
        %v2601 = vpop.f32.mrb[0].mxu0
        %2602 = vdwg.mxu0
        %s2603 = scalar_lea.vmem %s1, 896
        %v2604 = vld [vmem:[%s2603] sm:$0xf]
        %v2605 = vld [vmem:[%s2603 + $0x4] sm:$0xf]
        %v2606 = vld [vmem:[%s2603 + $0x8] sm:$0xf]
        %v2607 = vld [vmem:[%s2603 + $0xc] sm:$0xf]
        %v2608 = vld [vmem:[%s2603 + $0x10] sm:$0xf]
        %v2609 = vld [vmem:[%s2603 + $0x14] sm:$0xf]
        %v2610 = vld [vmem:[%s2603 + $0x18] sm:$0xf]
        %v2611 = vld [vmem:[%s2603 + $0x1c] sm:$0xf]
        %v2612 = vld [vmem:[%s2603 + $0x20] sm:$0xf]
        %v2613 = vld [vmem:[%s2603 + $0x24] sm:$0xf]
        %v2614 = vld [vmem:[%s2603 + $0x28] sm:$0xf]
        %v2615 = vld [vmem:[%s2603 + $0x2c] sm:$0xf]
        %v2616 = vld [vmem:[%s2603 + $0x30] sm:$0xf]
        %v2617 = vld [vmem:[%s2603 + $0x34] sm:$0xf]
        %v2618 = vld [vmem:[%s2603 + $0x38] sm:$0xf]
        %v2619 = vld [vmem:[%s2603 + $0x3c] sm:$0xf]
        %v2620 = vld [vmem:[%s2603 + $0x40] sm:$0xf]
        %v2621 = vld [vmem:[%s2603 + $0x44] sm:$0xf]
        %v2622 = vld [vmem:[%s2603 + $0x48] sm:$0xf]
        %v2623 = vld [vmem:[%s2603 + $0x4c] sm:$0xf]
        %v2624 = vld [vmem:[%s2603 + $0x50] sm:$0xf]
        %v2625 = vld [vmem:[%s2603 + $0x54] sm:$0xf]
        %v2626 = vld [vmem:[%s2603 + $0x58] sm:$0xf]
        %v2627 = vld [vmem:[%s2603 + $0x5c] sm:$0xf]
        %v2628 = vld [vmem:[%s2603 + $0x60] sm:$0xf]
        %v2629 = vld [vmem:[%s2603 + $0x64] sm:$0xf]
        %v2630 = vld [vmem:[%s2603 + $0x68] sm:$0xf]
        %v2631 = vld [vmem:[%s2603 + $0x6c] sm:$0xf]
        %v2632 = vld [vmem:[%s2603 + $0x70] sm:$0xf]
        %v2633 = vld [vmem:[%s2603 + $0x74] sm:$0xf]
        %v2634 = vld [vmem:[%s2603 + $0x78] sm:$0xf]
        %v2635 = vld [vmem:[%s2603 + $0x7c] sm:$0xf]
        %s2636 = scalar_lea.vmem %s2, 7
        %v2637 = vld [vmem:[%s2636] sm:$0x1]
        %v2639 = vlaneseq
        %v2640 = vshrl.u32 %v2639, 7
        %v2641 = vsub.s32 0, %v2640
        %v2642 = vrot.slane %v2637, %v2641
        %v2676 = vunpack.c.l.b16 %v2604
        %v2677 = vunpack.c.l.b16 %v2605
        %v2678 = vunpack.c.l.b16 %v2606
        %v2679 = vunpack.c.l.b16 %v2607
        %v2680 = vunpack.c.l.b16 %v2608
        %v2681 = vunpack.c.l.b16 %v2609
        %v2682 = vunpack.c.l.b16 %v2610
        %v2683 = vunpack.c.l.b16 %v2611
        %v2684 = vunpack.c.l.b16 %v2612
        %v2685 = vunpack.c.l.b16 %v2613
        %v2686 = vunpack.c.l.b16 %v2614
        %v2687 = vunpack.c.l.b16 %v2615
        %v2688 = vunpack.c.l.b16 %v2616
        %v2689 = vunpack.c.l.b16 %v2617
        %v2690 = vunpack.c.l.b16 %v2618
        %v2691 = vunpack.c.l.b16 %v2619
        %v2692 = vunpack.c.l.b16 %v2620
        %v2693 = vunpack.c.l.b16 %v2621
        %v2694 = vunpack.c.l.b16 %v2622
        %v2695 = vunpack.c.l.b16 %v2623
        %v2696 = vunpack.c.l.b16 %v2624
        %v2697 = vunpack.c.l.b16 %v2625
        %v2698 = vunpack.c.l.b16 %v2626
        %v2699 = vunpack.c.l.b16 %v2627
        %v2700 = vunpack.c.l.b16 %v2628
        %v2701 = vunpack.c.l.b16 %v2629
        %v2702 = vunpack.c.l.b16 %v2630
        %v2703 = vunpack.c.l.b16 %v2631
        %v2704 = vunpack.c.l.b16 %v2632
        %v2705 = vunpack.c.l.b16 %v2633
        %v2706 = vunpack.c.l.b16 %v2634
        %v2707 = vunpack.c.l.b16 %v2635
        %v2708 = vpack.c.b16 %v2677, %v2676
        %v2709 = vpack.c.b16 %v2679, %v2678
        %v2710 = vpack.c.b16 %v2681, %v2680
        %v2711 = vpack.c.b16 %v2683, %v2682
        %v2712 = vpack.c.b16 %v2685, %v2684
        %v2713 = vpack.c.b16 %v2687, %v2686
        %v2714 = vpack.c.b16 %v2689, %v2688
        %v2715 = vpack.c.b16 %v2691, %v2690
        %v2716 = vpack.c.b16 %v2693, %v2692
        %v2717 = vpack.c.b16 %v2695, %v2694
        %v2718 = vpack.c.b16 %v2697, %v2696
        %v2719 = vpack.c.b16 %v2699, %v2698
        %v2720 = vpack.c.b16 %v2701, %v2700
        %v2721 = vpack.c.b16 %v2703, %v2702
        %v2722 = vpack.c.b16 %v2705, %v2704
        %v2723 = vpack.c.b16 %v2707, %v2706
        %2740 = vmatprep.subr.bf16.mxu0 0
        %2741 = vmatpush1.bf16.msra.mxu0 %v2708
        %2742 = vmatprep.subr.bf16.mxu0 0
        %2743 = vmatpush1.bf16.msra.mxu0 %v2709
        %2744 = vmatprep.subr.bf16.mxu0 0
        %2745 = vmatpush1.bf16.msra.mxu0 %v2710
        %2746 = vmatprep.subr.bf16.mxu0 0
        %2747 = vmatpush1.bf16.msra.mxu0 %v2711
        %2748 = vmatprep.subr.bf16.mxu0 0
        %2749 = vmatpush1.bf16.msra.mxu0 %v2712
        %2750 = vmatprep.subr.bf16.mxu0 0
        %2751 = vmatpush1.bf16.msra.mxu0 %v2713
        %2752 = vmatprep.subr.bf16.mxu0 0
        %2753 = vmatpush1.bf16.msra.mxu0 %v2714
        %2754 = vmatprep.subr.bf16.mxu0 0
        %2755 = vmatpush1.bf16.msra.mxu0 %v2715
        %2756 = vmatprep.subr.bf16.mxu0 0
        %2757 = vmatpush1.bf16.msra.mxu0 %v2716
        %2758 = vmatprep.subr.bf16.mxu0 0
        %2759 = vmatpush1.bf16.msra.mxu0 %v2717
        %2760 = vmatprep.subr.bf16.mxu0 0
        %2761 = vmatpush1.bf16.msra.mxu0 %v2718
        %2762 = vmatprep.subr.bf16.mxu0 0
        %2763 = vmatpush1.bf16.msra.mxu0 %v2719
        %2764 = vmatprep.subr.bf16.mxu0 0
        %2765 = vmatpush1.bf16.msra.mxu0 %v2720
        %2766 = vmatprep.subr.bf16.mxu0 0
        %2767 = vmatpush1.bf16.msra.mxu0 %v2721
        %2768 = vmatprep.subr.bf16.mxu0 0
        %2769 = vmatpush1.bf16.msra.mxu0 %v2722
        %2770 = vmatprep.subr.bf16.mxu0 0
        %2771 = vmatpush1.bf16.msra.mxu0 %v2723
        %2772 = vmatprep.mubr.bf16.mxu0 %v227
        %2773 = vmatmul.mubr.bf16.gmra.mrb[0].mxu0 %v226
        %v2774 = vpop.f32.mrb[0].mxu0
        %v2775 = vadd.f32 %v2642, %v2774
        %v2776 = vpop.f32.mrb[0].mxu0
        %v2777 = vpop.f32.mrb[0].mxu0
        %v2778 = vpop.f32.mrb[0].mxu0
        %2779 = vdwg.mxu0
        %s2780 = scalar_lea.vmem %s1, 1408
        %v2781 = vld [vmem:[%s2780] sm:$0xf]
        %v2782 = vld [vmem:[%s2780 + $0x4] sm:$0xf]
        %v2783 = vld [vmem:[%s2780 + $0x8] sm:$0xf]
        %v2784 = vld [vmem:[%s2780 + $0xc] sm:$0xf]
        %v2785 = vld [vmem:[%s2780 + $0x10] sm:$0xf]
        %v2786 = vld [vmem:[%s2780 + $0x14] sm:$0xf]
        %v2787 = vld [vmem:[%s2780 + $0x18] sm:$0xf]
        %v2788 = vld [vmem:[%s2780 + $0x1c] sm:$0xf]
        %v2789 = vld [vmem:[%s2780 + $0x20] sm:$0xf]
        %v2790 = vld [vmem:[%s2780 + $0x24] sm:$0xf]
        %v2791 = vld [vmem:[%s2780 + $0x28] sm:$0xf]
        %v2792 = vld [vmem:[%s2780 + $0x2c] sm:$0xf]
        %v2793 = vld [vmem:[%s2780 + $0x30] sm:$0xf]
        %v2794 = vld [vmem:[%s2780 + $0x34] sm:$0xf]
        %v2795 = vld [vmem:[%s2780 + $0x38] sm:$0xf]
        %v2796 = vld [vmem:[%s2780 + $0x3c] sm:$0xf]
        %v2797 = vld [vmem:[%s2780 + $0x40] sm:$0xf]
        %v2798 = vld [vmem:[%s2780 + $0x44] sm:$0xf]
        %v2799 = vld [vmem:[%s2780 + $0x48] sm:$0xf]
        %v2800 = vld [vmem:[%s2780 + $0x4c] sm:$0xf]
        %v2801 = vld [vmem:[%s2780 + $0x50] sm:$0xf]
        %v2802 = vld [vmem:[%s2780 + $0x54] sm:$0xf]
        %v2803 = vld [vmem:[%s2780 + $0x58] sm:$0xf]
        %v2804 = vld [vmem:[%s2780 + $0x5c] sm:$0xf]
        %v2805 = vld [vmem:[%s2780 + $0x60] sm:$0xf]
        %v2806 = vld [vmem:[%s2780 + $0x64] sm:$0xf]
        %v2807 = vld [vmem:[%s2780 + $0x68] sm:$0xf]
        %v2808 = vld [vmem:[%s2780 + $0x6c] sm:$0xf]
        %v2809 = vld [vmem:[%s2780 + $0x70] sm:$0xf]
        %v2810 = vld [vmem:[%s2780 + $0x74] sm:$0xf]
        %v2811 = vld [vmem:[%s2780 + $0x78] sm:$0xf]
        %v2812 = vld [vmem:[%s2780 + $0x7c] sm:$0xf]
        %s2813 = scalar_lea.vmem %s2, 11
        %v2814 = vld [vmem:[%s2813] sm:$0x1]
        %v2816 = vlaneseq
        %v2817 = vshrl.u32 %v2816, 7
        %v2818 = vsub.s32 0, %v2817
        %v2819 = vrot.slane %v2814, %v2818
        %v2853 = vunpack.c.l.b16 %v2781
        %v2854 = vunpack.c.l.b16 %v2782
        %v2855 = vunpack.c.l.b16 %v2783
        %v2856 = vunpack.c.l.b16 %v2784
        %v2857 = vunpack.c.l.b16 %v2785
        %v2858 = vunpack.c.l.b16 %v2786
        %v2859 = vunpack.c.l.b16 %v2787
        %v2860 = vunpack.c.l.b16 %v2788
        %v2861 = vunpack.c.l.b16 %v2789
        %v2862 = vunpack.c.l.b16 %v2790
        %v2863 = vunpack.c.l.b16 %v2791
        %v2864 = vunpack.c.l.b16 %v2792
        %v2865 = vunpack.c.l.b16 %v2793
        %v2866 = vunpack.c.l.b16 %v2794
        %v2867 = vunpack.c.l.b16 %v2795
        %v2868 = vunpack.c.l.b16 %v2796
        %v2869 = vunpack.c.l.b16 %v2797
        %v2870 = vunpack.c.l.b16 %v2798
        %v2871 = vunpack.c.l.b16 %v2799
        %v2872 = vunpack.c.l.b16 %v2800
        %v2873 = vunpack.c.l.b16 %v2801
        %v2874 = vunpack.c.l.b16 %v2802
        %v2875 = vunpack.c.l.b16 %v2803
        %v2876 = vunpack.c.l.b16 %v2804
        %v2877 = vunpack.c.l.b16 %v2805
        %v2878 = vunpack.c.l.b16 %v2806
        %v2879 = vunpack.c.l.b16 %v2807
        %v2880 = vunpack.c.l.b16 %v2808
        %v2881 = vunpack.c.l.b16 %v2809
        %v2882 = vunpack.c.l.b16 %v2810
        %v2883 = vunpack.c.l.b16 %v2811
        %v2884 = vunpack.c.l.b16 %v2812
        %v2885 = vpack.c.b16 %v2854, %v2853
        %v2886 = vpack.c.b16 %v2856, %v2855
        %v2887 = vpack.c.b16 %v2858, %v2857
        %v2888 = vpack.c.b16 %v2860, %v2859
        %v2889 = vpack.c.b16 %v2862, %v2861
        %v2890 = vpack.c.b16 %v2864, %v2863
        %v2891 = vpack.c.b16 %v2866, %v2865
        %v2892 = vpack.c.b16 %v2868, %v2867
        %v2893 = vpack.c.b16 %v2870, %v2869
        %v2894 = vpack.c.b16 %v2872, %v2871
        %v2895 = vpack.c.b16 %v2874, %v2873
        %v2896 = vpack.c.b16 %v2876, %v2875
        %v2897 = vpack.c.b16 %v2878, %v2877
        %v2898 = vpack.c.b16 %v2880, %v2879
        %v2899 = vpack.c.b16 %v2882, %v2881
        %v2900 = vpack.c.b16 %v2884, %v2883
        %2917 = vmatprep.subr.bf16.mxu0 0
        %2918 = vmatpush1.bf16.msra.mxu0 %v2885
        %2919 = vmatprep.subr.bf16.mxu0 0
        %2920 = vmatpush1.bf16.msra.mxu0 %v2886
        %2921 = vmatprep.subr.bf16.mxu0 0
        %2922 = vmatpush1.bf16.msra.mxu0 %v2887
        %2923 = vmatprep.subr.bf16.mxu0 0
        %2924 = vmatpush1.bf16.msra.mxu0 %v2888
        %2925 = vmatprep.subr.bf16.mxu0 0
        %2926 = vmatpush1.bf16.msra.mxu0 %v2889
        %2927 = vmatprep.subr.bf16.mxu0 0
        %2928 = vmatpush1.bf16.msra.mxu0 %v2890
        %2929 = vmatprep.subr.bf16.mxu0 0
        %2930 = vmatpush1.bf16.msra.mxu0 %v2891
        %2931 = vmatprep.subr.bf16.mxu0 0
        %2932 = vmatpush1.bf16.msra.mxu0 %v2892
        %2933 = vmatprep.subr.bf16.mxu0 0
        %2934 = vmatpush1.bf16.msra.mxu0 %v2893
        %2935 = vmatprep.subr.bf16.mxu0 0
        %2936 = vmatpush1.bf16.msra.mxu0 %v2894
        %2937 = vmatprep.subr.bf16.mxu0 0
        %2938 = vmatpush1.bf16.msra.mxu0 %v2895
        %2939 = vmatprep.subr.bf16.mxu0 0
        %2940 = vmatpush1.bf16.msra.mxu0 %v2896
        %2941 = vmatprep.subr.bf16.mxu0 0
        %2942 = vmatpush1.bf16.msra.mxu0 %v2897
        %2943 = vmatprep.subr.bf16.mxu0 0
        %2944 = vmatpush1.bf16.msra.mxu0 %v2898
        %2945 = vmatprep.subr.bf16.mxu0 0
        %2946 = vmatpush1.bf16.msra.mxu0 %v2899
        %2947 = vmatprep.subr.bf16.mxu0 0
        %2948 = vmatpush1.bf16.msra.mxu0 %v2900
        %2949 = vmatprep.mubr.bf16.mxu0 %v227
        %2950 = vmatmul.mubr.bf16.gmra.mrb[0].mxu0 %v226
        %v2951 = vpop.f32.mrb[0].mxu0
        %v2952 = vadd.f32 %v2819, %v2951
        %v2953 = vpop.f32.mrb[0].mxu0
        %v2954 = vpop.f32.mrb[0].mxu0
        %v2955 = vpop.f32.mrb[0].mxu0
        %2956 = vdwg.mxu0
        %v2957 = vpack.c.bf16 %v2598, %v2598
        %v2958 = vpack.c.bf16 %v2775, %v2775
        %v2959 = vpack.c.bf16 %v2952, %v2952
        %v2961 = vsel %vm760, %v2957, 0
        %v2964 = vsel %vm760, %v2958, 0
        %2966 = vmatprep.subr.bf16.mxu0 0
        %2967 = vmatpush1.bf16.xpose.msra.mxu0 %v2964
        %2968 = vmatprep.subr.bf16.mxu0 0
        %2969 = vmatpush1.bf16.xpose.msra.mxu0 0
        %2970 = vmatprep.subr.bf16.mxu0 0
        %2971 = vmatpush1.bf16.xpose.msra.mxu0 0
        %2972 = vmatprep.subr.bf16.mxu0 0
        %2973 = vmatpush1.bf16.xpose.msra.mxu0 0
        %2974 = vmatprep.subr.bf16.mxu0 0
        %2975 = vmatpush1.bf16.xpose.msra.mxu0 0
        %2976 = vmatprep.subr.bf16.mxu0 0
        %2977 = vmatpush1.bf16.xpose.msra.mxu0 0
        %2978 = vmatprep.subr.bf16.mxu0 0
        %2979 = vmatpush1.bf16.xpose.msra.mxu0 0
        %2980 = vmatprep.subr.bf16.mxu0 0
        %2981 = vmatpush1.bf16.xpose.msra.mxu0 0
        %2982 = vmatprep.subr.bf16.mxu0 0
        %2983 = vmatpush1.bf16.xpose.msra.mxu0 0
        %2984 = vmatprep.subr.bf16.mxu0 0
        %2985 = vmatpush1.bf16.xpose.msra.mxu0 0
        %2986 = vmatprep.subr.bf16.mxu0 0
        %2987 = vmatpush1.bf16.xpose.msra.mxu0 0
        %2988 = vmatprep.subr.bf16.mxu0 0
        %2989 = vmatpush1.bf16.xpose.msra.mxu0 0
        %2990 = vmatprep.subr.bf16.mxu0 0
        %2991 = vmatpush1.bf16.xpose.msra.mxu0 0
        %2992 = vmatprep.subr.bf16.mxu0 0
        %2993 = vmatpush1.bf16.xpose.msra.mxu0 0
        %2994 = vmatprep.subr.bf16.mxu0 0
        %2995 = vmatpush1.bf16.xpose.msra.mxu0 0
        %2996 = vmatprep.subr.bf16.mxu0 0
        %2997 = vmatpush1.bf16.xpose.msra.mxu0 0
        %2998 = vmatprep.mubr.bf16.mxu0 0
        %2999 = vmatmul.mubr.bf16.gmra.mrb[0].mxu0 %v2961
        %v3000 = vpop.f32.mrb[0].mxu0
        %v3001 = vadd.f32 0.0, %v3000
        %v3002 = vpop.f32.mrb[0].mxu0
        %v3003 = vpop.f32.mrb[0].mxu0
        %v3004 = vpop.f32.mrb[0].mxu0
        %3005 = vdwg.mxu0
        %v3006 = vsel %vm807, %v3001, -inf
        %3007 = vmax.xlane.f32.xlu0 %v3006
        %v3008 = vpop.xlane.xlu0 %3007
        %v3009 = vsub.f32 %v3001, %v3008
        %v3010 = vmul.f32 %v3009, 1.442695
        %v3011 = vpow.pop %v3010
        %v3012 = vsel %vm807, %v3011, 0.0
        %3013 = vadd.xlane.f32.xlu0 %v3012
        %v3014 = vpop.xlane.xlu0 %3013
        %v3015 = vrcp.pop %v3014
        %v3016 = vmul.f32 %v3011, %v3015
        %v3017 = vpack.c.bf16 %v3016, %v3016
        %v3019 = vsel %vm807, %v3017, 0
        %v3022 = vsel %vm823, %v2959, 0
        %3024 = vmatprep.subr.bf16.mxu0 0
        %3025 = vmatpush1.bf16.msra.mxu0 %v3022
        %3026 = vmatprep.subr.bf16.mxu0 0
        %3027 = vmatpush1.bf16.msra.mxu0 0
        %3028 = vmatprep.subr.bf16.mxu0 0
        %3029 = vmatpush1.bf16.msra.mxu0 0
        %3030 = vmatprep.subr.bf16.mxu0 0
        %3031 = vmatpush1.bf16.msra.mxu0 0
        %3032 = vmatprep.subr.bf16.mxu0 0
        %3033 = vmatpush1.bf16.msra.mxu0 0
        %3034 = vmatprep.subr.bf16.mxu0 0
        %3035 = vmatpush1.bf16.msra.mxu0 0
        %3036 = vmatprep.subr.bf16.mxu0 0
        %3037 = vmatpush1.bf16.msra.mxu0 0
        %3038 = vmatprep.subr.bf16.mxu0 0
        %3039 = vmatpush1.bf16.msra.mxu0 0
        %3040 = vmatprep.subr.bf16.mxu0 0
        %3041 = vmatpush1.bf16.msra.mxu0 0
        %3042 = vmatprep.subr.bf16.mxu0 0
        %3043 = vmatpush1.bf16.msra.mxu0 0
        %3044 = vmatprep.subr.bf16.mxu0 0
        %3045 = vmatpush1.bf16.msra.mxu0 0
        %3046 = vmatprep.subr.bf16.mxu0 0
        %3047 = vmatpush1.bf16.msra.mxu0 0
        %3048 = vmatprep.subr.bf16.mxu0 0
        %3049 = vmatpush1.bf16.msra.mxu0 0
        %3050 = vmatprep.subr.bf16.mxu0 0
        %3051 = vmatpush1.bf16.msra.mxu0 0
        %3052 = vmatprep.subr.bf16.mxu0 0
        %3053 = vmatpush1.bf16.msra.mxu0 0
        %3054 = vmatprep.subr.bf16.mxu0 0
        %3055 = vmatpush1.bf16.msra.mxu0 0
        %3056 = vmatprep.mubr.bf16.mxu0 0
        %3057 = vmatmul.mubr.bf16.gmra.mrb[0].mxu0 %v3019
        %v3058 = vpop.f32.mrb[0].mxu0
        %v3059 = vadd.f32 0.0, %v3058
        %v3060 = vpop.f32.mrb[0].mxu0
        %v3061 = vpop.f32.mrb[0].mxu0
        %v3062 = vpop.f32.mrb[0].mxu0
        %3063 = vdwg.mxu0
        %v3064 = vpack.c.bf16 %v3059, %v3059
        %s3065 = scalar_lea.vmem %s3, 192
        %v3066 = vld [vmem:[%s3065] sm:$0xff]
        %v3067 = vld [vmem:[%s3065 + $0x8] sm:$0xff]
        %v3068 = vld [vmem:[%s3065 + $0x10] sm:$0xff]
        %v3069 = vld [vmem:[%s3065 + $0x18] sm:$0xff]
        %v3070 = vld [vmem:[%s3065 + $0x20] sm:$0xff]
        %v3071 = vld [vmem:[%s3065 + $0x28] sm:$0xff]
        %v3072 = vld [vmem:[%s3065 + $0x30] sm:$0xff]
        %v3073 = vld [vmem:[%s3065 + $0x38] sm:$0xff]
        %v3082 = vunpack.c.l.b16 %v3066
        %v3083 = vunpack.c.h.b16 %v3066
        %v3084 = vunpack.c.l.b16 %v3067
        %v3085 = vunpack.c.h.b16 %v3067
        %v3086 = vunpack.c.l.b16 %v3068
        %v3087 = vunpack.c.h.b16 %v3068
        %v3088 = vunpack.c.l.b16 %v3069
        %v3089 = vunpack.c.h.b16 %v3069
        %v3090 = vunpack.c.l.b16 %v3070
        %v3091 = vunpack.c.h.b16 %v3070
        %v3092 = vunpack.c.l.b16 %v3071
        %v3093 = vunpack.c.h.b16 %v3071
        %v3094 = vunpack.c.l.b16 %v3072
        %v3095 = vunpack.c.h.b16 %v3072
        %v3096 = vunpack.c.l.b16 %v3073
        %v3097 = vunpack.c.h.b16 %v3073
        %v3098 = vpack.c.b16 %v3084, %v3082
        %v3099 = vpack.c.b16 %v3085, %v3083
        %v3100 = vpack.c.b16 %v3088, %v3086
        %v3101 = vpack.c.b16 %v3089, %v3087
        %v3102 = vpack.c.b16 %v3092, %v3090
        %v3103 = vpack.c.b16 %v3093, %v3091
        %v3104 = vpack.c.b16 %v3096, %v3094
        %v3105 = vpack.c.b16 %v3097, %v3095
        %v3115 = vsel %vm760, %v3064, 0
        %3117 = vmatprep.subr.bf16.mxu0 %v3099
        %3118 = vmatpush1.bf16.msra.mxu0 %v3098
        %3119 = vmatprep.subr.bf16.mxu0 %v3101
        %3120 = vmatpush1.bf16.msra.mxu0 %v3100
        %3121 = vmatprep.subr.bf16.mxu0 %v3103
        %3122 = vmatpush1.bf16.msra.mxu0 %v3102
        %3123 = vmatprep.subr.bf16.mxu0 %v3105
        %3124 = vmatpush1.bf16.msra.mxu0 %v3104
        %3125 = vmatprep.subr.bf16.mxu0 0
        %3126 = vmatpush1.bf16.msra.mxu0 0
        %3127 = vmatprep.subr.bf16.mxu0 0
        %3128 = vmatpush1.bf16.msra.mxu0 0
        %3129 = vmatprep.subr.bf16.mxu0 0
        %3130 = vmatpush1.bf16.msra.mxu0 0
        %3131 = vmatprep.subr.bf16.mxu0 0
        %3132 = vmatpush1.bf16.msra.mxu0 0
        %3133 = vmatprep.subr.bf16.mxu0 0
        %3134 = vmatpush1.bf16.msra.mxu0 0
        %3135 = vmatprep.subr.bf16.mxu0 0
        %3136 = vmatpush1.bf16.msra.mxu0 0
        %3137 = vmatprep.subr.bf16.mxu0 0
        %3138 = vmatpush1.bf16.msra.mxu0 0
        %3139 = vmatprep.subr.bf16.mxu0 0
        %3140 = vmatpush1.bf16.msra.mxu0 0
        %3141 = vmatprep.subr.bf16.mxu0 0
        %3142 = vmatpush1.bf16.msra.mxu0 0
        %3143 = vmatprep.subr.bf16.mxu0 0
        %3144 = vmatpush1.bf16.msra.mxu0 0
        %3145 = vmatprep.subr.bf16.mxu0 0
        %3146 = vmatpush1.bf16.msra.mxu0 0
        %3147 = vmatprep.subr.bf16.mxu0 0
        %3148 = vmatpush1.bf16.msra.mxu0 0
        %3149 = vmatprep.mubr.bf16.mxu0 0
        %3150 = vmatmul.mubr.bf16.gmra.mrb[0].mxu0 %v3115
        %v3151 = vpop.f32.mrb[0].mxu0
        %v3152 = vadd.f32 0.0, %v3151
        %v3153 = vpop.f32.mrb[0].mxu0
        %v3154 = vadd.f32 0.0, %v3153
        %v3155 = vpop.f32.mrb[0].mxu0
        %v3156 = vpop.f32.mrb[0].mxu0
        %3157 = vdwg.mxu0
        %v3158 = vadd.f32 %v2424, %v3152
        %v3159 = vadd.f32 %v2425, %v3154
        %v3160 = vld [vmem:[%s4] sm:$0x3]
        %v3162 = vlaneseq
        %v3163 = vshrl.u32 %v3162, 7
        %v3164 = vsub.s32 0, %v3163
        %v3165 = vrot.slane %v3160, %v3164
        %v3166 = vlaneseq
        %v3167 = vshrl.u32 %v3166, 7
        %v3168 = vsub.s32 1, %v3167
        %v3169 = vrot.slane %v3160, %v3168
        %v3172 = vadd.f32 %v3158, %v3165
        %v3173 = vadd.f32 %v3159, %v3169
        %3174 = vst [vmem:[%s217] sm:$0xff] %v3172
        %3175 = vst [vmem:[%s217 + $0x8] sm:$0xff] %v3173
        %s3176 = sand.u32 %s137, 1
        %s3177 = scalar_lea.sflag [#allocation3], %s3176
        %s3178 = sand.u32 %s137, 1
        %s3179 = smul.addr %s3178, 16
        %s3180 = scalar_lea.vmem [#allocation2], %s3179
        // Predicated region
        $region41: #{tpu_custom_call.1} parent=39 // pred_check
          %p3181 = pneg %p147
        $region42: #{tpu_custom_call.1} parent=39 // pred_check_branch
          %3183 = sbr.rel (%p3181) target = $region44
        $region43: #{tpu_custom_call.1} parent=39 // pred_region
          %s3185 = ssub.s32 256, 256
          %3186 = vsyncadd %s3177, %s3185
          %s3187 = smul.addr %s19, 2
          %s3188 = smul.addr %s3187, 128
          %s3189 = scalar_lea.hbm %s5, %s3188
          %s3191 = sshll.u32 %s3180, 4
          %s3192 = int_to_ptr.vmem [resolvable:$true] %s3191
          %3194 = dma.vmem_to_hbm [thread:$0]  %s3192, 256, %s3189, %s3177
        $region44: #{tpu_custom_call.1} parent=39 // pred_fallthru
          _
      $region40: #{tpu_custom_call.1} parent=5 // pred_fallthru
        _
      %p3195 = scmp.le.s32.totalorder 2, %s14
      // Predicated region
      $region45: #{tpu_custom_call.1} parent=5 // pred_check
        %p3196 = pneg %p3195
      $region46: #{tpu_custom_call.1} parent=5 // pred_check_branch
        %3198 = sbr.rel (%p3196) target = $region48
      $region47: #{tpu_custom_call.1} parent=5 // pred_region
        %s3199 = ssub.s32 %s14, 2
        // Predicated region
        $region49: #{tpu_custom_call.1} parent=47 // pred_check
          %p3200 = pneg %p153
        $region50: #{tpu_custom_call.1} parent=47 // pred_check_branch
          %3202 = sbr.rel (%p3200) target = $region52
        $region51: #{tpu_custom_call.1} parent=47 // pred_region
          %s3203 = sand.u32 %s138, 1
          %s3204 = scalar_lea.sflag [#allocation3], %s3203
          %s3205 = sand.u32 %s138, 1
          %s3206 = smul.addr %s3205, 16
          %s3207 = scalar_lea.vmem [#allocation2], %s3206
          %3208 = dma.done %s3204, 256
        $region52: #{tpu_custom_call.1} parent=47 // pred_fallthru
          _
      $region48: #{tpu_custom_call.1} parent=5 // pred_fallthru
        _
    $region6: #{tpu_custom_call.1} parent=1 // loop_footer
      %s18 = sadd.s32 1, %s14
    $region7: #{tpu_custom_call.1} parent=1 // loop_footer_branch
      %13 = sbr.rel target = $region3
    $region8: #{tpu_custom_call.1} parent=1 // loop_exit
      _
    %3209 = vsyncpa [#allocation3], 1
    %s3210 = scalar_lea.sflag [#allocation3], 1
    %3211 = vsyncpa %s3210, 1

</llo_original>
